<compile_context>
chip_gen: v7x
topology: tpu7x:2x2x1
jax: 0.10.0
libtpu: 0.0.40
codegen_flags: <defaults>
</compile_context>

<pallas_src>
import functools

import numpy as np
import jax
import jax.numpy as jnp
from jax.experimental import pallas as pl
from jax.experimental.pallas import tpu as pltpu


# ---------------------------------------------------------------------------
# Fused forward kernel: one grid step = `tb` images, processed fully in VMEM.
# Activation layout: [channels (sublanes), flattened spatial (lanes)].
# ---------------------------------------------------------------------------
def _simple_cnn_kernel(x_ref, w1_ref, b1_ref, w2_ref, b2_ref,
                       s1_ref, s2_ref, wf1_ref, bf1_ref, wf2_ref, bf2_ref,
                       out_ref, *, tb):
    w1 = w1_ref[...]      # [32, 9]    f32   (c_out, kh*3+kw)
    b1 = b1_ref[...]      # [32, 1]    f32
    w2 = w2_ref[...]      # [64, 288]  bf16  (c_out, (kh*3+kw)*32 + c_in)
    b2 = b2_ref[...]      # [64, 1]    f32
    s1 = s1_ref[...]      # [697, 169] bf16  one-hot pool1 gather
    s2 = s2_ref[...]      # [127, 25]  bf16  one-hot pool2 gather
    wf1 = wf1_ref[...]    # [1600, 128] bf16
    bf1 = bf1_ref[...]    # [1, 128]   f32
    wf2 = wf2_ref[...]    # [128, 10]  bf16
    bf2 = bf2_ref[...]    # [1, 10]    f32

    for b in range(tb):
        xr = x_ref[b:b + 1, :]                       # [1, 784] f32 (28x28 row-major)

        # ---- conv1 (1->32, 3x3, valid) + ReLU --------------------------------
        # C_in = 1, so the conv is 9 shifted VPU broadcast-FMAs on the flattened
        # 28-wide grid.  Columns with j in {26,27} are harmless garbage (finite),
        # later zeroed out by the one-hot gather matmul.
        a1 = jnp.zeros((32, 726), jnp.float32)
        for kh in range(3):
            for kw in range(3):
                t = kh * 3 + kw
                s = kh * 28 + kw
                a1 = a1 + w1[:, t:t + 1] * xr[:, s:s + 726]
        a1 = jnp.maximum(a1 + b1, 0.0)               # [32, 726]  (26x26 valid)

        # ---- maxpool 2x2 (26 -> 13) ------------------------------------------
        v1 = jnp.maximum(a1[:, 0:698], a1[:, 28:726])      # max over di
        h1 = jnp.maximum(v1[:, 0:697], v1[:, 1:698])       # max over dj
        p1 = jnp.dot(h1.astype(jnp.bfloat16), s1,
                     preferred_element_type=jnp.float32)   # [32, 169] (13x13 grid)
        p1 = p1.astype(jnp.bfloat16)

        # ---- conv2 (32->64, 3x3, valid) + ReLU -------------------------------
        # 9 shifted MXU matmuls accumulated in f32 (in-VMEM im2col; no patch
        # matrix ever built or written to HBM).
        f2 = jnp.zeros((64, 141), jnp.float32)
        for kh in range(3):
            for kw in range(3):
                t = kh * 3 + kw
                s = kh * 13 + kw
                f2 = f2 + jnp.dot(w2[:, t * 32:(t + 1) * 32], p1[:, s:s + 141],
                                  preferred_element_type=jnp.float32)
        f2 = jnp.maximum(f2 + b2, 0.0)               # [64, 141]  (11x11 valid)

        # ---- maxpool 2x2 (11 -> 5, floor mode) -------------------------------
        v2 = jnp.maximum(f2[:, 0:128], f2[:, 13:141])
        h2 = jnp.maximum(v2[:, 0:127], v2[:, 1:128])
        p2 = jnp.dot(h2.astype(jnp.bfloat16), s2,
                     preferred_element_type=jnp.float32)   # [64, 25]
        p2 = p2.astype(jnp.bfloat16)

        # ---- NCHW flatten (c*25 + q) via lane concat, then fc1+ReLU+fc2 ------
        flat = jnp.concatenate([p2[c:c + 1, :] for c in range(64)],
                               axis=1)                      # [1, 1600] bf16
        h = jnp.dot(flat, wf1, preferred_element_type=jnp.float32) + bf1
        h = jnp.maximum(h, 0.0).astype(jnp.bfloat16)
        logits = jnp.dot(h, wf2, preferred_element_type=jnp.float32) + bf2
        out_ref[b:b + 1, :] = logits                 # [1, 10] f32 (real width)


# ---------------------------------------------------------------------------
# Wrapper: grid over batch, everything else resident.
# ---------------------------------------------------------------------------
def simple_cnn_forward(x_nchw, kparams):
    """x_nchw: [B, 1, 28, 28] f32 -> logits [B, 10] f32."""
    (w1k, b1k, w2k, b2k, s1, s2, wf1k, bf1k, wf2k, bf2k) = kparams
    B = x_nchw.shape[0]
    # 8 images / grid step at large batch to amortize per-step overhead;
    # per-image grid otherwise (no batch padding, >=2 steps at B=2 for megacore).
    tb = 8 if (B >= 16 and B % 8 == 0) else 1
    g = B // tb
    xr = x_nchw.astype(jnp.float32).reshape(g, tb, 28 * 28)

    def full(a):
        return pl.BlockSpec(a.shape, lambda i, _nd=a.ndim: (0,) * _nd)

    out = pl.pallas_call(
        functools.partial(_simple_cnn_kernel, tb=tb),
        out_shape=jax.ShapeDtypeStruct((g, tb, 10), jnp.float32),
        grid=(g,),
        in_specs=[
            pl.BlockSpec((None, tb, 784), lambda i: (i, 0, 0)),
            full(w1k), full(b1k), full(w2k), full(b2k),
            full(s1), full(s2), full(wf1k), full(bf1k), full(wf2k), full(bf2k),
        ],
        out_specs=pl.BlockSpec((None, tb, 10), lambda i: (i, 0, 0)),
        compiler_params=pltpu.CompilerParams(
            dimension_semantics=("parallel",),
            vmem_limit_bytes=32 * 1024 * 1024,   # usage ~4 MB; safe on v5e/v6e/v7x
        ),
    )(xr, w1k, b1k, w2k, b2k, s1, s2, wf1k, bf1k, wf2k, bf2k)
    return out.reshape(B, 10)


# ---------------------------------------------------------------------------
# Parameters (PyTorch layout) + one-time repack into kernel layout.
# ---------------------------------------------------------------------------
def init_params(key):
    """PyTorch-default-style init: U(-1/sqrt(fan_in), 1/sqrt(fan_in))."""
    def uniform(k, shape, fan_in):
        bound = 1.0 / (fan_in ** 0.5)
        return jax.random.uniform(k, shape, jnp.float32, -bound, bound)

    ks = jax.random.split(key, 8)
    w1 = uniform(ks[0], (32, 1, 3, 3), 1 * 9)
    b1 = uniform(ks[1], (32,), 1 * 9)
    w2 = uniform(ks[2], (64, 32, 3, 3), 32 * 9)
    b2 = uniform(ks[3], (64,), 32 * 9)
    wf1 = uniform(ks[4], (128, 1600), 1600)
    bf1 = uniform(ks[5], (128,), 1600)
    wf2 = uniform(ks[6], (10, 128), 128)
    bf2 = uniform(ks[7], (10,), 128)
    return (w1, b1, w2, b2, wf1, bf1, wf2, bf2)


def prepare_params(params):
    """One-time repack: [c_out, tap(,c_in)] conv weights, transposed fc weights
    (bf16 for the MXU), plus the exact 0/1 max-pool gather matrices."""
    w1, b1, w2, b2, wf1, bf1, wf2, bf2 = params
    w1k = jnp.asarray(w1, jnp.float32).reshape(32, 9)                  # VPU: keep f32
    b1k = jnp.asarray(b1, jnp.float32).reshape(32, 1)
    w2k = jnp.transpose(jnp.asarray(w2, jnp.float32),
                        (0, 2, 3, 1)).reshape(64, 288).astype(jnp.bfloat16)
    b2k = jnp.asarray(b2, jnp.float32).reshape(64, 1)
    wf1k = jnp.asarray(wf1, jnp.float32).T.astype(jnp.bfloat16)        # [1600, 128]
    bf1k = jnp.asarray(bf1, jnp.float32).reshape(1, 128)
    wf2k = jnp.asarray(wf2, jnp.float32).T.astype(jnp.bfloat16)        # [128, 10]
    bf2k = jnp.asarray(bf2, jnp.float32).reshape(1, 10)

    # One-hot matrices gathering the stride-2 pool window anchors out of the
    # flattened full-grid activations (garbage columns hit all-zero rows).
    s1 = np.zeros((697, 169), np.float32)           # 28-grid -> 13x13
    for i in range(13):
        for j in range(13):
            s1[56 * i + 2 * j, 13 * i + j] = 1.0
    s2 = np.zeros((127, 25), np.float32)            # 13-grid -> 5x5 (floor)
    for i in range(5):
        for j in range(5):
            s2[26 * i + 2 * j, 5 * i + j] = 1.0
    s1 = jnp.asarray(s1, jnp.bfloat16)
    s2 = jnp.asarray(s2, jnp.bfloat16)
    return (w1k, b1k, w2k, b2k, s1, s2, wf1k, bf1k, wf2k, bf2k)


def reference_forward(x_nchw, params):
    """Pure-JAX reference matching the PyTorch module (for validation)."""
    w1, b1, w2, b2, wf1, bf1, wf2, bf2 = params

    def conv(x, w, b):
        y = jax.lax.conv_general_dilated(
            x, w, (1, 1), "VALID", dimension_numbers=("NCHW", "OIHW", "NCHW"))
        return jax.nn.relu(y + b[None, :, None, None])

    def pool(x):
        return jax.lax.reduce_window(
            x, -jnp.inf, jax.lax.max, (1, 1, 2, 2), (1, 1, 2, 2), "VALID")

    y = pool(conv(x_nchw, w1, b1))
    y = pool(conv(y, w2, b2))
    y = y.reshape(y.shape[0], -1)
    y = jax.nn.relu(y @ wf1.T + bf1)
    return y @ wf2.T + bf2


if __name__ == "__main__":
    key = jax.random.PRNGKey(0)
    k_x, k_p = jax.random.split(key)

    # fc1's 1600 = 64*5*5 pins the input to [B, 1, 28, 28]; use batch=2.
    x = jax.random.normal(k_x, (2, 1, 28, 28), dtype=jnp.float32)
    params = init_params(k_p)
    kparams = prepare_params(params)          # one-time weight repack

    fwd = jax.jit(simple_cnn_forward)
    out = fwd(x, kparams)
    jax.block_until_ready(out)

    assert out.shape == (2, 10), out.shape
    assert out.dtype == jnp.float32, out.dtype

    ref = jax.jit(reference_forward)(x, params)
    err = float(jnp.max(jnp.abs(out - ref)))
    assert err < 1e-1, f"max abs error vs reference: {err}"

    print("KERNEL_OK")
</pallas_src>

<mosaic_0001>
module attributes {stable_mosaic.version = 11 : i64} {
  func.func @_simple_cnn_kernel(%arg0: i32, %arg1: memref<1x1x784xf32, #tpu.memory_space<vmem>>, %arg2: memref<32x9xf32, #tpu.memory_space<vmem>>, %arg3: memref<32x1xf32, #tpu.memory_space<vmem>>, %arg4: memref<64x288xbf16, #tpu.memory_space<vmem>>, %arg5: memref<64x1xf32, #tpu.memory_space<vmem>>, %arg6: memref<697x169xbf16, #tpu.memory_space<vmem>>, %arg7: memref<127x25xbf16, #tpu.memory_space<vmem>>, %arg8: memref<1600x128xbf16, #tpu.memory_space<vmem>>, %arg9: memref<1x128xf32, #tpu.memory_space<vmem>>, %arg10: memref<128x10xbf16, #tpu.memory_space<vmem>>, %arg11: memref<1x10xf32, #tpu.memory_space<vmem>>, %arg12: memref<1x1x10xf32, #tpu.memory_space<vmem>>) attributes {dimension_semantics = [#tpu.dimension_semantics<parallel>], iteration_bounds = array<i64: 2>, scalar_prefetch = 0 : i64, scratch_operands = 0 : i64, tpu.core_type = #tpu.core_type<tc>, window_params = [{transform_indices = @transform_0, window_bounds = array<i64: 1, 1, 784>}, {pipeline_mode = #tpu.pipeline_mode<synchronous>, transform_indices = @transform_1, window_bounds = array<i64: 32, 9>}, {pipeline_mode = #tpu.pipeline_mode<synchronous>, transform_indices = @transform_2, window_bounds = array<i64: 32, 1>}, {pipeline_mode = #tpu.pipeline_mode<synchronous>, transform_indices = @transform_3, window_bounds = array<i64: 64, 288>}, {pipeline_mode = #tpu.pipeline_mode<synchronous>, transform_indices = @transform_4, window_bounds = array<i64: 64, 1>}, {pipeline_mode = #tpu.pipeline_mode<synchronous>, transform_indices = @transform_5, window_bounds = array<i64: 697, 169>}, {pipeline_mode = #tpu.pipeline_mode<synchronous>, transform_indices = @transform_6, window_bounds = array<i64: 127, 25>}, {pipeline_mode = #tpu.pipeline_mode<synchronous>, transform_indices = @transform_7, window_bounds = array<i64: 1600, 128>}, {pipeline_mode = #tpu.pipeline_mode<synchronous>, transform_indices = @transform_8, window_bounds = array<i64: 1, 128>}, {pipeline_mode = #tpu.pipeline_mode<synchronous>, transform_indices = @transform_9, window_bounds = array<i64: 128, 10>}, {pipeline_mode = #tpu.pipeline_mode<synchronous>, transform_indices = @transform_10, window_bounds = array<i64: 1, 10>}, {transform_indices = @transform_11, window_bounds = array<i64: 1, 1, 10>}]} {
    %c0 = arith.constant 0 : index
    %c0_0 = arith.constant 0 : index
    %0 = vector.load %arg2[%c0, %c0_0] : memref<32x9xf32, #tpu.memory_space<vmem>>, vector<32x9xf32>
    %c0_1 = arith.constant 0 : index
    %c0_2 = arith.constant 0 : index
    %1 = vector.load %arg3[%c0_1, %c0_2] : memref<32x1xf32, #tpu.memory_space<vmem>>, vector<32x1xf32>
    %c0_3 = arith.constant 0 : index
    %c0_4 = arith.constant 0 : index
    %2 = vector.load %arg4[%c0_3, %c0_4] : memref<64x288xbf16, #tpu.memory_space<vmem>>, vector<64x288xbf16>
    %c0_5 = arith.constant 0 : index
    %c0_6 = arith.constant 0 : index
    %3 = vector.load %arg5[%c0_5, %c0_6] : memref<64x1xf32, #tpu.memory_space<vmem>>, vector<64x1xf32>
    %c0_7 = arith.constant 0 : index
    %c0_8 = arith.constant 0 : index
    %4 = vector.load %arg6[%c0_7, %c0_8] : memref<697x169xbf16, #tpu.memory_space<vmem>>, vector<697x169xbf16>
    %c0_9 = arith.constant 0 : index
    %c0_10 = arith.constant 0 : index
    %5 = vector.load %arg7[%c0_9, %c0_10] : memref<127x25xbf16, #tpu.memory_space<vmem>>, vector<127x25xbf16>
    %c0_11 = arith.constant 0 : index
    %c0_12 = arith.constant 0 : index
    %6 = vector.load %arg8[%c0_11, %c0_12] : memref<1600x128xbf16, #tpu.memory_space<vmem>>, vector<1600x128xbf16>
    %c0_13 = arith.constant 0 : index
    %c0_14 = arith.constant 0 : index
    %7 = vector.load %arg9[%c0_13, %c0_14] : memref<1x128xf32, #tpu.memory_space<vmem>>, vector<1x128xf32>
    %c0_15 = arith.constant 0 : index
    %c0_16 = arith.constant 0 : index
    %8 = vector.load %arg10[%c0_15, %c0_16] : memref<128x10xbf16, #tpu.memory_space<vmem>>, vector<128x10xbf16>
    %c0_17 = arith.constant 0 : index
    %c0_18 = arith.constant 0 : index
    %9 = vector.load %arg11[%c0_17, %c0_18] : memref<1x10xf32, #tpu.memory_space<vmem>>, vector<1x10xf32>
    %c0_19 = arith.constant 0 : index
    %c0_20 = arith.constant 0 : index
    %c0_21 = arith.constant 0 : index
    %10 = vector.load %arg1[%c0_19, %c0_20, %c0_21] : memref<1x1x784xf32, #tpu.memory_space<vmem>>, vector<1x1x784xf32>
    %11 = vector.shape_cast %10 : vector<1x1x784xf32> to vector<1x784xf32>
    %cst = arith.constant 0.000000e+00 : f32
    %12 = vector.broadcast %cst : f32 to vector<32x726xf32>
    %13 = vector.extract_strided_slice %0 {offsets = [0, 0], sizes = [32, 1], strides = [1, 1]} : vector<32x9xf32> to vector<32x1xf32>
    %14 = vector.extract_strided_slice %11 {offsets = [0, 0], sizes = [1, 726], strides = [1, 1]} : vector<1x784xf32> to vector<1x726xf32>
    %15 = vector.broadcast %13 : vector<32x1xf32> to vector<32x726xf32>
    %16 = vector.broadcast %14 : vector<1x726xf32> to vector<32x726xf32>
    %17 = arith.mulf %15, %16 : vector<32x726xf32>
    %18 = arith.addf %12, %17 : vector<32x726xf32>
    %19 = vector.extract_strided_slice %0 {offsets = [0, 1], sizes = [32, 1], strides = [1, 1]} : vector<32x9xf32> to vector<32x1xf32>
    %20 = vector.extract_strided_slice %11 {offsets = [0, 1], sizes = [1, 726], strides = [1, 1]} : vector<1x784xf32> to vector<1x726xf32>
    %21 = vector.broadcast %19 : vector<32x1xf32> to vector<32x726xf32>
    %22 = vector.broadcast %20 : vector<1x726xf32> to vector<32x726xf32>
    %23 = arith.mulf %21, %22 : vector<32x726xf32>
    %24 = arith.addf %18, %23 : vector<32x726xf32>
    %25 = vector.extract_strided_slice %0 {offsets = [0, 2], sizes = [32, 1], strides = [1, 1]} : vector<32x9xf32> to vector<32x1xf32>
    %26 = vector.extract_strided_slice %11 {offsets = [0, 2], sizes = [1, 726], strides = [1, 1]} : vector<1x784xf32> to vector<1x726xf32>
    %27 = vector.broadcast %25 : vector<32x1xf32> to vector<32x726xf32>
    %28 = vector.broadcast %26 : vector<1x726xf32> to vector<32x726xf32>
    %29 = arith.mulf %27, %28 : vector<32x726xf32>
    %30 = arith.addf %24, %29 : vector<32x726xf32>
    %31 = vector.extract_strided_slice %0 {offsets = [0, 3], sizes = [32, 1], strides = [1, 1]} : vector<32x9xf32> to vector<32x1xf32>
    %32 = vector.extract_strided_slice %11 {offsets = [0, 28], sizes = [1, 726], strides = [1, 1]} : vector<1x784xf32> to vector<1x726xf32>
    %33 = vector.broadcast %31 : vector<32x1xf32> to vector<32x726xf32>
    %34 = vector.broadcast %32 : vector<1x726xf32> to vector<32x726xf32>
    %35 = arith.mulf %33, %34 : vector<32x726xf32>
    %36 = arith.addf %30, %35 : vector<32x726xf32>
    %37 = vector.extract_strided_slice %0 {offsets = [0, 4], sizes = [32, 1], strides = [1, 1]} : vector<32x9xf32> to vector<32x1xf32>
    %38 = vector.extract_strided_slice %11 {offsets = [0, 29], sizes = [1, 726], strides = [1, 1]} : vector<1x784xf32> to vector<1x726xf32>
    %39 = vector.broadcast %37 : vector<32x1xf32> to vector<32x726xf32>
    %40 = vector.broadcast %38 : vector<1x726xf32> to vector<32x726xf32>
    %41 = arith.mulf %39, %40 : vector<32x726xf32>
    %42 = arith.addf %36, %41 : vector<32x726xf32>
    %43 = vector.extract_strided_slice %0 {offsets = [0, 5], sizes = [32, 1], strides = [1, 1]} : vector<32x9xf32> to vector<32x1xf32>
    %44 = vector.extract_strided_slice %11 {offsets = [0, 30], sizes = [1, 726], strides = [1, 1]} : vector<1x784xf32> to vector<1x726xf32>
    %45 = vector.broadcast %43 : vector<32x1xf32> to vector<32x726xf32>
    %46 = vector.broadcast %44 : vector<1x726xf32> to vector<32x726xf32>
    %47 = arith.mulf %45, %46 : vector<32x726xf32>
    %48 = arith.addf %42, %47 : vector<32x726xf32>
    %49 = vector.extract_strided_slice %0 {offsets = [0, 6], sizes = [32, 1], strides = [1, 1]} : vector<32x9xf32> to vector<32x1xf32>
    %50 = vector.extract_strided_slice %11 {offsets = [0, 56], sizes = [1, 726], strides = [1, 1]} : vector<1x784xf32> to vector<1x726xf32>
    %51 = vector.broadcast %49 : vector<32x1xf32> to vector<32x726xf32>
    %52 = vector.broadcast %50 : vector<1x726xf32> to vector<32x726xf32>
    %53 = arith.mulf %51, %52 : vector<32x726xf32>
    %54 = arith.addf %48, %53 : vector<32x726xf32>
    %55 = vector.extract_strided_slice %0 {offsets = [0, 7], sizes = [32, 1], strides = [1, 1]} : vector<32x9xf32> to vector<32x1xf32>
    %56 = vector.extract_strided_slice %11 {offsets = [0, 57], sizes = [1, 726], strides = [1, 1]} : vector<1x784xf32> to vector<1x726xf32>
    %57 = vector.broadcast %55 : vector<32x1xf32> to vector<32x726xf32>
    %58 = vector.broadcast %56 : vector<1x726xf32> to vector<32x726xf32>
    %59 = arith.mulf %57, %58 : vector<32x726xf32>
    %60 = arith.addf %54, %59 : vector<32x726xf32>
    %61 = vector.extract_strided_slice %0 {offsets = [0, 8], sizes = [32, 1], strides = [1, 1]} : vector<32x9xf32> to vector<32x1xf32>
    %62 = vector.extract_strided_slice %11 {offsets = [0, 58], sizes = [1, 726], strides = [1, 1]} : vector<1x784xf32> to vector<1x726xf32>
    %63 = vector.broadcast %61 : vector<32x1xf32> to vector<32x726xf32>
    %64 = vector.broadcast %62 : vector<1x726xf32> to vector<32x726xf32>
    %65 = arith.mulf %63, %64 : vector<32x726xf32>
    %66 = arith.addf %60, %65 : vector<32x726xf32>
    %67 = vector.broadcast %1 : vector<32x1xf32> to vector<32x726xf32>
    %68 = arith.addf %66, %67 : vector<32x726xf32>
    %cst_22 = arith.constant 0.000000e+00 : f32
    %69 = vector.broadcast %cst_22 : f32 to vector<32x726xf32>
    %70 = arith.maximumf %68, %69 : vector<32x726xf32>
    %71 = vector.extract_strided_slice %70 {offsets = [0, 0], sizes = [32, 698], strides = [1, 1]} : vector<32x726xf32> to vector<32x698xf32>
    %72 = vector.extract_strided_slice %70 {offsets = [0, 28], sizes = [32, 698], strides = [1, 1]} : vector<32x726xf32> to vector<32x698xf32>
    %73 = arith.maximumf %71, %72 : vector<32x698xf32>
    %74 = vector.extract_strided_slice %73 {offsets = [0, 0], sizes = [32, 697], strides = [1, 1]} : vector<32x698xf32> to vector<32x697xf32>
    %75 = vector.extract_strided_slice %73 {offsets = [0, 1], sizes = [32, 697], strides = [1, 1]} : vector<32x698xf32> to vector<32x697xf32>
    %76 = arith.maximumf %74, %75 : vector<32x697xf32>
    %77 = arith.truncf %76 : vector<32x697xf32> to vector<32x697xbf16>
    %cst_23 = arith.constant dense<0.000000e+00> : vector<32x169xf32>
    %78 = tpu.matmul %77, %4, %cst_23 {dimension_numbers = #tpu.dot_dimension_numbers<[1], [0], [0], [1], [0, 0, 1, 1], [], []>} : vector<32x697xbf16>, vector<697x169xbf16>, vector<32x169xf32> -> vector<32x169xf32>
    %79 = arith.truncf %78 : vector<32x169xf32> to vector<32x169xbf16>
    %cst_24 = arith.constant 0.000000e+00 : f32
    %80 = vector.broadcast %cst_24 : f32 to vector<64x141xf32>
    %81 = vector.extract_strided_slice %2 {offsets = [0, 0], sizes = [64, 32], strides = [1, 1]} : vector<64x288xbf16> to vector<64x32xbf16>
    %82 = vector.extract_strided_slice %79 {offsets = [0, 0], sizes = [32, 141], strides = [1, 1]} : vector<32x169xbf16> to vector<32x141xbf16>
    %cst_25 = arith.constant dense<0.000000e+00> : vector<64x141xf32>
    %83 = tpu.matmul %81, %82, %cst_25 {dimension_numbers = #tpu.dot_dimension_numbers<[1], [0], [0], [1], [0, 0, 1, 1], [], []>} : vector<64x32xbf16>, vector<32x141xbf16>, vector<64x141xf32> -> vector<64x141xf32>
    %84 = arith.addf %80, %83 : vector<64x141xf32>
    %85 = vector.extract_strided_slice %2 {offsets = [0, 32], sizes = [64, 32], strides = [1, 1]} : vector<64x288xbf16> to vector<64x32xbf16>
    %86 = vector.extract_strided_slice %79 {offsets = [0, 1], sizes = [32, 141], strides = [1, 1]} : vector<32x169xbf16> to vector<32x141xbf16>
    %cst_26 = arith.constant dense<0.000000e+00> : vector<64x141xf32>
    %87 = tpu.matmul %85, %86, %cst_26 {dimension_numbers = #tpu.dot_dimension_numbers<[1], [0], [0], [1], [0, 0, 1, 1], [], []>} : vector<64x32xbf16>, vector<32x141xbf16>, vector<64x141xf32> -> vector<64x141xf32>
    %88 = arith.addf %84, %87 : vector<64x141xf32>
    %89 = vector.extract_strided_slice %2 {offsets = [0, 64], sizes = [64, 32], strides = [1, 1]} : vector<64x288xbf16> to vector<64x32xbf16>
    %90 = vector.extract_strided_slice %79 {offsets = [0, 2], sizes = [32, 141], strides = [1, 1]} : vector<32x169xbf16> to vector<32x141xbf16>
    %cst_27 = arith.constant dense<0.000000e+00> : vector<64x141xf32>
    %91 = tpu.matmul %89, %90, %cst_27 {dimension_numbers = #tpu.dot_dimension_numbers<[1], [0], [0], [1], [0, 0, 1, 1], [], []>} : vector<64x32xbf16>, vector<32x141xbf16>, vector<64x141xf32> -> vector<64x141xf32>
    %92 = arith.addf %88, %91 : vector<64x141xf32>
    %93 = vector.extract_strided_slice %2 {offsets = [0, 96], sizes = [64, 32], strides = [1, 1]} : vector<64x288xbf16> to vector<64x32xbf16>
    %94 = vector.extract_strided_slice %79 {offsets = [0, 13], sizes = [32, 141], strides = [1, 1]} : vector<32x169xbf16> to vector<32x141xbf16>
    %cst_28 = arith.constant dense<0.000000e+00> : vector<64x141xf32>
    %95 = tpu.matmul %93, %94, %cst_28 {dimension_numbers = #tpu.dot_dimension_numbers<[1], [0], [0], [1], [0, 0, 1, 1], [], []>} : vector<64x32xbf16>, vector<32x141xbf16>, vector<64x141xf32> -> vector<64x141xf32>
    %96 = arith.addf %92, %95 : vector<64x141xf32>
    %97 = vector.extract_strided_slice %2 {offsets = [0, 128], sizes = [64, 32], strides = [1, 1]} : vector<64x288xbf16> to vector<64x32xbf16>
    %98 = vector.extract_strided_slice %79 {offsets = [0, 14], sizes = [32, 141], strides = [1, 1]} : vector<32x169xbf16> to vector<32x141xbf16>
    %cst_29 = arith.constant dense<0.000000e+00> : vector<64x141xf32>
    %99 = tpu.matmul %97, %98, %cst_29 {dimension_numbers = #tpu.dot_dimension_numbers<[1], [0], [0], [1], [0, 0, 1, 1], [], []>} : vector<64x32xbf16>, vector<32x141xbf16>, vector<64x141xf32> -> vector<64x141xf32>
    %100 = arith.addf %96, %99 : vector<64x141xf32>
    %101 = vector.extract_strided_slice %2 {offsets = [0, 160], sizes = [64, 32], strides = [1, 1]} : vector<64x288xbf16> to vector<64x32xbf16>
    %102 = vector.extract_strided_slice %79 {offsets = [0, 15], sizes = [32, 141], strides = [1, 1]} : vector<32x169xbf16> to vector<32x141xbf16>
    %cst_30 = arith.constant dense<0.000000e+00> : vector<64x141xf32>
    %103 = tpu.matmul %101, %102, %cst_30 {dimension_numbers = #tpu.dot_dimension_numbers<[1], [0], [0], [1], [0, 0, 1, 1], [], []>} : vector<64x32xbf16>, vector<32x141xbf16>, vector<64x141xf32> -> vector<64x141xf32>
    %104 = arith.addf %100, %103 : vector<64x141xf32>
    %105 = vector.extract_strided_slice %2 {offsets = [0, 192], sizes = [64, 32], strides = [1, 1]} : vector<64x288xbf16> to vector<64x32xbf16>
    %106 = vector.extract_strided_slice %79 {offsets = [0, 26], sizes = [32, 141], strides = [1, 1]} : vector<32x169xbf16> to vector<32x141xbf16>
    %cst_31 = arith.constant dense<0.000000e+00> : vector<64x141xf32>
    %107 = tpu.matmul %105, %106, %cst_31 {dimension_numbers = #tpu.dot_dimension_numbers<[1], [0], [0], [1], [0, 0, 1, 1], [], []>} : vector<64x32xbf16>, vector<32x141xbf16>, vector<64x141xf32> -> vector<64x141xf32>
    %108 = arith.addf %104, %107 : vector<64x141xf32>
    %109 = vector.extract_strided_slice %2 {offsets = [0, 224], sizes = [64, 32], strides = [1, 1]} : vector<64x288xbf16> to vector<64x32xbf16>
    %110 = vector.extract_strided_slice %79 {offsets = [0, 27], sizes = [32, 141], strides = [1, 1]} : vector<32x169xbf16> to vector<32x141xbf16>
    %cst_32 = arith.constant dense<0.000000e+00> : vector<64x141xf32>
    %111 = tpu.matmul %109, %110, %cst_32 {dimension_numbers = #tpu.dot_dimension_numbers<[1], [0], [0], [1], [0, 0, 1, 1], [], []>} : vector<64x32xbf16>, vector<32x141xbf16>, vector<64x141xf32> -> vector<64x141xf32>
    %112 = arith.addf %108, %111 : vector<64x141xf32>
    %113 = vector.extract_strided_slice %2 {offsets = [0, 256], sizes = [64, 32], strides = [1, 1]} : vector<64x288xbf16> to vector<64x32xbf16>
    %114 = vector.extract_strided_slice %79 {offsets = [0, 28], sizes = [32, 141], strides = [1, 1]} : vector<32x169xbf16> to vector<32x141xbf16>
    %cst_33 = arith.constant dense<0.000000e+00> : vector<64x141xf32>
    %115 = tpu.matmul %113, %114, %cst_33 {dimension_numbers = #tpu.dot_dimension_numbers<[1], [0], [0], [1], [0, 0, 1, 1], [], []>} : vector<64x32xbf16>, vector<32x141xbf16>, vector<64x141xf32> -> vector<64x141xf32>
    %116 = arith.addf %112, %115 : vector<64x141xf32>
    %117 = vector.broadcast %3 : vector<64x1xf32> to vector<64x141xf32>
    %118 = arith.addf %116, %117 : vector<64x141xf32>
    %cst_34 = arith.constant 0.000000e+00 : f32
    %119 = vector.broadcast %cst_34 : f32 to vector<64x141xf32>
    %120 = arith.maximumf %118, %119 : vector<64x141xf32>
    %121 = vector.extract_strided_slice %120 {offsets = [0, 0], sizes = [64, 128], strides = [1, 1]} : vector<64x141xf32> to vector<64x128xf32>
    %122 = vector.extract_strided_slice %120 {offsets = [0, 13], sizes = [64, 128], strides = [1, 1]} : vector<64x141xf32> to vector<64x128xf32>
    %123 = arith.maximumf %121, %122 : vector<64x128xf32>
    %124 = vector.extract_strided_slice %123 {offsets = [0, 0], sizes = [64, 127], strides = [1, 1]} : vector<64x128xf32> to vector<64x127xf32>
    %125 = vector.extract_strided_slice %123 {offsets = [0, 1], sizes = [64, 127], strides = [1, 1]} : vector<64x128xf32> to vector<64x127xf32>
    %126 = arith.maximumf %124, %125 : vector<64x127xf32>
    %127 = arith.truncf %126 : vector<64x127xf32> to vector<64x127xbf16>
    %cst_35 = arith.constant dense<0.000000e+00> : vector<64x25xf32>
    %128 = tpu.matmul %127, %5, %cst_35 {dimension_numbers = #tpu.dot_dimension_numbers<[1], [0], [0], [1], [0, 0, 1, 1], [], []>} : vector<64x127xbf16>, vector<127x25xbf16>, vector<64x25xf32> -> vector<64x25xf32>
    %129 = arith.truncf %128 : vector<64x25xf32> to vector<64x25xbf16>
    %130 = vector.extract_strided_slice %129 {offsets = [0, 0], sizes = [1, 25], strides = [1, 1]} : vector<64x25xbf16> to vector<1x25xbf16>
    %131 = vector.extract_strided_slice %129 {offsets = [1, 0], sizes = [1, 25], strides = [1, 1]} : vector<64x25xbf16> to vector<1x25xbf16>
    %132 = vector.extract_strided_slice %129 {offsets = [2, 0], sizes = [1, 25], strides = [1, 1]} : vector<64x25xbf16> to vector<1x25xbf16>
    %133 = vector.extract_strided_slice %129 {offsets = [3, 0], sizes = [1, 25], strides = [1, 1]} : vector<64x25xbf16> to vector<1x25xbf16>
    %134 = vector.extract_strided_slice %129 {offsets = [4, 0], sizes = [1, 25], strides = [1, 1]} : vector<64x25xbf16> to vector<1x25xbf16>
    %135 = vector.extract_strided_slice %129 {offsets = [5, 0], sizes = [1, 25], strides = [1, 1]} : vector<64x25xbf16> to vector<1x25xbf16>
    %136 = vector.extract_strided_slice %129 {offsets = [6, 0], sizes = [1, 25], strides = [1, 1]} : vector<64x25xbf16> to vector<1x25xbf16>
    %137 = vector.extract_strided_slice %129 {offsets = [7, 0], sizes = [1, 25], strides = [1, 1]} : vector<64x25xbf16> to vector<1x25xbf16>
    %138 = vector.extract_strided_slice %129 {offsets = [8, 0], sizes = [1, 25], strides = [1, 1]} : vector<64x25xbf16> to vector<1x25xbf16>
    %139 = vector.extract_strided_slice %129 {offsets = [9, 0], sizes = [1, 25], strides = [1, 1]} : vector<64x25xbf16> to vector<1x25xbf16>
    %140 = vector.extract_strided_slice %129 {offsets = [10, 0], sizes = [1, 25], strides = [1, 1]} : vector<64x25xbf16> to vector<1x25xbf16>
    %141 = vector.extract_strided_slice %129 {offsets = [11, 0], sizes = [1, 25], strides = [1, 1]} : vector<64x25xbf16> to vector<1x25xbf16>
    %142 = vector.extract_strided_slice %129 {offsets = [12, 0], sizes = [1, 25], strides = [1, 1]} : vector<64x25xbf16> to vector<1x25xbf16>
    %143 = vector.extract_strided_slice %129 {offsets = [13, 0], sizes = [1, 25], strides = [1, 1]} : vector<64x25xbf16> to vector<1x25xbf16>
    %144 = vector.extract_strided_slice %129 {offsets = [14, 0], sizes = [1, 25], strides = [1, 1]} : vector<64x25xbf16> to vector<1x25xbf16>
    %145 = vector.extract_strided_slice %129 {offsets = [15, 0], sizes = [1, 25], strides = [1, 1]} : vector<64x25xbf16> to vector<1x25xbf16>
    %146 = vector.extract_strided_slice %129 {offsets = [16, 0], sizes = [1, 25], strides = [1, 1]} : vector<64x25xbf16> to vector<1x25xbf16>
    %147 = vector.extract_strided_slice %129 {offsets = [17, 0], sizes = [1, 25], strides = [1, 1]} : vector<64x25xbf16> to vector<1x25xbf16>
    %148 = vector.extract_strided_slice %129 {offsets = [18, 0], sizes = [1, 25], strides = [1, 1]} : vector<64x25xbf16> to vector<1x25xbf16>
    %149 = vector.extract_strided_slice %129 {offsets = [19, 0], sizes = [1, 25], strides = [1, 1]} : vector<64x25xbf16> to vector<1x25xbf16>
    %150 = vector.extract_strided_slice %129 {offsets = [20, 0], sizes = [1, 25], strides = [1, 1]} : vector<64x25xbf16> to vector<1x25xbf16>
    %151 = vector.extract_strided_slice %129 {offsets = [21, 0], sizes = [1, 25], strides = [1, 1]} : vector<64x25xbf16> to vector<1x25xbf16>
    %152 = vector.extract_strided_slice %129 {offsets = [22, 0], sizes = [1, 25], strides = [1, 1]} : vector<64x25xbf16> to vector<1x25xbf16>
    %153 = vector.extract_strided_slice %129 {offsets = [23, 0], sizes = [1, 25], strides = [1, 1]} : vector<64x25xbf16> to vector<1x25xbf16>
    %154 = vector.extract_strided_slice %129 {offsets = [24, 0], sizes = [1, 25], strides = [1, 1]} : vector<64x25xbf16> to vector<1x25xbf16>
    %155 = vector.extract_strided_slice %129 {offsets = [25, 0], sizes = [1, 25], strides = [1, 1]} : vector<64x25xbf16> to vector<1x25xbf16>
    %156 = vector.extract_strided_slice %129 {offsets = [26, 0], sizes = [1, 25], strides = [1, 1]} : vector<64x25xbf16> to vector<1x25xbf16>
    %157 = vector.extract_strided_slice %129 {offsets = [27, 0], sizes = [1, 25], strides = [1, 1]} : vector<64x25xbf16> to vector<1x25xbf16>
    %158 = vector.extract_strided_slice %129 {offsets = [28, 0], sizes = [1, 25], strides = [1, 1]} : vector<64x25xbf16> to vector<1x25xbf16>
    %159 = vector.extract_strided_slice %129 {offsets = [29, 0], sizes = [1, 25], strides = [1, 1]} : vector<64x25xbf16> to vector<1x25xbf16>
    %160 = vector.extract_strided_slice %129 {offsets = [30, 0], sizes = [1, 25], strides = [1, 1]} : vector<64x25xbf16> to vector<1x25xbf16>
    %161 = vector.extract_strided_slice %129 {offsets = [31, 0], sizes = [1, 25], strides = [1, 1]} : vector<64x25xbf16> to vector<1x25xbf16>
    %162 = vector.extract_strided_slice %129 {offsets = [32, 0], sizes = [1, 25], strides = [1, 1]} : vector<64x25xbf16> to vector<1x25xbf16>
    %163 = vector.extract_strided_slice %129 {offsets = [33, 0], sizes = [1, 25], strides = [1, 1]} : vector<64x25xbf16> to vector<1x25xbf16>
    %164 = vector.extract_strided_slice %129 {offsets = [34, 0], sizes = [1, 25], strides = [1, 1]} : vector<64x25xbf16> to vector<1x25xbf16>
    %165 = vector.extract_strided_slice %129 {offsets = [35, 0], sizes = [1, 25], strides = [1, 1]} : vector<64x25xbf16> to vector<1x25xbf16>
    %166 = vector.extract_strided_slice %129 {offsets = [36, 0], sizes = [1, 25], strides = [1, 1]} : vector<64x25xbf16> to vector<1x25xbf16>
    %167 = vector.extract_strided_slice %129 {offsets = [37, 0], sizes = [1, 25], strides = [1, 1]} : vector<64x25xbf16> to vector<1x25xbf16>
    %168 = vector.extract_strided_slice %129 {offsets = [38, 0], sizes = [1, 25], strides = [1, 1]} : vector<64x25xbf16> to vector<1x25xbf16>
    %169 = vector.extract_strided_slice %129 {offsets = [39, 0], sizes = [1, 25], strides = [1, 1]} : vector<64x25xbf16> to vector<1x25xbf16>
    %170 = vector.extract_strided_slice %129 {offsets = [40, 0], sizes = [1, 25], strides = [1, 1]} : vector<64x25xbf16> to vector<1x25xbf16>
    %171 = vector.extract_strided_slice %129 {offsets = [41, 0], sizes = [1, 25], strides = [1, 1]} : vector<64x25xbf16> to vector<1x25xbf16>
    %172 = vector.extract_strided_slice %129 {offsets = [42, 0], sizes = [1, 25], strides = [1, 1]} : vector<64x25xbf16> to vector<1x25xbf16>
    %173 = vector.extract_strided_slice %129 {offsets = [43, 0], sizes = [1, 25], strides = [1, 1]} : vector<64x25xbf16> to vector<1x25xbf16>
    %174 = vector.extract_strided_slice %129 {offsets = [44, 0], sizes = [1, 25], strides = [1, 1]} : vector<64x25xbf16> to vector<1x25xbf16>
    %175 = vector.extract_strided_slice %129 {offsets = [45, 0], sizes = [1, 25], strides = [1, 1]} : vector<64x25xbf16> to vector<1x25xbf16>
    %176 = vector.extract_strided_slice %129 {offsets = [46, 0], sizes = [1, 25], strides = [1, 1]} : vector<64x25xbf16> to vector<1x25xbf16>
    %177 = vector.extract_strided_slice %129 {offsets = [47, 0], sizes = [1, 25], strides = [1, 1]} : vector<64x25xbf16> to vector<1x25xbf16>
    %178 = vector.extract_strided_slice %129 {offsets = [48, 0], sizes = [1, 25], strides = [1, 1]} : vector<64x25xbf16> to vector<1x25xbf16>
    %179 = vector.extract_strided_slice %129 {offsets = [49, 0], sizes = [1, 25], strides = [1, 1]} : vector<64x25xbf16> to vector<1x25xbf16>
    %180 = vector.extract_strided_slice %129 {offsets = [50, 0], sizes = [1, 25], strides = [1, 1]} : vector<64x25xbf16> to vector<1x25xbf16>
    %181 = vector.extract_strided_slice %129 {offsets = [51, 0], sizes = [1, 25], strides = [1, 1]} : vector<64x25xbf16> to vector<1x25xbf16>
    %182 = vector.extract_strided_slice %129 {offsets = [52, 0], sizes = [1, 25], strides = [1, 1]} : vector<64x25xbf16> to vector<1x25xbf16>
    %183 = vector.extract_strided_slice %129 {offsets = [53, 0], sizes = [1, 25], strides = [1, 1]} : vector<64x25xbf16> to vector<1x25xbf16>
    %184 = vector.extract_strided_slice %129 {offsets = [54, 0], sizes = [1, 25], strides = [1, 1]} : vector<64x25xbf16> to vector<1x25xbf16>
    %185 = vector.extract_strided_slice %129 {offsets = [55, 0], sizes = [1, 25], strides = [1, 1]} : vector<64x25xbf16> to vector<1x25xbf16>
    %186 = vector.extract_strided_slice %129 {offsets = [56, 0], sizes = [1, 25], strides = [1, 1]} : vector<64x25xbf16> to vector<1x25xbf16>
    %187 = vector.extract_strided_slice %129 {offsets = [57, 0], sizes = [1, 25], strides = [1, 1]} : vector<64x25xbf16> to vector<1x25xbf16>
    %188 = vector.extract_strided_slice %129 {offsets = [58, 0], sizes = [1, 25], strides = [1, 1]} : vector<64x25xbf16> to vector<1x25xbf16>
    %189 = vector.extract_strided_slice %129 {offsets = [59, 0], sizes = [1, 25], strides = [1, 1]} : vector<64x25xbf16> to vector<1x25xbf16>
    %190 = vector.extract_strided_slice %129 {offsets = [60, 0], sizes = [1, 25], strides = [1, 1]} : vector<64x25xbf16> to vector<1x25xbf16>
    %191 = vector.extract_strided_slice %129 {offsets = [61, 0], sizes = [1, 25], strides = [1, 1]} : vector<64x25xbf16> to vector<1x25xbf16>
    %192 = vector.extract_strided_slice %129 {offsets = [62, 0], sizes = [1, 25], strides = [1, 1]} : vector<64x25xbf16> to vector<1x25xbf16>
    %193 = vector.extract_strided_slice %129 {offsets = [63, 0], sizes = [1, 25], strides = [1, 1]} : vector<64x25xbf16> to vector<1x25xbf16>
    %194 = tpu.concatenate %130, %131, %132, %133, %134, %135, %136, %137, %138, %139, %140, %141, %142, %143, %144, %145 in 1 : vector<1x25xbf16>, vector<1x25xbf16>, vector<1x25xbf16>, vector<1x25xbf16>, vector<1x25xbf16>, vector<1x25xbf16>, vector<1x25xbf16>, vector<1x25xbf16>, vector<1x25xbf16>, vector<1x25xbf16>, vector<1x25xbf16>, vector<1x25xbf16>, vector<1x25xbf16>, vector<1x25xbf16>, vector<1x25xbf16>, vector<1x25xbf16> -> vector<1x400xbf16>
    %195 = tpu.concatenate %146, %147, %148, %149, %150, %151, %152, %153, %154, %155, %156, %157, %158, %159, %160, %161 in 1 : vector<1x25xbf16>, vector<1x25xbf16>, vector<1x25xbf16>, vector<1x25xbf16>, vector<1x25xbf16>, vector<1x25xbf16>, vector<1x25xbf16>, vector<1x25xbf16>, vector<1x25xbf16>, vector<1x25xbf16>, vector<1x25xbf16>, vector<1x25xbf16>, vector<1x25xbf16>, vector<1x25xbf16>, vector<1x25xbf16>, vector<1x25xbf16> -> vector<1x400xbf16>
    %196 = tpu.concatenate %162, %163, %164, %165, %166, %167, %168, %169, %170, %171, %172, %173, %174, %175, %176, %177 in 1 : vector<1x25xbf16>, vector<1x25xbf16>, vector<1x25xbf16>, vector<1x25xbf16>, vector<1x25xbf16>, vector<1x25xbf16>, vector<1x25xbf16>, vector<1x25xbf16>, vector<1x25xbf16>, vector<1x25xbf16>, vector<1x25xbf16>, vector<1x25xbf16>, vector<1x25xbf16>, vector<1x25xbf16>, vector<1x25xbf16>, vector<1x25xbf16> -> vector<1x400xbf16>
    %197 = tpu.concatenate %178, %179, %180, %181, %182, %183, %184, %185, %186, %187, %188, %189, %190, %191, %192, %193 in 1 : vector<1x25xbf16>, vector<1x25xbf16>, vector<1x25xbf16>, vector<1x25xbf16>, vector<1x25xbf16>, vector<1x25xbf16>, vector<1x25xbf16>, vector<1x25xbf16>, vector<1x25xbf16>, vector<1x25xbf16>, vector<1x25xbf16>, vector<1x25xbf16>, vector<1x25xbf16>, vector<1x25xbf16>, vector<1x25xbf16>, vector<1x25xbf16> -> vector<1x400xbf16>
    %198 = tpu.concatenate %194, %195, %196, %197 in 1 : vector<1x400xbf16>, vector<1x400xbf16>, vector<1x400xbf16>, vector<1x400xbf16> -> vector<1x1600xbf16>
    %cst_36 = arith.constant dense<0.000000e+00> : vector<1x128xf32>
    %199 = tpu.matmul %198, %6, %cst_36 {dimension_numbers = #tpu.dot_dimension_numbers<[1], [0], [0], [1], [0, 0, 1, 1], [], []>} : vector<1x1600xbf16>, vector<1600x128xbf16>, vector<1x128xf32> -> vector<1x128xf32>
    %200 = arith.addf %199, %7 : vector<1x128xf32>
    %cst_37 = arith.constant 0.000000e+00 : f32
    %201 = vector.broadcast %cst_37 : f32 to vector<1x128xf32>
    %202 = arith.maximumf %200, %201 : vector<1x128xf32>
    %203 = arith.truncf %202 : vector<1x128xf32> to vector<1x128xbf16>
    %cst_38 = arith.constant dense<0.000000e+00> : vector<1x10xf32>
    %204 = tpu.matmul %203, %8, %cst_38 {dimension_numbers = #tpu.dot_dimension_numbers<[1], [0], [0], [1], [0, 0, 1, 1], [], []>} : vector<1x128xbf16>, vector<128x10xbf16>, vector<1x10xf32> -> vector<1x10xf32>
    %205 = arith.addf %204, %9 : vector<1x10xf32>
    %c0_39 = arith.constant 0 : index
    %c0_40 = arith.constant 0 : index
    %c0_41 = arith.constant 0 : index
    %206 = vector.load %arg12[%c0_39, %c0_40, %c0_41] : memref<1x1x10xf32, #tpu.memory_space<vmem>>, vector<1x1x10xf32>
    %207 = vector.shape_cast %206 : vector<1x1x10xf32> to vector<1x10xf32>
    %208 = vector.shape_cast %205 : vector<1x10xf32> to vector<1x1x10xf32>
    tpu.vector_store %arg12[%c0_39, %c0_40, %c0_41], %208 {strides = array<i32>} : memref<1x1x10xf32, #tpu.memory_space<vmem>>, vector<1x1x10xf32>,
    return
  }
  func.func @transform_0(%arg0: i32) -> (i32, i32, i32) {
    %c0_i32 = arith.constant 0 : i32
    %c0_i32_0 = arith.constant 0 : i32
    %c0_i32_1 = arith.constant 0 : i32
    return %arg0, %c0_i32, %c0_i32_0 : i32, i32, i32
  }
  func.func @transform_1(%arg0: i32) -> (i32, i32) {
    %c0_i32 = arith.constant 0 : i32
    %c0_i32_0 = arith.constant 0 : i32
    %c0_i32_1 = arith.constant 0 : i32
    return %c0_i32, %c0_i32_0 : i32, i32
  }
  func.func @transform_2(%arg0: i32) -> (i32, i32) {
    %c0_i32 = arith.constant 0 : i32
    %c0_i32_0 = arith.constant 0 : i32
    %c0_i32_1 = arith.constant 0 : i32
    return %c0_i32, %c0_i32_0 : i32, i32
  }
  func.func @transform_3(%arg0: i32) -> (i32, i32) {
    %c0_i32 = arith.constant 0 : i32
    %c0_i32_0 = arith.constant 0 : i32
    %c0_i32_1 = arith.constant 0 : i32
    return %c0_i32, %c0_i32_0 : i32, i32
  }
  func.func @transform_4(%arg0: i32) -> (i32, i32) {
    %c0_i32 = arith.constant 0 : i32
    %c0_i32_0 = arith.constant 0 : i32
    %c0_i32_1 = arith.constant 0 : i32
    return %c0_i32, %c0_i32_0 : i32, i32
  }
  func.func @transform_5(%arg0: i32) -> (i32, i32) {
    %c0_i32 = arith.constant 0 : i32
    %c0_i32_0 = arith.constant 0 : i32
    %c0_i32_1 = arith.constant 0 : i32
    return %c0_i32, %c0_i32_0 : i32, i32
  }
  func.func @transform_6(%arg0: i32) -> (i32, i32) {
    %c0_i32 = arith.constant 0 : i32
    %c0_i32_0 = arith.constant 0 : i32
    %c0_i32_1 = arith.constant 0 : i32
    return %c0_i32, %c0_i32_0 : i32, i32
  }
  func.func @transform_7(%arg0: i32) -> (i32, i32) {
    %c0_i32 = arith.constant 0 : i32
    %c0_i32_0 = arith.constant 0 : i32
    %c0_i32_1 = arith.constant 0 : i32
    return %c0_i32, %c0_i32_0 : i32, i32
  }
  func.func @transform_8(%arg0: i32) -> (i32, i32) {
    %c0_i32 = arith.constant 0 : i32
    %c0_i32_0 = arith.constant 0 : i32
    %c0_i32_1 = arith.constant 0 : i32
    return %c0_i32, %c0_i32_0 : i32, i32
  }
  func.func @transform_9(%arg0: i32) -> (i32, i32) {
    %c0_i32 = arith.constant 0 : i32
    %c0_i32_0 = arith.constant 0 : i32
    %c0_i32_1 = arith.constant 0 : i32
    return %c0_i32, %c0_i32_0 : i32, i32
  }
  func.func @transform_10(%arg0: i32) -> (i32, i32) {
    %c0_i32 = arith.constant 0 : i32
    %c0_i32_0 = arith.constant 0 : i32
    %c0_i32_1 = arith.constant 0 : i32
    return %c0_i32, %c0_i32_0 : i32, i32
  }
  func.func @transform_11(%arg0: i32) -> (i32, i32, i32) {
    %c0_i32 = arith.constant 0 : i32
    %c0_i32_0 = arith.constant 0 : i32
    %c0_i32_1 = arith.constant 0 : i32
    return %arg0, %c0_i32, %c0_i32_0 : i32, i32, i32
  }
}

</mosaic_0001>

<llo_original>
// kernel: simple_cnn_forward.1
$region0: #{simple_cnn_forward.1}
  #allocation0 [shape = 'u32[]', space=smem, size = 0x4, offset = 0x4, fixed_abs, tag = 'smem constant byte address 0x4 - core index']
  #allocation1 [shape = 'u32[144,128]{1,0:T(1,128)}', space=vmem, size = 0x12000, scoped, tag = 'internal scratch']
  %s0 = inlined_call_operand.vmem [shape: f32[2,1,784], index: 0, kind: input, shape index: {}]
  %s1 = inlined_call_operand.vmem [shape: f32[32,9], index: 1, kind: input, shape index: {}]
  %s2 = inlined_call_operand.vmem [shape: f32[32,1], index: 2, kind: input, shape index: {}]
  %s3 = inlined_call_operand.vmem [shape: bf16[64,288], index: 3, kind: input, shape index: {}]
  %s4 = inlined_call_operand.vmem [shape: f32[64,1], index: 4, kind: input, shape index: {}]
  %s5 = inlined_call_operand.vmem [shape: bf16[697,169], index: 5, kind: input, shape index: {}]
  %s6 = inlined_call_operand.vmem [shape: bf16[127,25], index: 6, kind: input, shape index: {}]
  %s7 = inlined_call_operand.vmem [shape: bf16[1600,128], index: 7, kind: input, shape index: {}]
  %s8 = inlined_call_operand.vmem [shape: f32[1,128], index: 8, kind: input, shape index: {}]
  %s9 = inlined_call_operand.vmem [shape: bf16[128,10], index: 9, kind: input, shape index: {}]
  %s10 = inlined_call_operand.vmem [shape: f32[1,10], index: 10, kind: input, shape index: {}]
  %s11 = inlined_call_operand.hbm [shape: f32[2,1,10], index: 11, kind: output, shape index: {}]
  %s12 = sld [smem:[#allocation0]]
  $region77: #{simple_cnn_forward.1} parent=0
    _
  %s14 = ssub.s32 1, %s12
  %s15 = scalar_select 0, %s14, %s12
  $region1: #{simple_cnn_forward.1} parent=0
    #allocation2 [shape = 'u8[1024]{0}', space=vmem, size = 0x400, scoped, tag = 'output window, operand 0']
    #allocation3 [shape = 's32[2]{0}', space=sflag, size = 0x8, scoped, tag = 'scoped memory for simple_cnn_forward.1']
    %16 = vsyncpa [#allocation3], 0
    %s17 = scalar_lea.sflag [#allocation3], 1
    %18 = vsyncpa %s17, 0
    loop: start=0, step=1, limit=4
    $region2: #{simple_cnn_forward.1} parent=1 // loop_pre_header
      _
    $region3: #{simple_cnn_forward.1} parent=1 // loop_header
      %s20 = sphi 0, %s24
      %p21 = scmp.ge.s32.totalorder %s20, 4
      %s30 = sphi 0, %s32
      %s33 = sphi 0, %s30
      %s34 = sphi 0, %s33
      %s50 = sphi 0, %s34
      %s54 = sphi 0, %s54
      %s56 = sphi 0, %s54
      %s57 = sphi 0, %s56
      %s71 = sphi 0, %s57
      %s75 = sphi 0, %s75
      %s77 = sphi 0, %s75
      %s78 = sphi 0, %s77
      %s92 = sphi 0, %s78
      %s96 = sphi 0, %s96
      %s98 = sphi 0, %s96
      %s99 = sphi 0, %s98
      %s113 = sphi 0, %s99
      %s117 = sphi 0, %s117
      %s119 = sphi 0, %s117
      %s120 = sphi 0, %s119
      %s134 = sphi 0, %s120
      %s138 = sphi 0, %s138
      %s140 = sphi 0, %s138
      %s141 = sphi 0, %s140
      %s155 = sphi 0, %s141
      %s159 = sphi 0, %s159
      %s161 = sphi 0, %s159
      %s162 = sphi 0, %s161
      %s176 = sphi 0, %s162
      %s180 = sphi 0, %s180
      %s182 = sphi 0, %s180
      %s183 = sphi 0, %s182
      %s197 = sphi 0, %s183
      %s201 = sphi 0, %s201
      %s203 = sphi 0, %s201
      %s204 = sphi 0, %s203
      %s218 = sphi 0, %s204
      %s222 = sphi 0, %s222
      %s224 = sphi 0, %s222
      %s225 = sphi 0, %s224
      %s239 = sphi 0, %s225
      %s243 = sphi 0, %s243
      %s245 = sphi 0, %s243
      %s246 = sphi 0, %s245
      %s260 = sphi 0, %s246
      %s266 = sphi 0, %s268
      %s269 = sphi 0, %s266
      %s270 = sphi 0, %s269
      %s286 = sphi 0, %s270
    $region4: #{simple_cnn_forward.1} parent=1 // loop_header_branch
      %23 = sbr.rel (%p21) target = $region8
    $region5: #{simple_cnn_forward.1} parent=1 // loop_body
      %s25 = ssub.s32 %s20, 1
      %s26 = ssub.s32 %s20, 2
      %s27 = sadd.s32 %s20, 1
      %s28 = ssub.s32 %s20, %s27
      %p29 = scmp.eq.s32.totalorder %s28, 0
      %s31 = sadd.s32 %s30, 1
      %s32 = scalar_select %p29, %s30, %s31
      %p35 = pneg %p29
      %p36 = scmp.eq.s32.totalorder %s20, 1
      %p37 = por %p35, %p36
      %p38 = scmp.ne.s32.totalorder %s30, %s33
      %p39 = scmp.eq.s32.totalorder %s20, 0
      %p40 = por %p38, %p39
      %p41 = scmp.ne.s32.totalorder %s30, %s33
      %p42 = scmp.eq.s32.totalorder %s25, 1
      %p43 = por %p41, %p42
      %p44 = scmp.ne.s32.totalorder %s33, %s34
      %p45 = scmp.eq.s32.totalorder %s25, 0
      %p46 = por %p44, %p45
      %p47 = scmp.ne.s32.totalorder %s33, %s34
      %p48 = scmp.eq.s32.totalorder %s26, 1
      %p49 = por %p47, %p48
      %p51 = scmp.ne.s32.totalorder %s34, %s50
      %p52 = scmp.eq.s32.totalorder %s26, 0
      %p53 = por %p51, %p52
      %s55 = sadd.s32 %s54, 1
      %p58 = scmp.eq.s32.totalorder %s20, 1
      %p59 = scmp.ne.s32.totalorder %s54, %s56
      %p60 = scmp.eq.s32.totalorder %s20, 0
      %p61 = por %p59, %p60
      %p62 = scmp.ne.s32.totalorder %s54, %s56
      %p63 = scmp.eq.s32.totalorder %s25, 1
      %p64 = por %p62, %p63
      %p65 = scmp.ne.s32.totalorder %s56, %s57
      %p66 = scmp.eq.s32.totalorder %s25, 0
      %p67 = por %p65, %p66
      %p68 = scmp.ne.s32.totalorder %s56, %s57
      %p69 = scmp.eq.s32.totalorder %s26, 1
      %p70 = por %p68, %p69
      %p72 = scmp.ne.s32.totalorder %s57, %s71
      %p73 = scmp.eq.s32.totalorder %s26, 0
      %p74 = por %p72, %p73
      %s76 = sadd.s32 %s75, 1
      %p79 = scmp.eq.s32.totalorder %s20, 1
      %p80 = scmp.ne.s32.totalorder %s75, %s77
      %p81 = scmp.eq.s32.totalorder %s20, 0
      %p82 = por %p80, %p81
      %p83 = scmp.ne.s32.totalorder %s75, %s77
      %p84 = scmp.eq.s32.totalorder %s25, 1
      %p85 = por %p83, %p84
      %p86 = scmp.ne.s32.totalorder %s77, %s78
      %p87 = scmp.eq.s32.totalorder %s25, 0
      %p88 = por %p86, %p87
      %p89 = scmp.ne.s32.totalorder %s77, %s78
      %p90 = scmp.eq.s32.totalorder %s26, 1
      %p91 = por %p89, %p90
      %p93 = scmp.ne.s32.totalorder %s78, %s92
      %p94 = scmp.eq.s32.totalorder %s26, 0
      %p95 = por %p93, %p94
      %s97 = sadd.s32 %s96, 1
      %p100 = scmp.eq.s32.totalorder %s20, 1
      %p101 = scmp.ne.s32.totalorder %s96, %s98
      %p102 = scmp.eq.s32.totalorder %s20, 0
      %p103 = por %p101, %p102
      %p104 = scmp.ne.s32.totalorder %s96, %s98
      %p105 = scmp.eq.s32.totalorder %s25, 1
      %p106 = por %p104, %p105
      %p107 = scmp.ne.s32.totalorder %s98, %s99
      %p108 = scmp.eq.s32.totalorder %s25, 0
      %p109 = por %p107, %p108
      %p110 = scmp.ne.s32.totalorder %s98, %s99
      %p111 = scmp.eq.s32.totalorder %s26, 1
      %p112 = por %p110, %p111
      %p114 = scmp.ne.s32.totalorder %s99, %s113
      %p115 = scmp.eq.s32.totalorder %s26, 0
      %p116 = por %p114, %p115
      %s118 = sadd.s32 %s117, 1
      %p121 = scmp.eq.s32.totalorder %s20, 1
      %p122 = scmp.ne.s32.totalorder %s117, %s119
      %p123 = scmp.eq.s32.totalorder %s20, 0
      %p124 = por %p122, %p123
      %p125 = scmp.ne.s32.totalorder %s117, %s119
      %p126 = scmp.eq.s32.totalorder %s25, 1
      %p127 = por %p125, %p126
      %p128 = scmp.ne.s32.totalorder %s119, %s120
      %p129 = scmp.eq.s32.totalorder %s25, 0
      %p130 = por %p128, %p129
      %p131 = scmp.ne.s32.totalorder %s119, %s120
      %p132 = scmp.eq.s32.totalorder %s26, 1
      %p133 = por %p131, %p132
      %p135 = scmp.ne.s32.totalorder %s120, %s134
      %p136 = scmp.eq.s32.totalorder %s26, 0
      %p137 = por %p135, %p136
      %s139 = sadd.s32 %s138, 1
      %p142 = scmp.eq.s32.totalorder %s20, 1
      %p143 = scmp.ne.s32.totalorder %s138, %s140
      %p144 = scmp.eq.s32.totalorder %s20, 0
      %p145 = por %p143, %p144
      %p146 = scmp.ne.s32.totalorder %s138, %s140
      %p147 = scmp.eq.s32.totalorder %s25, 1
      %p148 = por %p146, %p147
      %p149 = scmp.ne.s32.totalorder %s140, %s141
      %p150 = scmp.eq.s32.totalorder %s25, 0
      %p151 = por %p149, %p150
      %p152 = scmp.ne.s32.totalorder %s140, %s141
      %p153 = scmp.eq.s32.totalorder %s26, 1
      %p154 = por %p152, %p153
      %p156 = scmp.ne.s32.totalorder %s141, %s155
      %p157 = scmp.eq.s32.totalorder %s26, 0
      %p158 = por %p156, %p157
      %s160 = sadd.s32 %s159, 1
      %p163 = scmp.eq.s32.totalorder %s20, 1
      %p164 = scmp.ne.s32.totalorder %s159, %s161
      %p165 = scmp.eq.s32.totalorder %s20, 0
      %p166 = por %p164, %p165
      %p167 = scmp.ne.s32.totalorder %s159, %s161
      %p168 = scmp.eq.s32.totalorder %s25, 1
      %p169 = por %p167, %p168
      %p170 = scmp.ne.s32.totalorder %s161, %s162
      %p171 = scmp.eq.s32.totalorder %s25, 0
      %p172 = por %p170, %p171
      %p173 = scmp.ne.s32.totalorder %s161, %s162
      %p174 = scmp.eq.s32.totalorder %s26, 1
      %p175 = por %p173, %p174
      %p177 = scmp.ne.s32.totalorder %s162, %s176
      %p178 = scmp.eq.s32.totalorder %s26, 0
      %p179 = por %p177, %p178
      %s181 = sadd.s32 %s180, 1
      %p184 = scmp.eq.s32.totalorder %s20, 1
      %p185 = scmp.ne.s32.totalorder %s180, %s182
      %p186 = scmp.eq.s32.totalorder %s20, 0
      %p187 = por %p185, %p186
      %p188 = scmp.ne.s32.totalorder %s180, %s182
      %p189 = scmp.eq.s32.totalorder %s25, 1
      %p190 = por %p188, %p189
      %p191 = scmp.ne.s32.totalorder %s182, %s183
      %p192 = scmp.eq.s32.totalorder %s25, 0
      %p193 = por %p191, %p192
      %p194 = scmp.ne.s32.totalorder %s182, %s183
      %p195 = scmp.eq.s32.totalorder %s26, 1
      %p196 = por %p194, %p195
      %p198 = scmp.ne.s32.totalorder %s183, %s197
      %p199 = scmp.eq.s32.totalorder %s26, 0
      %p200 = por %p198, %p199
      %s202 = sadd.s32 %s201, 1
      %p205 = scmp.eq.s32.totalorder %s20, 1
      %p206 = scmp.ne.s32.totalorder %s201, %s203
      %p207 = scmp.eq.s32.totalorder %s20, 0
      %p208 = por %p206, %p207
      %p209 = scmp.ne.s32.totalorder %s201, %s203
      %p210 = scmp.eq.s32.totalorder %s25, 1
      %p211 = por %p209, %p210
      %p212 = scmp.ne.s32.totalorder %s203, %s204
      %p213 = scmp.eq.s32.totalorder %s25, 0
      %p214 = por %p212, %p213
      %p215 = scmp.ne.s32.totalorder %s203, %s204
      %p216 = scmp.eq.s32.totalorder %s26, 1
      %p217 = por %p215, %p216
      %p219 = scmp.ne.s32.totalorder %s204, %s218
      %p220 = scmp.eq.s32.totalorder %s26, 0
      %p221 = por %p219, %p220
      %s223 = sadd.s32 %s222, 1
      %p226 = scmp.eq.s32.totalorder %s20, 1
      %p227 = scmp.ne.s32.totalorder %s222, %s224
      %p228 = scmp.eq.s32.totalorder %s20, 0
      %p229 = por %p227, %p228
      %p230 = scmp.ne.s32.totalorder %s222, %s224
      %p231 = scmp.eq.s32.totalorder %s25, 1
      %p232 = por %p230, %p231
      %p233 = scmp.ne.s32.totalorder %s224, %s225
      %p234 = scmp.eq.s32.totalorder %s25, 0
      %p235 = por %p233, %p234
      %p236 = scmp.ne.s32.totalorder %s224, %s225
      %p237 = scmp.eq.s32.totalorder %s26, 1
      %p238 = por %p236, %p237
      %p240 = scmp.ne.s32.totalorder %s225, %s239
      %p241 = scmp.eq.s32.totalorder %s26, 0
      %p242 = por %p240, %p241
      %s244 = sadd.s32 %s243, 1
      %p247 = scmp.eq.s32.totalorder %s20, 1
      %p248 = scmp.ne.s32.totalorder %s243, %s245
      %p249 = scmp.eq.s32.totalorder %s20, 0
      %p250 = por %p248, %p249
      %p251 = scmp.ne.s32.totalorder %s243, %s245
      %p252 = scmp.eq.s32.totalorder %s25, 1
      %p253 = por %p251, %p252
      %p254 = scmp.ne.s32.totalorder %s245, %s246
      %p255 = scmp.eq.s32.totalorder %s25, 0
      %p256 = por %p254, %p255
      %p257 = scmp.ne.s32.totalorder %s245, %s246
      %p258 = scmp.eq.s32.totalorder %s26, 1
      %p259 = por %p257, %p258
      %p261 = scmp.ne.s32.totalorder %s246, %s260
      %p262 = scmp.eq.s32.totalorder %s26, 0
      %p263 = por %p261, %p262
      %s264 = ssub.s32 %s20, %s27
      %p265 = scmp.eq.s32.totalorder %s264, 0
      %s267 = sadd.s32 %s266, 1
      %s268 = scalar_select %p265, %s266, %s267
      %p271 = pneg %p265
      %p272 = scmp.eq.s32.totalorder %s20, 1
      %p273 = por %p271, %p272
      %p274 = scmp.ne.s32.totalorder %s266, %s269
      %p275 = scmp.eq.s32.totalorder %s20, 0
      %p276 = por %p274, %p275
      %p277 = scmp.ne.s32.totalorder %s266, %s269
      %p278 = scmp.eq.s32.totalorder %s25, 1
      %p279 = por %p277, %p278
      %p280 = scmp.ne.s32.totalorder %s269, %s270
      %p281 = scmp.eq.s32.totalorder %s25, 0
      %p282 = por %p280, %p281
      %p283 = scmp.ne.s32.totalorder %s269, %s270
      %p284 = scmp.eq.s32.totalorder %s26, 1
      %p285 = por %p283, %p284
      %p287 = scmp.ne.s32.totalorder %s270, %s286
      %p288 = scmp.eq.s32.totalorder %s26, 0
      %p289 = por %p287, %p288
      %p290 = scmp.le.s32.totalorder 1, %s20
      %p291 = scmp.lt.s32.totalorder %s20, 3
      %p292 = pnand %p290, %p291
      %p293 = pneg %p292
      // Predicated region
      $region9: #{simple_cnn_forward.1} parent=5 // pred_check
        _
      $region10: #{simple_cnn_forward.1} parent=5 // pred_check_branch
        %295 = sbr.rel (%p292) target = $region12
      $region11: #{simple_cnn_forward.1} parent=5 // pred_region
        %s296 = ssub.s32 %s20, 1
        // Predicated region
        $region13: #{simple_cnn_forward.1} parent=11 // pred_check
          %p297 = pneg %p67
        $region14: #{simple_cnn_forward.1} parent=11 // pred_check_branch
          %299 = sbr.rel (%p297) target = $region16
        $region15: #{simple_cnn_forward.1} parent=11 // pred_region
          _
        $region16: #{simple_cnn_forward.1} parent=11 // pred_fallthru
          _
        // Predicated region
        $region17: #{simple_cnn_forward.1} parent=11 // pred_check
          %p300 = pneg %p88
        $region18: #{simple_cnn_forward.1} parent=11 // pred_check_branch
          %302 = sbr.rel (%p300) target = $region20
        $region19: #{simple_cnn_forward.1} parent=11 // pred_region
          _
        $region20: #{simple_cnn_forward.1} parent=11 // pred_fallthru
          _
        // Predicated region
        $region21: #{simple_cnn_forward.1} parent=11 // pred_check
          %p303 = pneg %p109
        $region22: #{simple_cnn_forward.1} parent=11 // pred_check_branch
          %305 = sbr.rel (%p303) target = $region24
        $region23: #{simple_cnn_forward.1} parent=11 // pred_region
          _
        $region24: #{simple_cnn_forward.1} parent=11 // pred_fallthru
          _
        // Predicated region
        $region25: #{simple_cnn_forward.1} parent=11 // pred_check
          %p306 = pneg %p130
        $region26: #{simple_cnn_forward.1} parent=11 // pred_check_branch
          %308 = sbr.rel (%p306) target = $region28
        $region27: #{simple_cnn_forward.1} parent=11 // pred_region
          _
        $region28: #{simple_cnn_forward.1} parent=11 // pred_fallthru
          _
        // Predicated region
        $region29: #{simple_cnn_forward.1} parent=11 // pred_check
          %p309 = pneg %p151
        $region30: #{simple_cnn_forward.1} parent=11 // pred_check_branch
          %311 = sbr.rel (%p309) target = $region32
        $region31: #{simple_cnn_forward.1} parent=11 // pred_region
          _
        $region32: #{simple_cnn_forward.1} parent=11 // pred_fallthru
          _
        // Predicated region
        $region33: #{simple_cnn_forward.1} parent=11 // pred_check
          %p312 = pneg %p172
        $region34: #{simple_cnn_forward.1} parent=11 // pred_check_branch
          %314 = sbr.rel (%p312) target = $region36
        $region35: #{simple_cnn_forward.1} parent=11 // pred_region
          _
        $region36: #{simple_cnn_forward.1} parent=11 // pred_fallthru
          _
        // Predicated region
        $region37: #{simple_cnn_forward.1} parent=11 // pred_check
          %p315 = pneg %p193
        $region38: #{simple_cnn_forward.1} parent=11 // pred_check_branch
          %317 = sbr.rel (%p315) target = $region40
        $region39: #{simple_cnn_forward.1} parent=11 // pred_region
          _
        $region40: #{simple_cnn_forward.1} parent=11 // pred_fallthru
          _
        // Predicated region
        $region41: #{simple_cnn_forward.1} parent=11 // pred_check
          %p318 = pneg %p214
        $region42: #{simple_cnn_forward.1} parent=11 // pred_check_branch
          %320 = sbr.rel (%p318) target = $region44
        $region43: #{simple_cnn_forward.1} parent=11 // pred_region
          _
        $region44: #{simple_cnn_forward.1} parent=11 // pred_fallthru
          _
        // Predicated region
        $region45: #{simple_cnn_forward.1} parent=11 // pred_check
          %p321 = pneg %p235
        $region46: #{simple_cnn_forward.1} parent=11 // pred_check_branch
          %323 = sbr.rel (%p321) target = $region48
        $region47: #{simple_cnn_forward.1} parent=11 // pred_region
          _
        $region48: #{simple_cnn_forward.1} parent=11 // pred_fallthru
          _
        // Predicated region
        $region49: #{simple_cnn_forward.1} parent=11 // pred_check
          %p324 = pneg %p256
        $region50: #{simple_cnn_forward.1} parent=11 // pred_check_branch
          %326 = sbr.rel (%p324) target = $region52
        $region51: #{simple_cnn_forward.1} parent=11 // pred_region
          _
        $region52: #{simple_cnn_forward.1} parent=11 // pred_fallthru
          _
      $region12: #{simple_cnn_forward.1} parent=5 // pred_fallthru
        _
      %p327 = scmp.lt.s32.totalorder %s20, 2
      // Predicated region
      $region53: #{simple_cnn_forward.1} parent=5 // pred_check
        %p328 = pneg %p327
      $region54: #{simple_cnn_forward.1} parent=5 // pred_check_branch
        %330 = sbr.rel (%p328) target = $region56
      $region55: #{simple_cnn_forward.1} parent=5 // pred_region
        // Predicated region
        $region57: #{simple_cnn_forward.1} parent=55 // pred_check
          %p331 = pneg %p40
        $region58: #{simple_cnn_forward.1} parent=55 // pred_check_branch
          %333 = sbr.rel (%p331) target = $region60
        $region59: #{simple_cnn_forward.1} parent=55 // pred_region
          %p334 = scmp.lt.s32.totalorder %s20, 1
          %s335 = scalar_select %p334, %s20, 1
          %s336 = smul.addr %s335, 7
          %s337 = scalar_lea.vmem %s0, %s336
        $region60: #{simple_cnn_forward.1} parent=55 // pred_fallthru
          _
      $region56: #{simple_cnn_forward.1} parent=5 // pred_fallthru
        _
      %p338 = scmp.le.s32.totalorder 1, %s20
      %p339 = scmp.lt.s32.totalorder %s20, 3
      %p340 = pnand %p338, %p339
      %p341 = pneg %p340
      // Predicated region
      $region61: #{simple_cnn_forward.1} parent=5 // pred_check
        _
      $region62: #{simple_cnn_forward.1} parent=5 // pred_check_branch
        %343 = sbr.rel (%p340) target = $region64
      $region63: #{simple_cnn_forward.1} parent=5 // pred_region
        %s344 = ssub.s32 %s20, 1
        %p345 = scmp.lt.s32.totalorder %s25, 1
        %s346 = scalar_select %p345, %s25, 1
        %s347 = smul.addr %s346, 7
        %s348 = scalar_lea.vmem %s0, %s347
        %p349 = pneg %p46
        %p350 = pneg %p43
        %p351 = pneg %p67
        %p352 = pneg %p64
        %p353 = pneg %p88
        %p354 = pneg %p85
        %p355 = pneg %p109
        %p356 = pneg %p106
        %p357 = pneg %p130
        %p358 = pneg %p127
        %p359 = pneg %p151
        %p360 = pneg %p148
        %p361 = pneg %p172
        %p362 = pneg %p169
        %p363 = pneg %p193
        %p364 = pneg %p190
        %p365 = pneg %p214
        %p366 = pneg %p211
        %p367 = pneg %p235
        %p368 = pneg %p232
        %p369 = pneg %p256
        %p370 = pneg %p253
        %p371 = pneg %p282
        %p372 = pneg %p279
        %s373 = sand.u32 %s269, 1
        %s374 = scalar_lea.sflag [#allocation3], %s373
        %s375 = sand.u32 %s269, 1
        %s376 = scalar_lea.vmem [#allocation2], %s375
        %p377 = scmp.lt.s32.totalorder %s25, 1
        %s378 = scalar_select %p377, %s25, 1
        %s379 = smul.addr %s378, 7
        %s380 = scalar_lea.vmem %s0, %s379
        %v382 = vld [vmem:[%s1] sm:$0xff]
        %v383 = vld [vmem:[%s1 + $0x8] sm:$0xff]
        %v384 = vld [vmem:[%s1 + $0x10] sm:$0xff]
        %v385 = vld [vmem:[%s1 + $0x18] sm:$0xff]
        %v386 = vld [vmem:[%s2] sm:$0xff]
        %v387 = vld [vmem:[%s2 + $0x8] sm:$0xff]
        %v388 = vld [vmem:[%s2 + $0x10] sm:$0xff]
        %v389 = vld [vmem:[%s2 + $0x18] sm:$0xff]
        %v390 = vld [vmem:[%s3] sm:$0xff]
        %v391 = vld [vmem:[%s3 + $0x8] sm:$0xf]
        %v392 = vld [vmem:[%s3 + $0xc] sm:$0xff]
        %v393 = vld [vmem:[%s3 + $0x14] sm:$0xf]
        %v394 = vld [vmem:[%s3 + $0x18] sm:$0xff]
        %v395 = vld [vmem:[%s3 + $0x20] sm:$0xf]
        %v396 = vld [vmem:[%s3 + $0x24] sm:$0xff]
        %v397 = vld [vmem:[%s3 + $0x2c] sm:$0xf]
        %v398 = vld [vmem:[%s3 + $0x30] sm:$0xff]
        %v399 = vld [vmem:[%s3 + $0x38] sm:$0xf]
        %v400 = vld [vmem:[%s3 + $0x3c] sm:$0xff]
        %v401 = vld [vmem:[%s3 + $0x44] sm:$0xf]
        %v402 = vld [vmem:[%s3 + $0x48] sm:$0xff]
        %v403 = vld [vmem:[%s3 + $0x50] sm:$0xf]
        %v404 = vld [vmem:[%s3 + $0x54] sm:$0xff]
        %v405 = vld [vmem:[%s3 + $0x5c] sm:$0xf]
        %v406 = vld [vmem:[%s4] sm:$0xff]
        %v407 = vld [vmem:[%s4 + $0x8] sm:$0xff]
        %v408 = vld [vmem:[%s4 + $0x10] sm:$0xff]
        %v409 = vld [vmem:[%s4 + $0x18] sm:$0xff]
        %v410 = vld [vmem:[%s4 + $0x20] sm:$0xff]
        %v411 = vld [vmem:[%s4 + $0x28] sm:$0xff]
        %v412 = vld [vmem:[%s4 + $0x30] sm:$0xff]
        %v413 = vld [vmem:[%s4 + $0x38] sm:$0xff]
        %v414 = vld [vmem:[%s5] sm:$0xff]
        %v415 = vld [vmem:[%s5 + $0x8] sm:$0xff]
        %v416 = vld [vmem:[%s5 + $0x10] sm:$0xff]
        %v417 = vld [vmem:[%s5 + $0x18] sm:$0xff]
        %v418 = vld [vmem:[%s5 + $0x20] sm:$0xff]
        %v419 = vld [vmem:[%s5 + $0x28] sm:$0xff]
        %v420 = vld [vmem:[%s5 + $0x30] sm:$0xff]
        %v421 = vld [vmem:[%s5 + $0x38] sm:$0xff]
        %v422 = vld [vmem:[%s5 + $0x40] sm:$0xff]
        %v423 = vld [vmem:[%s5 + $0x48] sm:$0xff]
        %v424 = vld [vmem:[%s5 + $0x50] sm:$0xff]
        %v425 = vld [vmem:[%s5 + $0x58] sm:$0xff]
        %v426 = vld [vmem:[%s5 + $0x60] sm:$0xff]
        %v427 = vld [vmem:[%s5 + $0x68] sm:$0xff]
        %v428 = vld [vmem:[%s5 + $0x70] sm:$0xff]
        %v429 = vld [vmem:[%s5 + $0x78] sm:$0xff]
        %v430 = vld [vmem:[%s5 + $0x80] sm:$0xff]
        %v431 = vld [vmem:[%s5 + $0x88] sm:$0xff]
        %v432 = vld [vmem:[%s5 + $0x90] sm:$0xff]
        %v433 = vld [vmem:[%s5 + $0x98] sm:$0xff]
        %v434 = vld [vmem:[%s5 + $0xa0] sm:$0xff]
        %v435 = vld [vmem:[%s5 + $0xa8] sm:$0xff]
        %v436 = vld [vmem:[%s5 + $0xb0] sm:$0xff]
        %v437 = vld [vmem:[%s5 + $0xb8] sm:$0xff]
        %v438 = vld [vmem:[%s5 + $0xc0] sm:$0xff]
        %v439 = vld [vmem:[%s5 + $0xc8] sm:$0xff]
        %v440 = vld [vmem:[%s5 + $0xd0] sm:$0xff]
        %v441 = vld [vmem:[%s5 + $0xd8] sm:$0xff]
        %v442 = vld [vmem:[%s5 + $0xe0] sm:$0xff]
        %v443 = vld [vmem:[%s5 + $0xe8] sm:$0xff]
        %v444 = vld [vmem:[%s5 + $0xf0] sm:$0xff]
        %v445 = vld [vmem:[%s5 + $0xf8] sm:$0xff]
        %v446 = vld [vmem:[%s5 + $0x100] sm:$0xff]
        %v447 = vld [vmem:[%s5 + $0x108] sm:$0xff]
        %v448 = vld [vmem:[%s5 + $0x110] sm:$0xff]
        %v449 = vld [vmem:[%s5 + $0x118] sm:$0xff]
        %v450 = vld [vmem:[%s5 + $0x120] sm:$0xff]
        %v451 = vld [vmem:[%s5 + $0x128] sm:$0xff]
        %v452 = vld [vmem:[%s5 + $0x130] sm:$0xff]
        %v453 = vld [vmem:[%s5 + $0x138] sm:$0xff]
        %v454 = vld [vmem:[%s5 + $0x140] sm:$0xff]
        %v455 = vld [vmem:[%s5 + $0x148] sm:$0xff]
        %v456 = vld [vmem:[%s5 + $0x150] sm:$0xff]
        %v457 = vld [vmem:[%s5 + $0x158] sm:$0xff]
        %v458 = vld [vmem:[%s5 + $0x160] sm:$0xff]
        %v459 = vld [vmem:[%s5 + $0x168] sm:$0xff]
        %v460 = vld [vmem:[%s5 + $0x170] sm:$0xff]
        %v461 = vld [vmem:[%s5 + $0x178] sm:$0xff]
        %v462 = vld [vmem:[%s5 + $0x180] sm:$0xff]
        %v463 = vld [vmem:[%s5 + $0x188] sm:$0xff]
        %v464 = vld [vmem:[%s5 + $0x190] sm:$0xff]
        %v465 = vld [vmem:[%s5 + $0x198] sm:$0xff]
        %v466 = vld [vmem:[%s5 + $0x1a0] sm:$0xff]
        %v467 = vld [vmem:[%s5 + $0x1a8] sm:$0xff]
        %v468 = vld [vmem:[%s5 + $0x1b0] sm:$0xff]
        %v469 = vld [vmem:[%s5 + $0x1b8] sm:$0xff]
        %v470 = vld [vmem:[%s5 + $0x1c0] sm:$0xff]
        %v471 = vld [vmem:[%s5 + $0x1c8] sm:$0xff]
        %v472 = vld [vmem:[%s5 + $0x1d0] sm:$0xff]
        %v473 = vld [vmem:[%s5 + $0x1d8] sm:$0xff]
        %v474 = vld [vmem:[%s5 + $0x1e0] sm:$0xff]
        %v475 = vld [vmem:[%s5 + $0x1e8] sm:$0xff]
        %v476 = vld [vmem:[%s5 + $0x1f0] sm:$0xff]
        %v477 = vld [vmem:[%s5 + $0x1f8] sm:$0xff]
        %v478 = vld [vmem:[%s5 + $0x200] sm:$0xff]
        %v479 = vld [vmem:[%s5 + $0x208] sm:$0xff]
        %v480 = vld [vmem:[%s5 + $0x210] sm:$0xff]
        %v481 = vld [vmem:[%s5 + $0x218] sm:$0xff]
        %v482 = vld [vmem:[%s5 + $0x220] sm:$0xff]
        %v483 = vld [vmem:[%s5 + $0x228] sm:$0xff]
        %v484 = vld [vmem:[%s5 + $0x230] sm:$0xff]
        %v485 = vld [vmem:[%s5 + $0x238] sm:$0xff]
        %v486 = vld [vmem:[%s5 + $0x240] sm:$0xff]
        %v487 = vld [vmem:[%s5 + $0x248] sm:$0xff]
        %v488 = vld [vmem:[%s5 + $0x250] sm:$0xff]
        %v489 = vld [vmem:[%s5 + $0x258] sm:$0xff]
        %v490 = vld [vmem:[%s5 + $0x260] sm:$0xff]
        %v491 = vld [vmem:[%s5 + $0x268] sm:$0xff]
        %v492 = vld [vmem:[%s5 + $0x270] sm:$0xff]
        %v493 = vld [vmem:[%s5 + $0x278] sm:$0xff]
        %v494 = vld [vmem:[%s5 + $0x280] sm:$0xff]
        %v495 = vld [vmem:[%s5 + $0x288] sm:$0xff]
        %v496 = vld [vmem:[%s5 + $0x290] sm:$0xff]
        %v497 = vld [vmem:[%s5 + $0x298] sm:$0xff]
        %v498 = vld [vmem:[%s5 + $0x2a0] sm:$0xff]
        %v499 = vld [vmem:[%s5 + $0x2a8] sm:$0xff]
        %v500 = vld [vmem:[%s5 + $0x2b0] sm:$0xff]
        %v501 = vld [vmem:[%s5 + $0x2b8] sm:$0x11]
        %v502 = vld [vmem:[%s6] sm:$0xf]
        %v503 = vld [vmem:[%s6 + $0x4] sm:$0xf]
        %v504 = vld [vmem:[%s6 + $0x8] sm:$0xf]
        %v505 = vld [vmem:[%s6 + $0xc] sm:$0xf]
        %v506 = vld [vmem:[%s6 + $0x10] sm:$0xf]
        %v507 = vld [vmem:[%s6 + $0x14] sm:$0xf]
        %v508 = vld [vmem:[%s6 + $0x18] sm:$0xf]
        %v509 = vld [vmem:[%s6 + $0x1c] sm:$0xf]
        %v510 = vld [vmem:[%s6 + $0x20] sm:$0xf]
        %v511 = vld [vmem:[%s6 + $0x24] sm:$0xf]
        %v512 = vld [vmem:[%s6 + $0x28] sm:$0xf]
        %v513 = vld [vmem:[%s6 + $0x2c] sm:$0xf]
        %v514 = vld [vmem:[%s6 + $0x30] sm:$0xf]
        %v515 = vld [vmem:[%s6 + $0x34] sm:$0xf]
        %v516 = vld [vmem:[%s6 + $0x38] sm:$0xf]
        %v517 = vld [vmem:[%s6 + $0x3c] sm:$0xf]
        %v518 = vld [vmem:[%s7] sm:$0xf]
        %v519 = vld [vmem:[%s7 + $0x4] sm:$0xf]
        %v520 = vld [vmem:[%s7 + $0x8] sm:$0xf]
        %v521 = vld [vmem:[%s7 + $0xc] sm:$0xf]
        %v522 = vld [vmem:[%s7 + $0x10] sm:$0xf]
        %v523 = vld [vmem:[%s7 + $0x14] sm:$0xf]
        %v524 = vld [vmem:[%s7 + $0x18] sm:$0xf]
        %v525 = vld [vmem:[%s7 + $0x1c] sm:$0xf]
        %v526 = vld [vmem:[%s7 + $0x20] sm:$0xf]
        %v527 = vld [vmem:[%s7 + $0x24] sm:$0xf]
        %v528 = vld [vmem:[%s7 + $0x28] sm:$0xf]
        %v529 = vld [vmem:[%s7 + $0x2c] sm:$0xf]
        %v530 = vld [vmem:[%s7 + $0x30] sm:$0xf]
        %v531 = vld [vmem:[%s7 + $0x34] sm:$0xf]
        %v532 = vld [vmem:[%s7 + $0x38] sm:$0xf]
        %v533 = vld [vmem:[%s7 + $0x3c] sm:$0xf]
        %v534 = vld [vmem:[%s7 + $0x40] sm:$0xf]
        %v535 = vld [vmem:[%s7 + $0x44] sm:$0xf]
        %v536 = vld [vmem:[%s7 + $0x48] sm:$0xf]
        %v537 = vld [vmem:[%s7 + $0x4c] sm:$0xf]
        %v538 = vld [vmem:[%s7 + $0x50] sm:$0xf]
        %v539 = vld [vmem:[%s7 + $0x54] sm:$0xf]
        %v540 = vld [vmem:[%s7 + $0x58] sm:$0xf]
        %v541 = vld [vmem:[%s7 + $0x5c] sm:$0xf]
        %v542 = vld [vmem:[%s7 + $0x60] sm:$0xf]
        %v543 = vld [vmem:[%s7 + $0x64] sm:$0xf]
        %v544 = vld [vmem:[%s7 + $0x68] sm:$0xf]
        %v545 = vld [vmem:[%s7 + $0x6c] sm:$0xf]
        %v546 = vld [vmem:[%s7 + $0x70] sm:$0xf]
        %v547 = vld [vmem:[%s7 + $0x74] sm:$0xf]
        %v548 = vld [vmem:[%s7 + $0x78] sm:$0xf]
        %v549 = vld [vmem:[%s7 + $0x7c] sm:$0xf]
        %v550 = vld [vmem:[%s7 + $0x80] sm:$0xf]
        %v551 = vld [vmem:[%s7 + $0x84] sm:$0xf]
        %v552 = vld [vmem:[%s7 + $0x88] sm:$0xf]
        %v553 = vld [vmem:[%s7 + $0x8c] sm:$0xf]
        %v554 = vld [vmem:[%s7 + $0x90] sm:$0xf]
        %v555 = vld [vmem:[%s7 + $0x94] sm:$0xf]
        %v556 = vld [vmem:[%s7 + $0x98] sm:$0xf]
        %v557 = vld [vmem:[%s7 + $0x9c] sm:$0xf]
        %v558 = vld [vmem:[%s7 + $0xa0] sm:$0xf]
        %v559 = vld [vmem:[%s7 + $0xa4] sm:$0xf]
        %v560 = vld [vmem:[%s7 + $0xa8] sm:$0xf]
        %v561 = vld [vmem:[%s7 + $0xac] sm:$0xf]
        %v562 = vld [vmem:[%s7 + $0xb0] sm:$0xf]
        %v563 = vld [vmem:[%s7 + $0xb4] sm:$0xf]
        %v564 = vld [vmem:[%s7 + $0xb8] sm:$0xf]
        %v565 = vld [vmem:[%s7 + $0xbc] sm:$0xf]
        %v566 = vld [vmem:[%s7 + $0xc0] sm:$0xf]
        %v567 = vld [vmem:[%s7 + $0xc4] sm:$0xf]
        %v568 = vld [vmem:[%s7 + $0xc8] sm:$0xf]
        %v569 = vld [vmem:[%s7 + $0xcc] sm:$0xf]
        %v570 = vld [vmem:[%s7 + $0xd0] sm:$0xf]
        %v571 = vld [vmem:[%s7 + $0xd4] sm:$0xf]
        %v572 = vld [vmem:[%s7 + $0xd8] sm:$0xf]
        %v573 = vld [vmem:[%s7 + $0xdc] sm:$0xf]
        %v574 = vld [vmem:[%s7 + $0xe0] sm:$0xf]
        %v575 = vld [vmem:[%s7 + $0xe4] sm:$0xf]
        %v576 = vld [vmem:[%s7 + $0xe8] sm:$0xf]
        %v577 = vld [vmem:[%s7 + $0xec] sm:$0xf]
        %v578 = vld [vmem:[%s7 + $0xf0] sm:$0xf]
        %v579 = vld [vmem:[%s7 + $0xf4] sm:$0xf]
        %v580 = vld [vmem:[%s7 + $0xf8] sm:$0xf]
        %v581 = vld [vmem:[%s7 + $0xfc] sm:$0xf]
        %v582 = vld [vmem:[%s7 + $0x100] sm:$0xf]
        %v583 = vld [vmem:[%s7 + $0x104] sm:$0xf]
        %v584 = vld [vmem:[%s7 + $0x108] sm:$0xf]
        %v585 = vld [vmem:[%s7 + $0x10c] sm:$0xf]
        %v586 = vld [vmem:[%s7 + $0x110] sm:$0xf]
        %v587 = vld [vmem:[%s7 + $0x114] sm:$0xf]
        %v588 = vld [vmem:[%s7 + $0x118] sm:$0xf]
        %v589 = vld [vmem:[%s7 + $0x11c] sm:$0xf]
        %v590 = vld [vmem:[%s7 + $0x120] sm:$0xf]
        %v591 = vld [vmem:[%s7 + $0x124] sm:$0xf]
        %v592 = vld [vmem:[%s7 + $0x128] sm:$0xf]
        %v593 = vld [vmem:[%s7 + $0x12c] sm:$0xf]
        %v594 = vld [vmem:[%s7 + $0x130] sm:$0xf]
        %v595 = vld [vmem:[%s7 + $0x134] sm:$0xf]
        %v596 = vld [vmem:[%s7 + $0x138] sm:$0xf]
        %v597 = vld [vmem:[%s7 + $0x13c] sm:$0xf]
        %v598 = vld [vmem:[%s7 + $0x140] sm:$0xf]
        %v599 = vld [vmem:[%s7 + $0x144] sm:$0xf]
        %v600 = vld [vmem:[%s7 + $0x148] sm:$0xf]
        %v601 = vld [vmem:[%s7 + $0x14c] sm:$0xf]
        %v602 = vld [vmem:[%s7 + $0x150] sm:$0xf]
        %v603 = vld [vmem:[%s7 + $0x154] sm:$0xf]
        %v604 = vld [vmem:[%s7 + $0x158] sm:$0xf]
        %v605 = vld [vmem:[%s7 + $0x15c] sm:$0xf]
        %v606 = vld [vmem:[%s7 + $0x160] sm:$0xf]
        %v607 = vld [vmem:[%s7 + $0x164] sm:$0xf]
        %v608 = vld [vmem:[%s7 + $0x168] sm:$0xf]
        %v609 = vld [vmem:[%s7 + $0x16c] sm:$0xf]
        %v610 = vld [vmem:[%s7 + $0x170] sm:$0xf]
        %v611 = vld [vmem:[%s7 + $0x174] sm:$0xf]
        %v612 = vld [vmem:[%s7 + $0x178] sm:$0xf]
        %v613 = vld [vmem:[%s7 + $0x17c] sm:$0xf]
        %v614 = vld [vmem:[%s7 + $0x180] sm:$0xf]
        %v615 = vld [vmem:[%s7 + $0x184] sm:$0xf]
        %v616 = vld [vmem:[%s7 + $0x188] sm:$0xf]
        %v617 = vld [vmem:[%s7 + $0x18c] sm:$0xf]
        %v618 = vld [vmem:[%s7 + $0x190] sm:$0xf]
        %v619 = vld [vmem:[%s7 + $0x194] sm:$0xf]
        %v620 = vld [vmem:[%s7 + $0x198] sm:$0xf]
        %v621 = vld [vmem:[%s7 + $0x19c] sm:$0xf]
        %v622 = vld [vmem:[%s7 + $0x1a0] sm:$0xf]
        %v623 = vld [vmem:[%s7 + $0x1a4] sm:$0xf]
        %v624 = vld [vmem:[%s7 + $0x1a8] sm:$0xf]
        %v625 = vld [vmem:[%s7 + $0x1ac] sm:$0xf]
        %v626 = vld [vmem:[%s7 + $0x1b0] sm:$0xf]
        %v627 = vld [vmem:[%s7 + $0x1b4] sm:$0xf]
        %v628 = vld [vmem:[%s7 + $0x1b8] sm:$0xf]
        %v629 = vld [vmem:[%s7 + $0x1bc] sm:$0xf]
        %v630 = vld [vmem:[%s7 + $0x1c0] sm:$0xf]
        %v631 = vld [vmem:[%s7 + $0x1c4] sm:$0xf]
        %v632 = vld [vmem:[%s7 + $0x1c8] sm:$0xf]
        %v633 = vld [vmem:[%s7 + $0x1cc] sm:$0xf]
        %v634 = vld [vmem:[%s7 + $0x1d0] sm:$0xf]
        %v635 = vld [vmem:[%s7 + $0x1d4] sm:$0xf]
        %v636 = vld [vmem:[%s7 + $0x1d8] sm:$0xf]
        %v637 = vld [vmem:[%s7 + $0x1dc] sm:$0xf]
        %v638 = vld [vmem:[%s7 + $0x1e0] sm:$0xf]
        %v639 = vld [vmem:[%s7 + $0x1e4] sm:$0xf]
        %v640 = vld [vmem:[%s7 + $0x1e8] sm:$0xf]
        %v641 = vld [vmem:[%s7 + $0x1ec] sm:$0xf]
        %v642 = vld [vmem:[%s7 + $0x1f0] sm:$0xf]
        %v643 = vld [vmem:[%s7 + $0x1f4] sm:$0xf]
        %v644 = vld [vmem:[%s7 + $0x1f8] sm:$0xf]
        %v645 = vld [vmem:[%s7 + $0x1fc] sm:$0xf]
        %v646 = vld [vmem:[%s7 + $0x200] sm:$0xf]
        %v647 = vld [vmem:[%s7 + $0x204] sm:$0xf]
        %v648 = vld [vmem:[%s7 + $0x208] sm:$0xf]
        %v649 = vld [vmem:[%s7 + $0x20c] sm:$0xf]
        %v650 = vld [vmem:[%s7 + $0x210] sm:$0xf]
        %v651 = vld [vmem:[%s7 + $0x214] sm:$0xf]
        %v652 = vld [vmem:[%s7 + $0x218] sm:$0xf]
        %v653 = vld [vmem:[%s7 + $0x21c] sm:$0xf]
        %v654 = vld [vmem:[%s7 + $0x220] sm:$0xf]
        %v655 = vld [vmem:[%s7 + $0x224] sm:$0xf]
        %v656 = vld [vmem:[%s7 + $0x228] sm:$0xf]
        %v657 = vld [vmem:[%s7 + $0x22c] sm:$0xf]
        %v658 = vld [vmem:[%s7 + $0x230] sm:$0xf]
        %v659 = vld [vmem:[%s7 + $0x234] sm:$0xf]
        %v660 = vld [vmem:[%s7 + $0x238] sm:$0xf]
        %v661 = vld [vmem:[%s7 + $0x23c] sm:$0xf]
        %v662 = vld [vmem:[%s7 + $0x240] sm:$0xf]
        %v663 = vld [vmem:[%s7 + $0x244] sm:$0xf]
        %v664 = vld [vmem:[%s7 + $0x248] sm:$0xf]
        %v665 = vld [vmem:[%s7 + $0x24c] sm:$0xf]
        %v666 = vld [vmem:[%s7 + $0x250] sm:$0xf]
        %v667 = vld [vmem:[%s7 + $0x254] sm:$0xf]
        %v668 = vld [vmem:[%s7 + $0x258] sm:$0xf]
        %v669 = vld [vmem:[%s7 + $0x25c] sm:$0xf]
        %v670 = vld [vmem:[%s7 + $0x260] sm:$0xf]
        %v671 = vld [vmem:[%s7 + $0x264] sm:$0xf]
        %v672 = vld [vmem:[%s7 + $0x268] sm:$0xf]
        %v673 = vld [vmem:[%s7 + $0x26c] sm:$0xf]
        %v674 = vld [vmem:[%s7 + $0x270] sm:$0xf]
        %v675 = vld [vmem:[%s7 + $0x274] sm:$0xf]
        %v676 = vld [vmem:[%s7 + $0x278] sm:$0xf]
        %v677 = vld [vmem:[%s7 + $0x27c] sm:$0xf]
        %v678 = vld [vmem:[%s7 + $0x280] sm:$0xf]
        %v679 = vld [vmem:[%s7 + $0x284] sm:$0xf]
        %v680 = vld [vmem:[%s7 + $0x288] sm:$0xf]
        %v681 = vld [vmem:[%s7 + $0x28c] sm:$0xf]
        %v682 = vld [vmem:[%s7 + $0x290] sm:$0xf]
        %v683 = vld [vmem:[%s7 + $0x294] sm:$0xf]
        %v684 = vld [vmem:[%s7 + $0x298] sm:$0xf]
        %v685 = vld [vmem:[%s7 + $0x29c] sm:$0xf]
        %v686 = vld [vmem:[%s7 + $0x2a0] sm:$0xf]
        %v687 = vld [vmem:[%s7 + $0x2a4] sm:$0xf]
        %v688 = vld [vmem:[%s7 + $0x2a8] sm:$0xf]
        %v689 = vld [vmem:[%s7 + $0x2ac] sm:$0xf]
        %v690 = vld [vmem:[%s7 + $0x2b0] sm:$0xf]
        %v691 = vld [vmem:[%s7 + $0x2b4] sm:$0xf]
        %v692 = vld [vmem:[%s7 + $0x2b8] sm:$0xf]
        %v693 = vld [vmem:[%s7 + $0x2bc] sm:$0xf]
        %v694 = vld [vmem:[%s7 + $0x2c0] sm:$0xf]
        %v695 = vld [vmem:[%s7 + $0x2c4] sm:$0xf]
        %v696 = vld [vmem:[%s7 + $0x2c8] sm:$0xf]
        %v697 = vld [vmem:[%s7 + $0x2cc] sm:$0xf]
        %v698 = vld [vmem:[%s7 + $0x2d0] sm:$0xf]
        %v699 = vld [vmem:[%s7 + $0x2d4] sm:$0xf]
        %v700 = vld [vmem:[%s7 + $0x2d8] sm:$0xf]
        %v701 = vld [vmem:[%s7 + $0x2dc] sm:$0xf]
        %v702 = vld [vmem:[%s7 + $0x2e0] sm:$0xf]
        %v703 = vld [vmem:[%s7 + $0x2e4] sm:$0xf]
        %v704 = vld [vmem:[%s7 + $0x2e8] sm:$0xf]
        %v705 = vld [vmem:[%s7 + $0x2ec] sm:$0xf]
        %v706 = vld [vmem:[%s7 + $0x2f0] sm:$0xf]
        %v707 = vld [vmem:[%s7 + $0x2f4] sm:$0xf]
        %v708 = vld [vmem:[%s7 + $0x2f8] sm:$0xf]
        %v709 = vld [vmem:[%s7 + $0x2fc] sm:$0xf]
        %v710 = vld [vmem:[%s7 + $0x300] sm:$0xf]
        %v711 = vld [vmem:[%s7 + $0x304] sm:$0xf]
        %v712 = vld [vmem:[%s7 + $0x308] sm:$0xf]
        %v713 = vld [vmem:[%s7 + $0x30c] sm:$0xf]
        %v714 = vld [vmem:[%s7 + $0x310] sm:$0xf]
        %v715 = vld [vmem:[%s7 + $0x314] sm:$0xf]
        %v716 = vld [vmem:[%s7 + $0x318] sm:$0xf]
        %v717 = vld [vmem:[%s7 + $0x31c] sm:$0xf]
        %v718 = vld [vmem:[%s8] sm:$0x1]
        %v719 = vld [vmem:[%s9] sm:$0xf]
        %v720 = vld [vmem:[%s9 + $0x4] sm:$0xf]
        %v721 = vld [vmem:[%s9 + $0x8] sm:$0xf]
        %v722 = vld [vmem:[%s9 + $0xc] sm:$0xf]
        %v723 = vld [vmem:[%s9 + $0x10] sm:$0xf]
        %v724 = vld [vmem:[%s9 + $0x14] sm:$0xf]
        %v725 = vld [vmem:[%s9 + $0x18] sm:$0xf]
        %v726 = vld [vmem:[%s9 + $0x1c] sm:$0xf]
        %v727 = vld [vmem:[%s9 + $0x20] sm:$0xf]
        %v728 = vld [vmem:[%s9 + $0x24] sm:$0xf]
        %v729 = vld [vmem:[%s9 + $0x28] sm:$0xf]
        %v730 = vld [vmem:[%s9 + $0x2c] sm:$0xf]
        %v731 = vld [vmem:[%s9 + $0x30] sm:$0xf]
        %v732 = vld [vmem:[%s9 + $0x34] sm:$0xf]
        %v733 = vld [vmem:[%s9 + $0x38] sm:$0xf]
        %v734 = vld [vmem:[%s9 + $0x3c] sm:$0xf]
        %v735 = vld [vmem:[%s10] sm:$0x1]
        %v736 = vld [vmem:[%s380] sm:$0x7f]
        %738 = vset.pattern.permute.xlu0 0
        %739 = vperm.xlu0 %738, %v382
        %v740 = vpop.permute.xlu0 %739
        %743 = vset.pattern.permute.xlu0 0
        %744 = vperm.xlu0 %743, %v383
        %v745 = vpop.permute.xlu0 %744
        %748 = vset.pattern.permute.xlu0 0
        %749 = vperm.xlu0 %748, %v384
        %v750 = vpop.permute.xlu0 %749
        %753 = vset.pattern.permute.xlu0 0
        %754 = vperm.xlu0 %753, %v385
        %v755 = vpop.permute.xlu0 %754
        %v758 = vlaneseq
        %v759 = vshrl.u32 %v758, 7
        %v760 = vsub.s32 0, %v759
        %v761 = vrot.slane %v736, %v760
        %v762 = vlaneseq
        %v763 = vshrl.u32 %v762, 7
        %v764 = vsub.s32 1, %v763
        %v765 = vrot.slane %v736, %v764
        %v766 = vlaneseq
        %v767 = vshrl.u32 %v766, 7
        %v768 = vsub.s32 2, %v767
        %v769 = vrot.slane %v736, %v768
        %v770 = vlaneseq
        %v771 = vshrl.u32 %v770, 7
        %v772 = vsub.s32 3, %v771
        %v773 = vrot.slane %v736, %v772
        %v774 = vlaneseq
        %v775 = vshrl.u32 %v774, 7
        %v776 = vsub.s32 4, %v775
        %v777 = vrot.slane %v736, %v776
        %v778 = vlaneseq
        %v779 = vshrl.u32 %v778, 7
        %v780 = vsub.s32 5, %v779
        %v781 = vrot.slane %v736, %v780
        %v788 = vmul.f32 %v740, %v761
        %v789 = vmul.f32 %v740, %v765
        %v790 = vmul.f32 %v740, %v769
        %v791 = vmul.f32 %v740, %v773
        %v792 = vmul.f32 %v740, %v777
        %v793 = vmul.f32 %v740, %v781
        %v794 = vmul.f32 %v745, %v761
        %v795 = vmul.f32 %v745, %v765
        %v796 = vmul.f32 %v745, %v769
        %v797 = vmul.f32 %v745, %v773
        %v798 = vmul.f32 %v745, %v777
        %v799 = vmul.f32 %v745, %v781
        %v800 = vmul.f32 %v750, %v761
        %v801 = vmul.f32 %v750, %v765
        %v802 = vmul.f32 %v750, %v769
        %v803 = vmul.f32 %v750, %v773
        %v804 = vmul.f32 %v750, %v777
        %v805 = vmul.f32 %v750, %v781
        %v806 = vmul.f32 %v755, %v761
        %v807 = vmul.f32 %v755, %v765
        %v808 = vmul.f32 %v755, %v769
        %v809 = vmul.f32 %v755, %v773
        %v810 = vmul.f32 %v755, %v777
        %v811 = vmul.f32 %v755, %v781
        %v812 = vadd.f32 %v788, 0.0
        %v813 = vadd.f32 %v789, 0.0
        %v814 = vadd.f32 %v790, 0.0
        %v815 = vadd.f32 %v791, 0.0
        %v816 = vadd.f32 %v792, 0.0
        %v817 = vadd.f32 %v793, 0.0
        %v818 = vadd.f32 %v794, 0.0
        %v819 = vadd.f32 %v795, 0.0
        %v820 = vadd.f32 %v796, 0.0
        %v821 = vadd.f32 %v797, 0.0
        %v822 = vadd.f32 %v798, 0.0
        %v823 = vadd.f32 %v799, 0.0
        %v824 = vadd.f32 %v800, 0.0
        %v825 = vadd.f32 %v801, 0.0
        %v826 = vadd.f32 %v802, 0.0
        %v827 = vadd.f32 %v803, 0.0
        %v828 = vadd.f32 %v804, 0.0
        %v829 = vadd.f32 %v805, 0.0
        %v830 = vadd.f32 %v806, 0.0
        %v831 = vadd.f32 %v807, 0.0
        %v832 = vadd.f32 %v808, 0.0
        %v833 = vadd.f32 %v809, 0.0
        %v834 = vadd.f32 %v810, 0.0
        %v835 = vadd.f32 %v811, 0.0
        %836 = vset.pattern.permute.xlu0 1
        %837 = vperm.xlu0 %836, %v382
        %v838 = vpop.permute.xlu0 %837
        %840 = vset.pattern.permute.xlu0 1
        %841 = vperm.xlu0 %840, %v383
        %v842 = vpop.permute.xlu0 %841
        %844 = vset.pattern.permute.xlu0 1
        %845 = vperm.xlu0 %844, %v384
        %v846 = vpop.permute.xlu0 %845
        %848 = vset.pattern.permute.xlu0 1
        %849 = vperm.xlu0 %848, %v385
        %v850 = vpop.permute.xlu0 %849
        %v852 = vmul.f32 %v838, %v761
        %v853 = vmul.f32 %v838, %v765
        %v854 = vmul.f32 %v838, %v769
        %v855 = vmul.f32 %v838, %v773
        %v856 = vmul.f32 %v838, %v777
        %v857 = vmul.f32 %v838, %v781
        %v858 = vmul.f32 %v842, %v761
        %v859 = vmul.f32 %v842, %v765
        %v860 = vmul.f32 %v842, %v769
        %v861 = vmul.f32 %v842, %v773
        %v862 = vmul.f32 %v842, %v777
        %v863 = vmul.f32 %v842, %v781
        %v864 = vmul.f32 %v846, %v761
        %v865 = vmul.f32 %v846, %v765
        %v866 = vmul.f32 %v846, %v769
        %v867 = vmul.f32 %v846, %v773
        %v868 = vmul.f32 %v846, %v777
        %v869 = vmul.f32 %v846, %v781
        %v870 = vmul.f32 %v850, %v761
        %v871 = vmul.f32 %v850, %v765
        %v872 = vmul.f32 %v850, %v769
        %v873 = vmul.f32 %v850, %v773
        %v874 = vmul.f32 %v850, %v777
        %v875 = vmul.f32 %v850, %v781
        %900 = vrot.lane.b32.xlu0 %v852, 127
        %v901 = vpop.permute.xlu0 %900
        %902 = vrot.lane.b32.xlu0 %v853, 127
        %v903 = vpop.permute.xlu0 %902
        %904 = vrot.lane.b32.xlu0 %v854, 127
        %v905 = vpop.permute.xlu0 %904
        %906 = vrot.lane.b32.xlu0 %v855, 127
        %v907 = vpop.permute.xlu0 %906
        %908 = vrot.lane.b32.xlu0 %v856, 127
        %v909 = vpop.permute.xlu0 %908
        %910 = vrot.lane.b32.xlu0 %v857, 127
        %v911 = vpop.permute.xlu0 %910
        %912 = vrot.lane.b32.xlu0 %v858, 127
        %v913 = vpop.permute.xlu0 %912
        %914 = vrot.lane.b32.xlu0 %v859, 127
        %v915 = vpop.permute.xlu0 %914
        %916 = vrot.lane.b32.xlu0 %v860, 127
        %v917 = vpop.permute.xlu0 %916
        %918 = vrot.lane.b32.xlu0 %v861, 127
        %v919 = vpop.permute.xlu0 %918
        %920 = vrot.lane.b32.xlu0 %v862, 127
        %v921 = vpop.permute.xlu0 %920
        %922 = vrot.lane.b32.xlu0 %v863, 127
        %v923 = vpop.permute.xlu0 %922
        %924 = vrot.lane.b32.xlu0 %v864, 127
        %v925 = vpop.permute.xlu0 %924
        %926 = vrot.lane.b32.xlu0 %v865, 127
        %v927 = vpop.permute.xlu0 %926
        %928 = vrot.lane.b32.xlu0 %v866, 127
        %v929 = vpop.permute.xlu0 %928
        %930 = vrot.lane.b32.xlu0 %v867, 127
        %v931 = vpop.permute.xlu0 %930
        %932 = vrot.lane.b32.xlu0 %v868, 127
        %v933 = vpop.permute.xlu0 %932
        %934 = vrot.lane.b32.xlu0 %v869, 127
        %v935 = vpop.permute.xlu0 %934
        %936 = vrot.lane.b32.xlu0 %v870, 127
        %v937 = vpop.permute.xlu0 %936
        %938 = vrot.lane.b32.xlu0 %v871, 127
        %v939 = vpop.permute.xlu0 %938
        %940 = vrot.lane.b32.xlu0 %v872, 127
        %v941 = vpop.permute.xlu0 %940
        %942 = vrot.lane.b32.xlu0 %v873, 127
        %v943 = vpop.permute.xlu0 %942
        %944 = vrot.lane.b32.xlu0 %v874, 127
        %v945 = vpop.permute.xlu0 %944
        %946 = vrot.lane.b32.xlu0 %v875, 127
        %v947 = vpop.permute.xlu0 %946
        %vm948 = vcmask 1039360
        %v949 = vsel %vm948, %v901, %v903
        %v950 = vsel %vm948, %v903, %v905
        %v951 = vsel %vm948, %v905, %v907
        %v952 = vsel %vm948, %v907, %v909
        %v953 = vsel %vm948, %v909, %v911
        %v954 = vsel %vm948, %v913, %v915
        %v955 = vsel %vm948, %v915, %v917
        %v956 = vsel %vm948, %v917, %v919
        %v957 = vsel %vm948, %v919, %v921
        %v958 = vsel %vm948, %v921, %v923
        %v959 = vsel %vm948, %v925, %v927
        %v960 = vsel %vm948, %v927, %v929
        %v961 = vsel %vm948, %v929, %v931
        %v962 = vsel %vm948, %v931, %v933
        %v963 = vsel %vm948, %v933, %v935
        %v964 = vsel %vm948, %v937, %v939
        %v965 = vsel %vm948, %v939, %v941
        %v966 = vsel %vm948, %v941, %v943
        %v967 = vsel %vm948, %v943, %v945
        %v968 = vsel %vm948, %v945, %v947
        %v993 = vadd.f32 %v812, %v949
        %v994 = vadd.f32 %v813, %v950
        %v995 = vadd.f32 %v814, %v951
        %v996 = vadd.f32 %v815, %v952
        %v997 = vadd.f32 %v816, %v953
        %v998 = vadd.f32 %v817, %v911
        %v999 = vadd.f32 %v818, %v954
        %v1000 = vadd.f32 %v819, %v955
        %v1001 = vadd.f32 %v820, %v956
        %v1002 = vadd.f32 %v821, %v957
        %v1003 = vadd.f32 %v822, %v958
        %v1004 = vadd.f32 %v823, %v923
        %v1005 = vadd.f32 %v824, %v959
        %v1006 = vadd.f32 %v825, %v960
        %v1007 = vadd.f32 %v826, %v961
        %v1008 = vadd.f32 %v827, %v962
        %v1009 = vadd.f32 %v828, %v963
        %v1010 = vadd.f32 %v829, %v935
        %v1011 = vadd.f32 %v830, %v964
        %v1012 = vadd.f32 %v831, %v965
        %v1013 = vadd.f32 %v832, %v966
        %v1014 = vadd.f32 %v833, %v967
        %v1015 = vadd.f32 %v834, %v968
        %v1016 = vadd.f32 %v835, %v947
        %1017 = vset.pattern.permute.xlu0 2
        %1018 = vperm.xlu0 %1017, %v382
        %v1019 = vpop.permute.xlu0 %1018
        %1021 = vset.pattern.permute.xlu0 2
        %1022 = vperm.xlu0 %1021, %v383
        %v1023 = vpop.permute.xlu0 %1022
        %1025 = vset.pattern.permute.xlu0 2
        %1026 = vperm.xlu0 %1025, %v384
        %v1027 = vpop.permute.xlu0 %1026
        %1029 = vset.pattern.permute.xlu0 2
        %1030 = vperm.xlu0 %1029, %v385
        %v1031 = vpop.permute.xlu0 %1030
        %v1033 = vmul.f32 %v1019, %v761
        %v1034 = vmul.f32 %v1019, %v765
        %v1035 = vmul.f32 %v1019, %v769
        %v1036 = vmul.f32 %v1019, %v773
        %v1037 = vmul.f32 %v1019, %v777
        %v1038 = vmul.f32 %v1019, %v781
        %v1039 = vmul.f32 %v1023, %v761
        %v1040 = vmul.f32 %v1023, %v765
        %v1041 = vmul.f32 %v1023, %v769
        %v1042 = vmul.f32 %v1023, %v773
        %v1043 = vmul.f32 %v1023, %v777
        %v1044 = vmul.f32 %v1023, %v781
        %v1045 = vmul.f32 %v1027, %v761
        %v1046 = vmul.f32 %v1027, %v765
        %v1047 = vmul.f32 %v1027, %v769
        %v1048 = vmul.f32 %v1027, %v773
        %v1049 = vmul.f32 %v1027, %v777
        %v1050 = vmul.f32 %v1027, %v781
        %v1051 = vmul.f32 %v1031, %v761
        %v1052 = vmul.f32 %v1031, %v765
        %v1053 = vmul.f32 %v1031, %v769
        %v1054 = vmul.f32 %v1031, %v773
        %v1055 = vmul.f32 %v1031, %v777
        %v1056 = vmul.f32 %v1031, %v781
        %1081 = vrot.lane.b32.xlu0 %v1033, 126
        %v1082 = vpop.permute.xlu0 %1081
        %1083 = vrot.lane.b32.xlu0 %v1034, 126
        %v1084 = vpop.permute.xlu0 %1083
        %1085 = vrot.lane.b32.xlu0 %v1035, 126
        %v1086 = vpop.permute.xlu0 %1085
        %1087 = vrot.lane.b32.xlu0 %v1036, 126
        %v1088 = vpop.permute.xlu0 %1087
        %1089 = vrot.lane.b32.xlu0 %v1037, 126
        %v1090 = vpop.permute.xlu0 %1089
        %1091 = vrot.lane.b32.xlu0 %v1038, 126
        %v1092 = vpop.permute.xlu0 %1091
        %1093 = vrot.lane.b32.xlu0 %v1039, 126
        %v1094 = vpop.permute.xlu0 %1093
        %1095 = vrot.lane.b32.xlu0 %v1040, 126
        %v1096 = vpop.permute.xlu0 %1095
        %1097 = vrot.lane.b32.xlu0 %v1041, 126
        %v1098 = vpop.permute.xlu0 %1097
        %1099 = vrot.lane.b32.xlu0 %v1042, 126
        %v1100 = vpop.permute.xlu0 %1099
        %1101 = vrot.lane.b32.xlu0 %v1043, 126
        %v1102 = vpop.permute.xlu0 %1101
        %1103 = vrot.lane.b32.xlu0 %v1044, 126
        %v1104 = vpop.permute.xlu0 %1103
        %1105 = vrot.lane.b32.xlu0 %v1045, 126
        %v1106 = vpop.permute.xlu0 %1105
        %1107 = vrot.lane.b32.xlu0 %v1046, 126
        %v1108 = vpop.permute.xlu0 %1107
        %1109 = vrot.lane.b32.xlu0 %v1047, 126
        %v1110 = vpop.permute.xlu0 %1109
        %1111 = vrot.lane.b32.xlu0 %v1048, 126
        %v1112 = vpop.permute.xlu0 %1111
        %1113 = vrot.lane.b32.xlu0 %v1049, 126
        %v1114 = vpop.permute.xlu0 %1113
        %1115 = vrot.lane.b32.xlu0 %v1050, 126
        %v1116 = vpop.permute.xlu0 %1115
        %1117 = vrot.lane.b32.xlu0 %v1051, 126
        %v1118 = vpop.permute.xlu0 %1117
        %1119 = vrot.lane.b32.xlu0 %v1052, 126
        %v1120 = vpop.permute.xlu0 %1119
        %1121 = vrot.lane.b32.xlu0 %v1053, 126
        %v1122 = vpop.permute.xlu0 %1121
        %1123 = vrot.lane.b32.xlu0 %v1054, 126
        %v1124 = vpop.permute.xlu0 %1123
        %1125 = vrot.lane.b32.xlu0 %v1055, 126
        %v1126 = vpop.permute.xlu0 %1125
        %1127 = vrot.lane.b32.xlu0 %v1056, 126
        %v1128 = vpop.permute.xlu0 %1127
        %vm1129 = vcmask 1031168
        %v1130 = vsel %vm1129, %v1082, %v1084
        %v1131 = vsel %vm1129, %v1084, %v1086
        %v1132 = vsel %vm1129, %v1086, %v1088
        %v1133 = vsel %vm1129, %v1088, %v1090
        %v1134 = vsel %vm1129, %v1090, %v1092
        %v1135 = vsel %vm1129, %v1094, %v1096
        %v1136 = vsel %vm1129, %v1096, %v1098
        %v1137 = vsel %vm1129, %v1098, %v1100
        %v1138 = vsel %vm1129, %v1100, %v1102
        %v1139 = vsel %vm1129, %v1102, %v1104
        %v1140 = vsel %vm1129, %v1106, %v1108
        %v1141 = vsel %vm1129, %v1108, %v1110
        %v1142 = vsel %vm1129, %v1110, %v1112
        %v1143 = vsel %vm1129, %v1112, %v1114
        %v1144 = vsel %vm1129, %v1114, %v1116
        %v1145 = vsel %vm1129, %v1118, %v1120
        %v1146 = vsel %vm1129, %v1120, %v1122
        %v1147 = vsel %vm1129, %v1122, %v1124
        %v1148 = vsel %vm1129, %v1124, %v1126
        %v1149 = vsel %vm1129, %v1126, %v1128
        %v1174 = vadd.f32 %v993, %v1130
        %v1175 = vadd.f32 %v994, %v1131
        %v1176 = vadd.f32 %v995, %v1132
        %v1177 = vadd.f32 %v996, %v1133
        %v1178 = vadd.f32 %v997, %v1134
        %v1179 = vadd.f32 %v998, %v1092
        %v1180 = vadd.f32 %v999, %v1135
        %v1181 = vadd.f32 %v1000, %v1136
        %v1182 = vadd.f32 %v1001, %v1137
        %v1183 = vadd.f32 %v1002, %v1138
        %v1184 = vadd.f32 %v1003, %v1139
        %v1185 = vadd.f32 %v1004, %v1104
        %v1186 = vadd.f32 %v1005, %v1140
        %v1187 = vadd.f32 %v1006, %v1141
        %v1188 = vadd.f32 %v1007, %v1142
        %v1189 = vadd.f32 %v1008, %v1143
        %v1190 = vadd.f32 %v1009, %v1144
        %v1191 = vadd.f32 %v1010, %v1116
        %v1192 = vadd.f32 %v1011, %v1145
        %v1193 = vadd.f32 %v1012, %v1146
        %v1194 = vadd.f32 %v1013, %v1147
        %v1195 = vadd.f32 %v1014, %v1148
        %v1196 = vadd.f32 %v1015, %v1149
        %v1197 = vadd.f32 %v1016, %v1128
        %1198 = vset.pattern.permute.xlu0 3
        %1199 = vperm.xlu0 %1198, %v382
        %v1200 = vpop.permute.xlu0 %1199
        %1202 = vset.pattern.permute.xlu0 3
        %1203 = vperm.xlu0 %1202, %v383
        %v1204 = vpop.permute.xlu0 %1203
        %1206 = vset.pattern.permute.xlu0 3
        %1207 = vperm.xlu0 %1206, %v384
        %v1208 = vpop.permute.xlu0 %1207
        %1210 = vset.pattern.permute.xlu0 3
        %1211 = vperm.xlu0 %1210, %v385
        %v1212 = vpop.permute.xlu0 %1211
        %v1214 = vmul.f32 %v1200, %v761
        %v1215 = vmul.f32 %v1200, %v765
        %v1216 = vmul.f32 %v1200, %v769
        %v1217 = vmul.f32 %v1200, %v773
        %v1218 = vmul.f32 %v1200, %v777
        %v1219 = vmul.f32 %v1200, %v781
        %v1220 = vmul.f32 %v1204, %v761
        %v1221 = vmul.f32 %v1204, %v765
        %v1222 = vmul.f32 %v1204, %v769
        %v1223 = vmul.f32 %v1204, %v773
        %v1224 = vmul.f32 %v1204, %v777
        %v1225 = vmul.f32 %v1204, %v781
        %v1226 = vmul.f32 %v1208, %v761
        %v1227 = vmul.f32 %v1208, %v765
        %v1228 = vmul.f32 %v1208, %v769
        %v1229 = vmul.f32 %v1208, %v773
        %v1230 = vmul.f32 %v1208, %v777
        %v1231 = vmul.f32 %v1208, %v781
        %v1232 = vmul.f32 %v1212, %v761
        %v1233 = vmul.f32 %v1212, %v765
        %v1234 = vmul.f32 %v1212, %v769
        %v1235 = vmul.f32 %v1212, %v773
        %v1236 = vmul.f32 %v1212, %v777
        %v1237 = vmul.f32 %v1212, %v781
        %1262 = vrot.lane.b32.xlu0 %v1214, 100
        %v1263 = vpop.permute.xlu0 %1262
        %1264 = vrot.lane.b32.xlu0 %v1215, 100
        %v1265 = vpop.permute.xlu0 %1264
        %1266 = vrot.lane.b32.xlu0 %v1216, 100
        %v1267 = vpop.permute.xlu0 %1266
        %1268 = vrot.lane.b32.xlu0 %v1217, 100
        %v1269 = vpop.permute.xlu0 %1268
        %1270 = vrot.lane.b32.xlu0 %v1218, 100
        %v1271 = vpop.permute.xlu0 %1270
        %1272 = vrot.lane.b32.xlu0 %v1219, 100
        %v1273 = vpop.permute.xlu0 %1272
        %1274 = vrot.lane.b32.xlu0 %v1220, 100
        %v1275 = vpop.permute.xlu0 %1274
        %1276 = vrot.lane.b32.xlu0 %v1221, 100
        %v1277 = vpop.permute.xlu0 %1276
        %1278 = vrot.lane.b32.xlu0 %v1222, 100
        %v1279 = vpop.permute.xlu0 %1278
        %1280 = vrot.lane.b32.xlu0 %v1223, 100
        %v1281 = vpop.permute.xlu0 %1280
        %1282 = vrot.lane.b32.xlu0 %v1224, 100
        %v1283 = vpop.permute.xlu0 %1282
        %1284 = vrot.lane.b32.xlu0 %v1225, 100
        %v1285 = vpop.permute.xlu0 %1284
        %1286 = vrot.lane.b32.xlu0 %v1226, 100
        %v1287 = vpop.permute.xlu0 %1286
        %1288 = vrot.lane.b32.xlu0 %v1227, 100
        %v1289 = vpop.permute.xlu0 %1288
        %1290 = vrot.lane.b32.xlu0 %v1228, 100
        %v1291 = vpop.permute.xlu0 %1290
        %1292 = vrot.lane.b32.xlu0 %v1229, 100
        %v1293 = vpop.permute.xlu0 %1292
        %1294 = vrot.lane.b32.xlu0 %v1230, 100
        %v1295 = vpop.permute.xlu0 %1294
        %1296 = vrot.lane.b32.xlu0 %v1231, 100
        %v1297 = vpop.permute.xlu0 %1296
        %1298 = vrot.lane.b32.xlu0 %v1232, 100
        %v1299 = vpop.permute.xlu0 %1298
        %1300 = vrot.lane.b32.xlu0 %v1233, 100
        %v1301 = vpop.permute.xlu0 %1300
        %1302 = vrot.lane.b32.xlu0 %v1234, 100
        %v1303 = vpop.permute.xlu0 %1302
        %1304 = vrot.lane.b32.xlu0 %v1235, 100
        %v1305 = vpop.permute.xlu0 %1304
        %1306 = vrot.lane.b32.xlu0 %v1236, 100
        %v1307 = vpop.permute.xlu0 %1306
        %1308 = vrot.lane.b32.xlu0 %v1237, 100
        %v1309 = vpop.permute.xlu0 %1308
        %vm1310 = vcmask 818176
        %v1311 = vsel %vm1310, %v1263, %v1265
        %v1312 = vsel %vm1310, %v1265, %v1267
        %v1313 = vsel %vm1310, %v1267, %v1269
        %v1314 = vsel %vm1310, %v1269, %v1271
        %v1315 = vsel %vm1310, %v1271, %v1273
        %v1316 = vsel %vm1310, %v1275, %v1277
        %v1317 = vsel %vm1310, %v1277, %v1279
        %v1318 = vsel %vm1310, %v1279, %v1281
        %v1319 = vsel %vm1310, %v1281, %v1283
        %v1320 = vsel %vm1310, %v1283, %v1285
        %v1321 = vsel %vm1310, %v1287, %v1289
        %v1322 = vsel %vm1310, %v1289, %v1291
        %v1323 = vsel %vm1310, %v1291, %v1293
        %v1324 = vsel %vm1310, %v1293, %v1295
        %v1325 = vsel %vm1310, %v1295, %v1297
        %v1326 = vsel %vm1310, %v1299, %v1301
        %v1327 = vsel %vm1310, %v1301, %v1303
        %v1328 = vsel %vm1310, %v1303, %v1305
        %v1329 = vsel %vm1310, %v1305, %v1307
        %v1330 = vsel %vm1310, %v1307, %v1309
        %v1355 = vadd.f32 %v1174, %v1311
        %v1356 = vadd.f32 %v1175, %v1312
        %v1357 = vadd.f32 %v1176, %v1313
        %v1358 = vadd.f32 %v1177, %v1314
        %v1359 = vadd.f32 %v1178, %v1315
        %v1360 = vadd.f32 %v1179, %v1273
        %v1361 = vadd.f32 %v1180, %v1316
        %v1362 = vadd.f32 %v1181, %v1317
        %v1363 = vadd.f32 %v1182, %v1318
        %v1364 = vadd.f32 %v1183, %v1319
        %v1365 = vadd.f32 %v1184, %v1320
        %v1366 = vadd.f32 %v1185, %v1285
        %v1367 = vadd.f32 %v1186, %v1321
        %v1368 = vadd.f32 %v1187, %v1322
        %v1369 = vadd.f32 %v1188, %v1323
        %v1370 = vadd.f32 %v1189, %v1324
        %v1371 = vadd.f32 %v1190, %v1325
        %v1372 = vadd.f32 %v1191, %v1297
        %v1373 = vadd.f32 %v1192, %v1326
        %v1374 = vadd.f32 %v1193, %v1327
        %v1375 = vadd.f32 %v1194, %v1328
        %v1376 = vadd.f32 %v1195, %v1329
        %v1377 = vadd.f32 %v1196, %v1330
        %v1378 = vadd.f32 %v1197, %v1309
        %1379 = vset.pattern.permute.xlu0 4
        %1380 = vperm.xlu0 %1379, %v382
        %v1381 = vpop.permute.xlu0 %1380
        %1383 = vset.pattern.permute.xlu0 4
        %1384 = vperm.xlu0 %1383, %v383
        %v1385 = vpop.permute.xlu0 %1384
        %1387 = vset.pattern.permute.xlu0 4
        %1388 = vperm.xlu0 %1387, %v384
        %v1389 = vpop.permute.xlu0 %1388
        %1391 = vset.pattern.permute.xlu0 4
        %1392 = vperm.xlu0 %1391, %v385
        %v1393 = vpop.permute.xlu0 %1392
        %v1395 = vmul.f32 %v1381, %v761
        %v1396 = vmul.f32 %v1381, %v765
        %v1397 = vmul.f32 %v1381, %v769
        %v1398 = vmul.f32 %v1381, %v773
        %v1399 = vmul.f32 %v1381, %v777
        %v1400 = vmul.f32 %v1381, %v781
        %v1401 = vmul.f32 %v1385, %v761
        %v1402 = vmul.f32 %v1385, %v765
        %v1403 = vmul.f32 %v1385, %v769
        %v1404 = vmul.f32 %v1385, %v773
        %v1405 = vmul.f32 %v1385, %v777
        %v1406 = vmul.f32 %v1385, %v781
        %v1407 = vmul.f32 %v1389, %v761
        %v1408 = vmul.f32 %v1389, %v765
        %v1409 = vmul.f32 %v1389, %v769
        %v1410 = vmul.f32 %v1389, %v773
        %v1411 = vmul.f32 %v1389, %v777
        %v1412 = vmul.f32 %v1389, %v781
        %v1413 = vmul.f32 %v1393, %v761
        %v1414 = vmul.f32 %v1393, %v765
        %v1415 = vmul.f32 %v1393, %v769
        %v1416 = vmul.f32 %v1393, %v773
        %v1417 = vmul.f32 %v1393, %v777
        %v1418 = vmul.f32 %v1393, %v781
        %1443 = vrot.lane.b32.xlu0 %v1395, 99
        %v1444 = vpop.permute.xlu0 %1443
        %1445 = vrot.lane.b32.xlu0 %v1396, 99
        %v1446 = vpop.permute.xlu0 %1445
        %1447 = vrot.lane.b32.xlu0 %v1397, 99
        %v1448 = vpop.permute.xlu0 %1447
        %1449 = vrot.lane.b32.xlu0 %v1398, 99
        %v1450 = vpop.permute.xlu0 %1449
        %1451 = vrot.lane.b32.xlu0 %v1399, 99
        %v1452 = vpop.permute.xlu0 %1451
        %1453 = vrot.lane.b32.xlu0 %v1400, 99
        %v1454 = vpop.permute.xlu0 %1453
        %1455 = vrot.lane.b32.xlu0 %v1401, 99
        %v1456 = vpop.permute.xlu0 %1455
        %1457 = vrot.lane.b32.xlu0 %v1402, 99
        %v1458 = vpop.permute.xlu0 %1457
        %1459 = vrot.lane.b32.xlu0 %v1403, 99
        %v1460 = vpop.permute.xlu0 %1459
        %1461 = vrot.lane.b32.xlu0 %v1404, 99
        %v1462 = vpop.permute.xlu0 %1461
        %1463 = vrot.lane.b32.xlu0 %v1405, 99
        %v1464 = vpop.permute.xlu0 %1463
        %1465 = vrot.lane.b32.xlu0 %v1406, 99
        %v1466 = vpop.permute.xlu0 %1465
        %1467 = vrot.lane.b32.xlu0 %v1407, 99
        %v1468 = vpop.permute.xlu0 %1467
        %1469 = vrot.lane.b32.xlu0 %v1408, 99
        %v1470 = vpop.permute.xlu0 %1469
        %1471 = vrot.lane.b32.xlu0 %v1409, 99
        %v1472 = vpop.permute.xlu0 %1471
        %1473 = vrot.lane.b32.xlu0 %v1410, 99
        %v1474 = vpop.permute.xlu0 %1473
        %1475 = vrot.lane.b32.xlu0 %v1411, 99
        %v1476 = vpop.permute.xlu0 %1475
        %1477 = vrot.lane.b32.xlu0 %v1412, 99
        %v1478 = vpop.permute.xlu0 %1477
        %1479 = vrot.lane.b32.xlu0 %v1413, 99
        %v1480 = vpop.permute.xlu0 %1479
        %1481 = vrot.lane.b32.xlu0 %v1414, 99
        %v1482 = vpop.permute.xlu0 %1481
        %1483 = vrot.lane.b32.xlu0 %v1415, 99
        %v1484 = vpop.permute.xlu0 %1483
        %1485 = vrot.lane.b32.xlu0 %v1416, 99
        %v1486 = vpop.permute.xlu0 %1485
        %1487 = vrot.lane.b32.xlu0 %v1417, 99
        %v1488 = vpop.permute.xlu0 %1487
        %1489 = vrot.lane.b32.xlu0 %v1418, 99
        %v1490 = vpop.permute.xlu0 %1489
        %vm1491 = vcmask 809984
        %v1492 = vsel %vm1491, %v1444, %v1446
        %v1493 = vsel %vm1491, %v1446, %v1448
        %v1494 = vsel %vm1491, %v1448, %v1450
        %v1495 = vsel %vm1491, %v1450, %v1452
        %v1496 = vsel %vm1491, %v1452, %v1454
        %v1497 = vsel %vm1491, %v1456, %v1458
        %v1498 = vsel %vm1491, %v1458, %v1460
        %v1499 = vsel %vm1491, %v1460, %v1462
        %v1500 = vsel %vm1491, %v1462, %v1464
        %v1501 = vsel %vm1491, %v1464, %v1466
        %v1502 = vsel %vm1491, %v1468, %v1470
        %v1503 = vsel %vm1491, %v1470, %v1472
        %v1504 = vsel %vm1491, %v1472, %v1474
        %v1505 = vsel %vm1491, %v1474, %v1476
        %v1506 = vsel %vm1491, %v1476, %v1478
        %v1507 = vsel %vm1491, %v1480, %v1482
        %v1508 = vsel %vm1491, %v1482, %v1484
        %v1509 = vsel %vm1491, %v1484, %v1486
        %v1510 = vsel %vm1491, %v1486, %v1488
        %v1511 = vsel %vm1491, %v1488, %v1490
        %v1536 = vadd.f32 %v1355, %v1492
        %v1537 = vadd.f32 %v1356, %v1493
        %v1538 = vadd.f32 %v1357, %v1494
        %v1539 = vadd.f32 %v1358, %v1495
        %v1540 = vadd.f32 %v1359, %v1496
        %v1541 = vadd.f32 %v1360, %v1454
        %v1542 = vadd.f32 %v1361, %v1497
        %v1543 = vadd.f32 %v1362, %v1498
        %v1544 = vadd.f32 %v1363, %v1499
        %v1545 = vadd.f32 %v1364, %v1500
        %v1546 = vadd.f32 %v1365, %v1501
        %v1547 = vadd.f32 %v1366, %v1466
        %v1548 = vadd.f32 %v1367, %v1502
        %v1549 = vadd.f32 %v1368, %v1503
        %v1550 = vadd.f32 %v1369, %v1504
        %v1551 = vadd.f32 %v1370, %v1505
        %v1552 = vadd.f32 %v1371, %v1506
        %v1553 = vadd.f32 %v1372, %v1478
        %v1554 = vadd.f32 %v1373, %v1507
        %v1555 = vadd.f32 %v1374, %v1508
        %v1556 = vadd.f32 %v1375, %v1509
        %v1557 = vadd.f32 %v1376, %v1510
        %v1558 = vadd.f32 %v1377, %v1511
        %v1559 = vadd.f32 %v1378, %v1490
        %1560 = vset.pattern.permute.xlu0 5
        %1561 = vperm.xlu0 %1560, %v382
        %v1562 = vpop.permute.xlu0 %1561
        %1564 = vset.pattern.permute.xlu0 5
        %1565 = vperm.xlu0 %1564, %v383
        %v1566 = vpop.permute.xlu0 %1565
        %1568 = vset.pattern.permute.xlu0 5
        %1569 = vperm.xlu0 %1568, %v384
        %v1570 = vpop.permute.xlu0 %1569
        %1572 = vset.pattern.permute.xlu0 5
        %1573 = vperm.xlu0 %1572, %v385
        %v1574 = vpop.permute.xlu0 %1573
        %v1576 = vmul.f32 %v1562, %v761
        %v1577 = vmul.f32 %v1562, %v765
        %v1578 = vmul.f32 %v1562, %v769
        %v1579 = vmul.f32 %v1562, %v773
        %v1580 = vmul.f32 %v1562, %v777
        %v1581 = vmul.f32 %v1562, %v781
        %v1582 = vmul.f32 %v1566, %v761
        %v1583 = vmul.f32 %v1566, %v765
        %v1584 = vmul.f32 %v1566, %v769
        %v1585 = vmul.f32 %v1566, %v773
        %v1586 = vmul.f32 %v1566, %v777
        %v1587 = vmul.f32 %v1566, %v781
        %v1588 = vmul.f32 %v1570, %v761
        %v1589 = vmul.f32 %v1570, %v765
        %v1590 = vmul.f32 %v1570, %v769
        %v1591 = vmul.f32 %v1570, %v773
        %v1592 = vmul.f32 %v1570, %v777
        %v1593 = vmul.f32 %v1570, %v781
        %v1594 = vmul.f32 %v1574, %v761
        %v1595 = vmul.f32 %v1574, %v765
        %v1596 = vmul.f32 %v1574, %v769
        %v1597 = vmul.f32 %v1574, %v773
        %v1598 = vmul.f32 %v1574, %v777
        %v1599 = vmul.f32 %v1574, %v781
        %1624 = vrot.lane.b32.xlu0 %v1576, 98
        %v1625 = vpop.permute.xlu0 %1624
        %1626 = vrot.lane.b32.xlu0 %v1577, 98
        %v1627 = vpop.permute.xlu0 %1626
        %1628 = vrot.lane.b32.xlu0 %v1578, 98
        %v1629 = vpop.permute.xlu0 %1628
        %1630 = vrot.lane.b32.xlu0 %v1579, 98
        %v1631 = vpop.permute.xlu0 %1630
        %1632 = vrot.lane.b32.xlu0 %v1580, 98
        %v1633 = vpop.permute.xlu0 %1632
        %1634 = vrot.lane.b32.xlu0 %v1581, 98
        %v1635 = vpop.permute.xlu0 %1634
        %1636 = vrot.lane.b32.xlu0 %v1582, 98
        %v1637 = vpop.permute.xlu0 %1636
        %1638 = vrot.lane.b32.xlu0 %v1583, 98
        %v1639 = vpop.permute.xlu0 %1638
        %1640 = vrot.lane.b32.xlu0 %v1584, 98
        %v1641 = vpop.permute.xlu0 %1640
        %1642 = vrot.lane.b32.xlu0 %v1585, 98
        %v1643 = vpop.permute.xlu0 %1642
        %1644 = vrot.lane.b32.xlu0 %v1586, 98
        %v1645 = vpop.permute.xlu0 %1644
        %1646 = vrot.lane.b32.xlu0 %v1587, 98
        %v1647 = vpop.permute.xlu0 %1646
        %1648 = vrot.lane.b32.xlu0 %v1588, 98
        %v1649 = vpop.permute.xlu0 %1648
        %1650 = vrot.lane.b32.xlu0 %v1589, 98
        %v1651 = vpop.permute.xlu0 %1650
        %1652 = vrot.lane.b32.xlu0 %v1590, 98
        %v1653 = vpop.permute.xlu0 %1652
        %1654 = vrot.lane.b32.xlu0 %v1591, 98
        %v1655 = vpop.permute.xlu0 %1654
        %1656 = vrot.lane.b32.xlu0 %v1592, 98
        %v1657 = vpop.permute.xlu0 %1656
        %1658 = vrot.lane.b32.xlu0 %v1593, 98
        %v1659 = vpop.permute.xlu0 %1658
        %1660 = vrot.lane.b32.xlu0 %v1594, 98
        %v1661 = vpop.permute.xlu0 %1660
        %1662 = vrot.lane.b32.xlu0 %v1595, 98
        %v1663 = vpop.permute.xlu0 %1662
        %1664 = vrot.lane.b32.xlu0 %v1596, 98
        %v1665 = vpop.permute.xlu0 %1664
        %1666 = vrot.lane.b32.xlu0 %v1597, 98
        %v1667 = vpop.permute.xlu0 %1666
        %1668 = vrot.lane.b32.xlu0 %v1598, 98
        %v1669 = vpop.permute.xlu0 %1668
        %1670 = vrot.lane.b32.xlu0 %v1599, 98
        %v1671 = vpop.permute.xlu0 %1670
        %vm1672 = vcmask 801792
        %v1673 = vsel %vm1672, %v1625, %v1627
        %v1674 = vsel %vm1672, %v1627, %v1629
        %v1675 = vsel %vm1672, %v1629, %v1631
        %v1676 = vsel %vm1672, %v1631, %v1633
        %v1677 = vsel %vm1672, %v1633, %v1635
        %v1678 = vsel %vm1672, %v1637, %v1639
        %v1679 = vsel %vm1672, %v1639, %v1641
        %v1680 = vsel %vm1672, %v1641, %v1643
        %v1681 = vsel %vm1672, %v1643, %v1645
        %v1682 = vsel %vm1672, %v1645, %v1647
        %v1683 = vsel %vm1672, %v1649, %v1651
        %v1684 = vsel %vm1672, %v1651, %v1653
        %v1685 = vsel %vm1672, %v1653, %v1655
        %v1686 = vsel %vm1672, %v1655, %v1657
        %v1687 = vsel %vm1672, %v1657, %v1659
        %v1688 = vsel %vm1672, %v1661, %v1663
        %v1689 = vsel %vm1672, %v1663, %v1665
        %v1690 = vsel %vm1672, %v1665, %v1667
        %v1691 = vsel %vm1672, %v1667, %v1669
        %v1692 = vsel %vm1672, %v1669, %v1671
        %v1717 = vadd.f32 %v1536, %v1673
        %v1718 = vadd.f32 %v1537, %v1674
        %v1719 = vadd.f32 %v1538, %v1675
        %v1720 = vadd.f32 %v1539, %v1676
        %v1721 = vadd.f32 %v1540, %v1677
        %v1722 = vadd.f32 %v1541, %v1635
        %v1723 = vadd.f32 %v1542, %v1678
        %v1724 = vadd.f32 %v1543, %v1679
        %v1725 = vadd.f32 %v1544, %v1680
        %v1726 = vadd.f32 %v1545, %v1681
        %v1727 = vadd.f32 %v1546, %v1682
        %v1728 = vadd.f32 %v1547, %v1647
        %v1729 = vadd.f32 %v1548, %v1683
        %v1730 = vadd.f32 %v1549, %v1684
        %v1731 = vadd.f32 %v1550, %v1685
        %v1732 = vadd.f32 %v1551, %v1686
        %v1733 = vadd.f32 %v1552, %v1687
        %v1734 = vadd.f32 %v1553, %v1659
        %v1735 = vadd.f32 %v1554, %v1688
        %v1736 = vadd.f32 %v1555, %v1689
        %v1737 = vadd.f32 %v1556, %v1690
        %v1738 = vadd.f32 %v1557, %v1691
        %v1739 = vadd.f32 %v1558, %v1692
        %v1740 = vadd.f32 %v1559, %v1671
        %1741 = vset.pattern.permute.xlu0 6
        %1742 = vperm.xlu0 %1741, %v382
        %v1743 = vpop.permute.xlu0 %1742
        %1745 = vset.pattern.permute.xlu0 6
        %1746 = vperm.xlu0 %1745, %v383
        %v1747 = vpop.permute.xlu0 %1746
        %1749 = vset.pattern.permute.xlu0 6
        %1750 = vperm.xlu0 %1749, %v384
        %v1751 = vpop.permute.xlu0 %1750
        %1753 = vset.pattern.permute.xlu0 6
        %1754 = vperm.xlu0 %1753, %v385
        %v1755 = vpop.permute.xlu0 %1754
        %v1757 = vlaneseq
        %v1758 = vshrl.u32 %v1757, 7
        %v1759 = vsub.s32 6, %v1758
        %v1760 = vrot.slane %v736, %v1759
        %v1762 = vmul.f32 %v1743, %v761
        %v1763 = vmul.f32 %v1743, %v765
        %v1764 = vmul.f32 %v1743, %v769
        %v1765 = vmul.f32 %v1743, %v773
        %v1766 = vmul.f32 %v1743, %v777
        %v1767 = vmul.f32 %v1743, %v781
        %v1768 = vmul.f32 %v1743, %v1760
        %v1769 = vmul.f32 %v1747, %v761
        %v1770 = vmul.f32 %v1747, %v765
        %v1771 = vmul.f32 %v1747, %v769
        %v1772 = vmul.f32 %v1747, %v773
        %v1773 = vmul.f32 %v1747, %v777
        %v1774 = vmul.f32 %v1747, %v781
        %v1775 = vmul.f32 %v1747, %v1760
        %v1776 = vmul.f32 %v1751, %v761
        %v1777 = vmul.f32 %v1751, %v765
        %v1778 = vmul.f32 %v1751, %v769
        %v1779 = vmul.f32 %v1751, %v773
        %v1780 = vmul.f32 %v1751, %v777
        %v1781 = vmul.f32 %v1751, %v781
        %v1782 = vmul.f32 %v1751, %v1760
        %v1783 = vmul.f32 %v1755, %v761
        %v1784 = vmul.f32 %v1755, %v765
        %v1785 = vmul.f32 %v1755, %v769
        %v1786 = vmul.f32 %v1755, %v773
        %v1787 = vmul.f32 %v1755, %v777
        %v1788 = vmul.f32 %v1755, %v781
        %v1789 = vmul.f32 %v1755, %v1760
        %1818 = vrot.lane.b32.xlu0 %v1762, 72
        %v1819 = vpop.permute.xlu0 %1818
        %1820 = vrot.lane.b32.xlu0 %v1763, 72
        %v1821 = vpop.permute.xlu0 %1820
        %1822 = vrot.lane.b32.xlu0 %v1764, 72
        %v1823 = vpop.permute.xlu0 %1822
        %1824 = vrot.lane.b32.xlu0 %v1765, 72
        %v1825 = vpop.permute.xlu0 %1824
        %1826 = vrot.lane.b32.xlu0 %v1766, 72
        %v1827 = vpop.permute.xlu0 %1826
        %1828 = vrot.lane.b32.xlu0 %v1767, 72
        %v1829 = vpop.permute.xlu0 %1828
        %1830 = vrot.lane.b32.xlu0 %v1768, 72
        %v1831 = vpop.permute.xlu0 %1830
        %1832 = vrot.lane.b32.xlu0 %v1769, 72
        %v1833 = vpop.permute.xlu0 %1832
        %1834 = vrot.lane.b32.xlu0 %v1770, 72
        %v1835 = vpop.permute.xlu0 %1834
        %1836 = vrot.lane.b32.xlu0 %v1771, 72
        %v1837 = vpop.permute.xlu0 %1836
        %1838 = vrot.lane.b32.xlu0 %v1772, 72
        %v1839 = vpop.permute.xlu0 %1838
        %1840 = vrot.lane.b32.xlu0 %v1773, 72
        %v1841 = vpop.permute.xlu0 %1840
        %1842 = vrot.lane.b32.xlu0 %v1774, 72
        %v1843 = vpop.permute.xlu0 %1842
        %1844 = vrot.lane.b32.xlu0 %v1775, 72
        %v1845 = vpop.permute.xlu0 %1844
        %1846 = vrot.lane.b32.xlu0 %v1776, 72
        %v1847 = vpop.permute.xlu0 %1846
        %1848 = vrot.lane.b32.xlu0 %v1777, 72
        %v1849 = vpop.permute.xlu0 %1848
        %1850 = vrot.lane.b32.xlu0 %v1778, 72
        %v1851 = vpop.permute.xlu0 %1850
        %1852 = vrot.lane.b32.xlu0 %v1779, 72
        %v1853 = vpop.permute.xlu0 %1852
        %1854 = vrot.lane.b32.xlu0 %v1780, 72
        %v1855 = vpop.permute.xlu0 %1854
        %1856 = vrot.lane.b32.xlu0 %v1781, 72
        %v1857 = vpop.permute.xlu0 %1856
        %1858 = vrot.lane.b32.xlu0 %v1782, 72
        %v1859 = vpop.permute.xlu0 %1858
        %1860 = vrot.lane.b32.xlu0 %v1783, 72
        %v1861 = vpop.permute.xlu0 %1860
        %1862 = vrot.lane.b32.xlu0 %v1784, 72
        %v1863 = vpop.permute.xlu0 %1862
        %1864 = vrot.lane.b32.xlu0 %v1785, 72
        %v1865 = vpop.permute.xlu0 %1864
        %1866 = vrot.lane.b32.xlu0 %v1786, 72
        %v1867 = vpop.permute.xlu0 %1866
        %1868 = vrot.lane.b32.xlu0 %v1787, 72
        %v1869 = vpop.permute.xlu0 %1868
        %1870 = vrot.lane.b32.xlu0 %v1788, 72
        %v1871 = vpop.permute.xlu0 %1870
        %1872 = vrot.lane.b32.xlu0 %v1789, 72
        %v1873 = vpop.permute.xlu0 %1872
        %vm1874 = vcmask 588800
        %v1875 = vsel %vm1874, %v1819, %v1821
        %v1876 = vsel %vm1874, %v1821, %v1823
        %v1877 = vsel %vm1874, %v1823, %v1825
        %v1878 = vsel %vm1874, %v1825, %v1827
        %v1879 = vsel %vm1874, %v1827, %v1829
        %v1880 = vsel %vm1874, %v1829, %v1831
        %v1881 = vsel %vm1874, %v1833, %v1835
        %v1882 = vsel %vm1874, %v1835, %v1837
        %v1883 = vsel %vm1874, %v1837, %v1839
        %v1884 = vsel %vm1874, %v1839, %v1841
        %v1885 = vsel %vm1874, %v1841, %v1843
        %v1886 = vsel %vm1874, %v1843, %v1845
        %v1887 = vsel %vm1874, %v1847, %v1849
        %v1888 = vsel %vm1874, %v1849, %v1851
        %v1889 = vsel %vm1874, %v1851, %v1853
        %v1890 = vsel %vm1874, %v1853, %v1855
        %v1891 = vsel %vm1874, %v1855, %v1857
        %v1892 = vsel %vm1874, %v1857, %v1859
        %v1893 = vsel %vm1874, %v1861, %v1863
        %v1894 = vsel %vm1874, %v1863, %v1865
        %v1895 = vsel %vm1874, %v1865, %v1867
        %v1896 = vsel %vm1874, %v1867, %v1869
        %v1897 = vsel %vm1874, %v1869, %v1871
        %v1898 = vsel %vm1874, %v1871, %v1873
        %v1923 = vadd.f32 %v1717, %v1875
        %v1924 = vadd.f32 %v1718, %v1876
        %v1925 = vadd.f32 %v1719, %v1877
        %v1926 = vadd.f32 %v1720, %v1878
        %v1927 = vadd.f32 %v1721, %v1879
        %v1928 = vadd.f32 %v1722, %v1880
        %v1929 = vadd.f32 %v1723, %v1881
        %v1930 = vadd.f32 %v1724, %v1882
        %v1931 = vadd.f32 %v1725, %v1883
        %v1932 = vadd.f32 %v1726, %v1884
        %v1933 = vadd.f32 %v1727, %v1885
        %v1934 = vadd.f32 %v1728, %v1886
        %v1935 = vadd.f32 %v1729, %v1887
        %v1936 = vadd.f32 %v1730, %v1888
        %v1937 = vadd.f32 %v1731, %v1889
        %v1938 = vadd.f32 %v1732, %v1890
        %v1939 = vadd.f32 %v1733, %v1891
        %v1940 = vadd.f32 %v1734, %v1892
        %v1941 = vadd.f32 %v1735, %v1893
        %v1942 = vadd.f32 %v1736, %v1894
        %v1943 = vadd.f32 %v1737, %v1895
        %v1944 = vadd.f32 %v1738, %v1896
        %v1945 = vadd.f32 %v1739, %v1897
        %v1946 = vadd.f32 %v1740, %v1898
        %1947 = vset.pattern.permute.xlu0 7
        %1948 = vperm.xlu0 %1947, %v382
        %v1949 = vpop.permute.xlu0 %1948
        %1951 = vset.pattern.permute.xlu0 7
        %1952 = vperm.xlu0 %1951, %v383
        %v1953 = vpop.permute.xlu0 %1952
        %1955 = vset.pattern.permute.xlu0 7
        %1956 = vperm.xlu0 %1955, %v384
        %v1957 = vpop.permute.xlu0 %1956
        %1959 = vset.pattern.permute.xlu0 7
        %1960 = vperm.xlu0 %1959, %v385
        %v1961 = vpop.permute.xlu0 %1960
        %v1963 = vmul.f32 %v1949, %v761
        %v1964 = vmul.f32 %v1949, %v765
        %v1965 = vmul.f32 %v1949, %v769
        %v1966 = vmul.f32 %v1949, %v773
        %v1967 = vmul.f32 %v1949, %v777
        %v1968 = vmul.f32 %v1949, %v781
        %v1969 = vmul.f32 %v1949, %v1760
        %v1970 = vmul.f32 %v1953, %v761
        %v1971 = vmul.f32 %v1953, %v765
        %v1972 = vmul.f32 %v1953, %v769
        %v1973 = vmul.f32 %v1953, %v773
        %v1974 = vmul.f32 %v1953, %v777
        %v1975 = vmul.f32 %v1953, %v781
        %v1976 = vmul.f32 %v1953, %v1760
        %v1977 = vmul.f32 %v1957, %v761
        %v1978 = vmul.f32 %v1957, %v765
        %v1979 = vmul.f32 %v1957, %v769
        %v1980 = vmul.f32 %v1957, %v773
        %v1981 = vmul.f32 %v1957, %v777
        %v1982 = vmul.f32 %v1957, %v781
        %v1983 = vmul.f32 %v1957, %v1760
        %v1984 = vmul.f32 %v1961, %v761
        %v1985 = vmul.f32 %v1961, %v765
        %v1986 = vmul.f32 %v1961, %v769
        %v1987 = vmul.f32 %v1961, %v773
        %v1988 = vmul.f32 %v1961, %v777
        %v1989 = vmul.f32 %v1961, %v781
        %v1990 = vmul.f32 %v1961, %v1760
        %2019 = vrot.lane.b32.xlu0 %v1963, 71
        %v2020 = vpop.permute.xlu0 %2019
        %2021 = vrot.lane.b32.xlu0 %v1964, 71
        %v2022 = vpop.permute.xlu0 %2021
        %2023 = vrot.lane.b32.xlu0 %v1965, 71
        %v2024 = vpop.permute.xlu0 %2023
        %2025 = vrot.lane.b32.xlu0 %v1966, 71
        %v2026 = vpop.permute.xlu0 %2025
        %2027 = vrot.lane.b32.xlu0 %v1967, 71
        %v2028 = vpop.permute.xlu0 %2027
        %2029 = vrot.lane.b32.xlu0 %v1968, 71
        %v2030 = vpop.permute.xlu0 %2029
        %2031 = vrot.lane.b32.xlu0 %v1969, 71
        %v2032 = vpop.permute.xlu0 %2031
        %2033 = vrot.lane.b32.xlu0 %v1970, 71
        %v2034 = vpop.permute.xlu0 %2033
        %2035 = vrot.lane.b32.xlu0 %v1971, 71
        %v2036 = vpop.permute.xlu0 %2035
        %2037 = vrot.lane.b32.xlu0 %v1972, 71
        %v2038 = vpop.permute.xlu0 %2037
        %2039 = vrot.lane.b32.xlu0 %v1973, 71
        %v2040 = vpop.permute.xlu0 %2039
        %2041 = vrot.lane.b32.xlu0 %v1974, 71
        %v2042 = vpop.permute.xlu0 %2041
        %2043 = vrot.lane.b32.xlu0 %v1975, 71
        %v2044 = vpop.permute.xlu0 %2043
        %2045 = vrot.lane.b32.xlu0 %v1976, 71
        %v2046 = vpop.permute.xlu0 %2045
        %2047 = vrot.lane.b32.xlu0 %v1977, 71
        %v2048 = vpop.permute.xlu0 %2047
        %2049 = vrot.lane.b32.xlu0 %v1978, 71
        %v2050 = vpop.permute.xlu0 %2049
        %2051 = vrot.lane.b32.xlu0 %v1979, 71
        %v2052 = vpop.permute.xlu0 %2051
        %2053 = vrot.lane.b32.xlu0 %v1980, 71
        %v2054 = vpop.permute.xlu0 %2053
        %2055 = vrot.lane.b32.xlu0 %v1981, 71
        %v2056 = vpop.permute.xlu0 %2055
        %2057 = vrot.lane.b32.xlu0 %v1982, 71
        %v2058 = vpop.permute.xlu0 %2057
        %2059 = vrot.lane.b32.xlu0 %v1983, 71
        %v2060 = vpop.permute.xlu0 %2059
        %2061 = vrot.lane.b32.xlu0 %v1984, 71
        %v2062 = vpop.permute.xlu0 %2061
        %2063 = vrot.lane.b32.xlu0 %v1985, 71
        %v2064 = vpop.permute.xlu0 %2063
        %2065 = vrot.lane.b32.xlu0 %v1986, 71
        %v2066 = vpop.permute.xlu0 %2065
        %2067 = vrot.lane.b32.xlu0 %v1987, 71
        %v2068 = vpop.permute.xlu0 %2067
        %2069 = vrot.lane.b32.xlu0 %v1988, 71
        %v2070 = vpop.permute.xlu0 %2069
        %2071 = vrot.lane.b32.xlu0 %v1989, 71
        %v2072 = vpop.permute.xlu0 %2071
        %2073 = vrot.lane.b32.xlu0 %v1990, 71
        %v2074 = vpop.permute.xlu0 %2073
        %vm2075 = vcmask 580608
        %v2076 = vsel %vm2075, %v2020, %v2022
        %v2077 = vsel %vm2075, %v2022, %v2024
        %v2078 = vsel %vm2075, %v2024, %v2026
        %v2079 = vsel %vm2075, %v2026, %v2028
        %v2080 = vsel %vm2075, %v2028, %v2030
        %v2081 = vsel %vm2075, %v2030, %v2032
        %v2082 = vsel %vm2075, %v2034, %v2036
        %v2083 = vsel %vm2075, %v2036, %v2038
        %v2084 = vsel %vm2075, %v2038, %v2040
        %v2085 = vsel %vm2075, %v2040, %v2042
        %v2086 = vsel %vm2075, %v2042, %v2044
        %v2087 = vsel %vm2075, %v2044, %v2046
        %v2088 = vsel %vm2075, %v2048, %v2050
        %v2089 = vsel %vm2075, %v2050, %v2052
        %v2090 = vsel %vm2075, %v2052, %v2054
        %v2091 = vsel %vm2075, %v2054, %v2056
        %v2092 = vsel %vm2075, %v2056, %v2058
        %v2093 = vsel %vm2075, %v2058, %v2060
        %v2094 = vsel %vm2075, %v2062, %v2064
        %v2095 = vsel %vm2075, %v2064, %v2066
        %v2096 = vsel %vm2075, %v2066, %v2068
        %v2097 = vsel %vm2075, %v2068, %v2070
        %v2098 = vsel %vm2075, %v2070, %v2072
        %v2099 = vsel %vm2075, %v2072, %v2074
        %v2124 = vadd.f32 %v1923, %v2076
        %v2125 = vadd.f32 %v1924, %v2077
        %v2126 = vadd.f32 %v1925, %v2078
        %v2127 = vadd.f32 %v1926, %v2079
        %v2128 = vadd.f32 %v1927, %v2080
        %v2129 = vadd.f32 %v1928, %v2081
        %v2130 = vadd.f32 %v1929, %v2082
        %v2131 = vadd.f32 %v1930, %v2083
        %v2132 = vadd.f32 %v1931, %v2084
        %v2133 = vadd.f32 %v1932, %v2085
        %v2134 = vadd.f32 %v1933, %v2086
        %v2135 = vadd.f32 %v1934, %v2087
        %v2136 = vadd.f32 %v1935, %v2088
        %v2137 = vadd.f32 %v1936, %v2089
        %v2138 = vadd.f32 %v1937, %v2090
        %v2139 = vadd.f32 %v1938, %v2091
        %v2140 = vadd.f32 %v1939, %v2092
        %v2141 = vadd.f32 %v1940, %v2093
        %v2142 = vadd.f32 %v1941, %v2094
        %v2143 = vadd.f32 %v1942, %v2095
        %v2144 = vadd.f32 %v1943, %v2096
        %v2145 = vadd.f32 %v1944, %v2097
        %v2146 = vadd.f32 %v1945, %v2098
        %v2147 = vadd.f32 %v1946, %v2099
        %2148 = vset.pattern.permute.xlu0 8
        %2149 = vperm.xlu0 %2148, %v382
        %v2150 = vpop.permute.xlu0 %2149
        %2152 = vset.pattern.permute.xlu0 8
        %2153 = vperm.xlu0 %2152, %v383
        %v2154 = vpop.permute.xlu0 %2153
        %2156 = vset.pattern.permute.xlu0 8
        %2157 = vperm.xlu0 %2156, %v384
        %v2158 = vpop.permute.xlu0 %2157
        %2160 = vset.pattern.permute.xlu0 8
        %2161 = vperm.xlu0 %2160, %v385
        %v2162 = vpop.permute.xlu0 %2161
        %v2164 = vmul.f32 %v2150, %v761
        %v2165 = vmul.f32 %v2150, %v765
        %v2166 = vmul.f32 %v2150, %v769
        %v2167 = vmul.f32 %v2150, %v773
        %v2168 = vmul.f32 %v2150, %v777
        %v2169 = vmul.f32 %v2150, %v781
        %v2170 = vmul.f32 %v2150, %v1760
        %v2171 = vmul.f32 %v2154, %v761
        %v2172 = vmul.f32 %v2154, %v765
        %v2173 = vmul.f32 %v2154, %v769
        %v2174 = vmul.f32 %v2154, %v773
        %v2175 = vmul.f32 %v2154, %v777
        %v2176 = vmul.f32 %v2154, %v781
        %v2177 = vmul.f32 %v2154, %v1760
        %v2178 = vmul.f32 %v2158, %v761
        %v2179 = vmul.f32 %v2158, %v765
        %v2180 = vmul.f32 %v2158, %v769
        %v2181 = vmul.f32 %v2158, %v773
        %v2182 = vmul.f32 %v2158, %v777
        %v2183 = vmul.f32 %v2158, %v781
        %v2184 = vmul.f32 %v2158, %v1760
        %v2185 = vmul.f32 %v2162, %v761
        %v2186 = vmul.f32 %v2162, %v765
        %v2187 = vmul.f32 %v2162, %v769
        %v2188 = vmul.f32 %v2162, %v773
        %v2189 = vmul.f32 %v2162, %v777
        %v2190 = vmul.f32 %v2162, %v781
        %v2191 = vmul.f32 %v2162, %v1760
        %2220 = vrot.lane.b32.xlu0 %v2164, 70
        %v2221 = vpop.permute.xlu0 %2220
        %2222 = vrot.lane.b32.xlu0 %v2165, 70
        %v2223 = vpop.permute.xlu0 %2222
        %2224 = vrot.lane.b32.xlu0 %v2166, 70
        %v2225 = vpop.permute.xlu0 %2224
        %2226 = vrot.lane.b32.xlu0 %v2167, 70
        %v2227 = vpop.permute.xlu0 %2226
        %2228 = vrot.lane.b32.xlu0 %v2168, 70
        %v2229 = vpop.permute.xlu0 %2228
        %2230 = vrot.lane.b32.xlu0 %v2169, 70
        %v2231 = vpop.permute.xlu0 %2230
        %2232 = vrot.lane.b32.xlu0 %v2170, 70
        %v2233 = vpop.permute.xlu0 %2232
        %2234 = vrot.lane.b32.xlu0 %v2171, 70
        %v2235 = vpop.permute.xlu0 %2234
        %2236 = vrot.lane.b32.xlu0 %v2172, 70
        %v2237 = vpop.permute.xlu0 %2236
        %2238 = vrot.lane.b32.xlu0 %v2173, 70
        %v2239 = vpop.permute.xlu0 %2238
        %2240 = vrot.lane.b32.xlu0 %v2174, 70
        %v2241 = vpop.permute.xlu0 %2240
        %2242 = vrot.lane.b32.xlu0 %v2175, 70
        %v2243 = vpop.permute.xlu0 %2242
        %2244 = vrot.lane.b32.xlu0 %v2176, 70
        %v2245 = vpop.permute.xlu0 %2244
        %2246 = vrot.lane.b32.xlu0 %v2177, 70
        %v2247 = vpop.permute.xlu0 %2246
        %2248 = vrot.lane.b32.xlu0 %v2178, 70
        %v2249 = vpop.permute.xlu0 %2248
        %2250 = vrot.lane.b32.xlu0 %v2179, 70
        %v2251 = vpop.permute.xlu0 %2250
        %2252 = vrot.lane.b32.xlu0 %v2180, 70
        %v2253 = vpop.permute.xlu0 %2252
        %2254 = vrot.lane.b32.xlu0 %v2181, 70
        %v2255 = vpop.permute.xlu0 %2254
        %2256 = vrot.lane.b32.xlu0 %v2182, 70
        %v2257 = vpop.permute.xlu0 %2256
        %2258 = vrot.lane.b32.xlu0 %v2183, 70
        %v2259 = vpop.permute.xlu0 %2258
        %2260 = vrot.lane.b32.xlu0 %v2184, 70
        %v2261 = vpop.permute.xlu0 %2260
        %2262 = vrot.lane.b32.xlu0 %v2185, 70
        %v2263 = vpop.permute.xlu0 %2262
        %2264 = vrot.lane.b32.xlu0 %v2186, 70
        %v2265 = vpop.permute.xlu0 %2264
        %2266 = vrot.lane.b32.xlu0 %v2187, 70
        %v2267 = vpop.permute.xlu0 %2266
        %2268 = vrot.lane.b32.xlu0 %v2188, 70
        %v2269 = vpop.permute.xlu0 %2268
        %2270 = vrot.lane.b32.xlu0 %v2189, 70
        %v2271 = vpop.permute.xlu0 %2270
        %2272 = vrot.lane.b32.xlu0 %v2190, 70
        %v2273 = vpop.permute.xlu0 %2272
        %2274 = vrot.lane.b32.xlu0 %v2191, 70
        %v2275 = vpop.permute.xlu0 %2274
        %vm2276 = vcmask 572416
        %v2277 = vsel %vm2276, %v2221, %v2223
        %v2278 = vsel %vm2276, %v2223, %v2225
        %v2279 = vsel %vm2276, %v2225, %v2227
        %v2280 = vsel %vm2276, %v2227, %v2229
        %v2281 = vsel %vm2276, %v2229, %v2231
        %v2282 = vsel %vm2276, %v2231, %v2233
        %v2283 = vsel %vm2276, %v2235, %v2237
        %v2284 = vsel %vm2276, %v2237, %v2239
        %v2285 = vsel %vm2276, %v2239, %v2241
        %v2286 = vsel %vm2276, %v2241, %v2243
        %v2287 = vsel %vm2276, %v2243, %v2245
        %v2288 = vsel %vm2276, %v2245, %v2247
        %v2289 = vsel %vm2276, %v2249, %v2251
        %v2290 = vsel %vm2276, %v2251, %v2253
        %v2291 = vsel %vm2276, %v2253, %v2255
        %v2292 = vsel %vm2276, %v2255, %v2257
        %v2293 = vsel %vm2276, %v2257, %v2259
        %v2294 = vsel %vm2276, %v2259, %v2261
        %v2295 = vsel %vm2276, %v2263, %v2265
        %v2296 = vsel %vm2276, %v2265, %v2267
        %v2297 = vsel %vm2276, %v2267, %v2269
        %v2298 = vsel %vm2276, %v2269, %v2271
        %v2299 = vsel %vm2276, %v2271, %v2273
        %v2300 = vsel %vm2276, %v2273, %v2275
        %v2325 = vadd.f32 %v2124, %v2277
        %v2326 = vadd.f32 %v2125, %v2278
        %v2327 = vadd.f32 %v2126, %v2279
        %v2328 = vadd.f32 %v2127, %v2280
        %v2329 = vadd.f32 %v2128, %v2281
        %v2330 = vadd.f32 %v2129, %v2282
        %v2331 = vadd.f32 %v2130, %v2283
        %v2332 = vadd.f32 %v2131, %v2284
        %v2333 = vadd.f32 %v2132, %v2285
        %v2334 = vadd.f32 %v2133, %v2286
        %v2335 = vadd.f32 %v2134, %v2287
        %v2336 = vadd.f32 %v2135, %v2288
        %v2337 = vadd.f32 %v2136, %v2289
        %v2338 = vadd.f32 %v2137, %v2290
        %v2339 = vadd.f32 %v2138, %v2291
        %v2340 = vadd.f32 %v2139, %v2292
        %v2341 = vadd.f32 %v2140, %v2293
        %v2342 = vadd.f32 %v2141, %v2294
        %v2343 = vadd.f32 %v2142, %v2295
        %v2344 = vadd.f32 %v2143, %v2296
        %v2345 = vadd.f32 %v2144, %v2297
        %v2346 = vadd.f32 %v2145, %v2298
        %v2347 = vadd.f32 %v2146, %v2299
        %v2348 = vadd.f32 %v2147, %v2300
        %2350 = vset.pattern.permute.xlu0 0
        %2351 = vperm.xlu0 %2350, %v386
        %v2352 = vpop.permute.xlu0 %2351
        %2355 = vset.pattern.permute.xlu0 0
        %2356 = vperm.xlu0 %2355, %v387
        %v2357 = vpop.permute.xlu0 %2356
        %2360 = vset.pattern.permute.xlu0 0
        %2361 = vperm.xlu0 %2360, %v388
        %v2362 = vpop.permute.xlu0 %2361
        %2365 = vset.pattern.permute.xlu0 0
        %2366 = vperm.xlu0 %2365, %v389
        %v2367 = vpop.permute.xlu0 %2366
        %v2369 = vadd.f32 %v2325, %v2352
        %v2370 = vadd.f32 %v2326, %v2352
        %v2371 = vadd.f32 %v2327, %v2352
        %v2372 = vadd.f32 %v2328, %v2352
        %v2373 = vadd.f32 %v2329, %v2352
        %v2374 = vadd.f32 %v2330, %v2352
        %v2375 = vadd.f32 %v2331, %v2357
        %v2376 = vadd.f32 %v2332, %v2357
        %v2377 = vadd.f32 %v2333, %v2357
        %v2378 = vadd.f32 %v2334, %v2357
        %v2379 = vadd.f32 %v2335, %v2357
        %v2380 = vadd.f32 %v2336, %v2357
        %v2381 = vadd.f32 %v2337, %v2362
        %v2382 = vadd.f32 %v2338, %v2362
        %v2383 = vadd.f32 %v2339, %v2362
        %v2384 = vadd.f32 %v2340, %v2362
        %v2385 = vadd.f32 %v2341, %v2362
        %v2386 = vadd.f32 %v2342, %v2362
        %v2387 = vadd.f32 %v2343, %v2367
        %v2388 = vadd.f32 %v2344, %v2367
        %v2389 = vadd.f32 %v2345, %v2367
        %v2390 = vadd.f32 %v2346, %v2367
        %v2391 = vadd.f32 %v2347, %v2367
        %v2392 = vadd.f32 %v2348, %v2367
        %v2393 = vmax.f32 %v2369, 0.0
        %v2394 = vmax.f32 %v2370, 0.0
        %v2395 = vmax.f32 %v2371, 0.0
        %v2396 = vmax.f32 %v2372, 0.0
        %v2397 = vmax.f32 %v2373, 0.0
        %v2398 = vmax.f32 %v2374, 0.0
        %v2399 = vmax.f32 %v2375, 0.0
        %v2400 = vmax.f32 %v2376, 0.0
        %v2401 = vmax.f32 %v2377, 0.0
        %v2402 = vmax.f32 %v2378, 0.0
        %v2403 = vmax.f32 %v2379, 0.0
        %v2404 = vmax.f32 %v2380, 0.0
        %v2405 = vmax.f32 %v2381, 0.0
        %v2406 = vmax.f32 %v2382, 0.0
        %v2407 = vmax.f32 %v2383, 0.0
        %v2408 = vmax.f32 %v2384, 0.0
        %v2409 = vmax.f32 %v2385, 0.0
        %v2410 = vmax.f32 %v2386, 0.0
        %v2411 = vmax.f32 %v2387, 0.0
        %v2412 = vmax.f32 %v2388, 0.0
        %v2413 = vmax.f32 %v2389, 0.0
        %v2414 = vmax.f32 %v2390, 0.0
        %v2415 = vmax.f32 %v2391, 0.0
        %v2416 = vmax.f32 %v2392, 0.0
        %2441 = vrot.lane.b32.xlu0 %v2393, 100
        %v2442 = vpop.permute.xlu0 %2441
        %2443 = vrot.lane.b32.xlu0 %v2394, 100
        %v2444 = vpop.permute.xlu0 %2443
        %2445 = vrot.lane.b32.xlu0 %v2395, 100
        %v2446 = vpop.permute.xlu0 %2445
        %2447 = vrot.lane.b32.xlu0 %v2396, 100
        %v2448 = vpop.permute.xlu0 %2447
        %2449 = vrot.lane.b32.xlu0 %v2397, 100
        %v2450 = vpop.permute.xlu0 %2449
        %2451 = vrot.lane.b32.xlu0 %v2398, 100
        %v2452 = vpop.permute.xlu0 %2451
        %2453 = vrot.lane.b32.xlu0 %v2399, 100
        %v2454 = vpop.permute.xlu0 %2453
        %2455 = vrot.lane.b32.xlu0 %v2400, 100
        %v2456 = vpop.permute.xlu0 %2455
        %2457 = vrot.lane.b32.xlu0 %v2401, 100
        %v2458 = vpop.permute.xlu0 %2457
        %2459 = vrot.lane.b32.xlu0 %v2402, 100
        %v2460 = vpop.permute.xlu0 %2459
        %2461 = vrot.lane.b32.xlu0 %v2403, 100
        %v2462 = vpop.permute.xlu0 %2461
        %2463 = vrot.lane.b32.xlu0 %v2404, 100
        %v2464 = vpop.permute.xlu0 %2463
        %2465 = vrot.lane.b32.xlu0 %v2405, 100
        %v2466 = vpop.permute.xlu0 %2465
        %2467 = vrot.lane.b32.xlu0 %v2406, 100
        %v2468 = vpop.permute.xlu0 %2467
        %2469 = vrot.lane.b32.xlu0 %v2407, 100
        %v2470 = vpop.permute.xlu0 %2469
        %2471 = vrot.lane.b32.xlu0 %v2408, 100
        %v2472 = vpop.permute.xlu0 %2471
        %2473 = vrot.lane.b32.xlu0 %v2409, 100
        %v2474 = vpop.permute.xlu0 %2473
        %2475 = vrot.lane.b32.xlu0 %v2410, 100
        %v2476 = vpop.permute.xlu0 %2475
        %2477 = vrot.lane.b32.xlu0 %v2411, 100
        %v2478 = vpop.permute.xlu0 %2477
        %2479 = vrot.lane.b32.xlu0 %v2412, 100
        %v2480 = vpop.permute.xlu0 %2479
        %2481 = vrot.lane.b32.xlu0 %v2413, 100
        %v2482 = vpop.permute.xlu0 %2481
        %2483 = vrot.lane.b32.xlu0 %v2414, 100
        %v2484 = vpop.permute.xlu0 %2483
        %2485 = vrot.lane.b32.xlu0 %v2415, 100
        %v2486 = vpop.permute.xlu0 %2485
        %2487 = vrot.lane.b32.xlu0 %v2416, 100
        %v2488 = vpop.permute.xlu0 %2487
        %v2489 = vsel %vm1310, %v2442, %v2444
        %v2490 = vsel %vm1310, %v2444, %v2446
        %v2491 = vsel %vm1310, %v2446, %v2448
        %v2492 = vsel %vm1310, %v2448, %v2450
        %v2493 = vsel %vm1310, %v2450, %v2452
        %v2494 = vsel %vm1310, %v2454, %v2456
        %v2495 = vsel %vm1310, %v2456, %v2458
        %v2496 = vsel %vm1310, %v2458, %v2460
        %v2497 = vsel %vm1310, %v2460, %v2462
        %v2498 = vsel %vm1310, %v2462, %v2464
        %v2499 = vsel %vm1310, %v2466, %v2468
        %v2500 = vsel %vm1310, %v2468, %v2470
        %v2501 = vsel %vm1310, %v2470, %v2472
        %v2502 = vsel %vm1310, %v2472, %v2474
        %v2503 = vsel %vm1310, %v2474, %v2476
        %v2504 = vsel %vm1310, %v2478, %v2480
        %v2505 = vsel %vm1310, %v2480, %v2482
        %v2506 = vsel %vm1310, %v2482, %v2484
        %v2507 = vsel %vm1310, %v2484, %v2486
        %v2508 = vsel %vm1310, %v2486, %v2488
        %v2533 = vmax.f32 %v2393, %v2489
        %v2534 = vmax.f32 %v2394, %v2490
        %v2535 = vmax.f32 %v2395, %v2491
        %v2536 = vmax.f32 %v2396, %v2492
        %v2537 = vmax.f32 %v2397, %v2493
        %v2538 = vmax.f32 %v2398, %v2452
        %v2539 = vmax.f32 %v2399, %v2494
        %v2540 = vmax.f32 %v2400, %v2495
        %v2541 = vmax.f32 %v2401, %v2496
        %v2542 = vmax.f32 %v2402, %v2497
        %v2543 = vmax.f32 %v2403, %v2498
        %v2544 = vmax.f32 %v2404, %v2464
        %v2545 = vmax.f32 %v2405, %v2499
        %v2546 = vmax.f32 %v2406, %v2500
        %v2547 = vmax.f32 %v2407, %v2501
        %v2548 = vmax.f32 %v2408, %v2502
        %v2549 = vmax.f32 %v2409, %v2503
        %v2550 = vmax.f32 %v2410, %v2476
        %v2551 = vmax.f32 %v2411, %v2504
        %v2552 = vmax.f32 %v2412, %v2505
        %v2553 = vmax.f32 %v2413, %v2506
        %v2554 = vmax.f32 %v2414, %v2507
        %v2555 = vmax.f32 %v2415, %v2508
        %v2556 = vmax.f32 %v2416, %v2488
        %2581 = vrot.lane.b32.xlu0 %v2533, 127
        %v2582 = vpop.permute.xlu0 %2581
        %2583 = vrot.lane.b32.xlu0 %v2534, 127
        %v2584 = vpop.permute.xlu0 %2583
        %2585 = vrot.lane.b32.xlu0 %v2535, 127
        %v2586 = vpop.permute.xlu0 %2585
        %2587 = vrot.lane.b32.xlu0 %v2536, 127
        %v2588 = vpop.permute.xlu0 %2587
        %2589 = vrot.lane.b32.xlu0 %v2537, 127
        %v2590 = vpop.permute.xlu0 %2589
        %2591 = vrot.lane.b32.xlu0 %v2538, 127
        %v2592 = vpop.permute.xlu0 %2591
        %2593 = vrot.lane.b32.xlu0 %v2539, 127
        %v2594 = vpop.permute.xlu0 %2593
        %2595 = vrot.lane.b32.xlu0 %v2540, 127
        %v2596 = vpop.permute.xlu0 %2595
        %2597 = vrot.lane.b32.xlu0 %v2541, 127
        %v2598 = vpop.permute.xlu0 %2597
        %2599 = vrot.lane.b32.xlu0 %v2542, 127
        %v2600 = vpop.permute.xlu0 %2599
        %2601 = vrot.lane.b32.xlu0 %v2543, 127
        %v2602 = vpop.permute.xlu0 %2601
        %2603 = vrot.lane.b32.xlu0 %v2544, 127
        %v2604 = vpop.permute.xlu0 %2603
        %2605 = vrot.lane.b32.xlu0 %v2545, 127
        %v2606 = vpop.permute.xlu0 %2605
        %2607 = vrot.lane.b32.xlu0 %v2546, 127
        %v2608 = vpop.permute.xlu0 %2607
        %2609 = vrot.lane.b32.xlu0 %v2547, 127
        %v2610 = vpop.permute.xlu0 %2609
        %2611 = vrot.lane.b32.xlu0 %v2548, 127
        %v2612 = vpop.permute.xlu0 %2611
        %2613 = vrot.lane.b32.xlu0 %v2549, 127
        %v2614 = vpop.permute.xlu0 %2613
        %2615 = vrot.lane.b32.xlu0 %v2550, 127
        %v2616 = vpop.permute.xlu0 %2615
        %2617 = vrot.lane.b32.xlu0 %v2551, 127
        %v2618 = vpop.permute.xlu0 %2617
        %2619 = vrot.lane.b32.xlu0 %v2552, 127
        %v2620 = vpop.permute.xlu0 %2619
        %2621 = vrot.lane.b32.xlu0 %v2553, 127
        %v2622 = vpop.permute.xlu0 %2621
        %2623 = vrot.lane.b32.xlu0 %v2554, 127
        %v2624 = vpop.permute.xlu0 %2623
        %2625 = vrot.lane.b32.xlu0 %v2555, 127
        %v2626 = vpop.permute.xlu0 %2625
        %2627 = vrot.lane.b32.xlu0 %v2556, 127
        %v2628 = vpop.permute.xlu0 %2627
        %v2629 = vsel %vm948, %v2582, %v2584
        %v2630 = vsel %vm948, %v2584, %v2586
        %v2631 = vsel %vm948, %v2586, %v2588
        %v2632 = vsel %vm948, %v2588, %v2590
        %v2633 = vsel %vm948, %v2590, %v2592
        %v2634 = vsel %vm948, %v2594, %v2596
        %v2635 = vsel %vm948, %v2596, %v2598
        %v2636 = vsel %vm948, %v2598, %v2600
        %v2637 = vsel %vm948, %v2600, %v2602
        %v2638 = vsel %vm948, %v2602, %v2604
        %v2639 = vsel %vm948, %v2606, %v2608
        %v2640 = vsel %vm948, %v2608, %v2610
        %v2641 = vsel %vm948, %v2610, %v2612
        %v2642 = vsel %vm948, %v2612, %v2614
        %v2643 = vsel %vm948, %v2614, %v2616
        %v2644 = vsel %vm948, %v2618, %v2620
        %v2645 = vsel %vm948, %v2620, %v2622
        %v2646 = vsel %vm948, %v2622, %v2624
        %v2647 = vsel %vm948, %v2624, %v2626
        %v2648 = vsel %vm948, %v2626, %v2628
        %v2673 = vmax.f32 %v2533, %v2629
        %v2674 = vmax.f32 %v2534, %v2630
        %v2675 = vmax.f32 %v2535, %v2631
        %v2676 = vmax.f32 %v2536, %v2632
        %v2677 = vmax.f32 %v2537, %v2633
        %v2678 = vmax.f32 %v2538, %v2592
        %v2679 = vmax.f32 %v2539, %v2634
        %v2680 = vmax.f32 %v2540, %v2635
        %v2681 = vmax.f32 %v2541, %v2636
        %v2682 = vmax.f32 %v2542, %v2637
        %v2683 = vmax.f32 %v2543, %v2638
        %v2684 = vmax.f32 %v2544, %v2604
        %v2685 = vmax.f32 %v2545, %v2639
        %v2686 = vmax.f32 %v2546, %v2640
        %v2687 = vmax.f32 %v2547, %v2641
        %v2688 = vmax.f32 %v2548, %v2642
        %v2689 = vmax.f32 %v2549, %v2643
        %v2690 = vmax.f32 %v2550, %v2616
        %v2691 = vmax.f32 %v2551, %v2644
        %v2692 = vmax.f32 %v2552, %v2645
        %v2693 = vmax.f32 %v2553, %v2646
        %v2694 = vmax.f32 %v2554, %v2647
        %v2695 = vmax.f32 %v2555, %v2648
        %v2696 = vmax.f32 %v2556, %v2628
        %v2697 = vpack.c.bf16 %v2679, %v2673
        %v2698 = vpack.c.bf16 %v2680, %v2674
        %v2699 = vpack.c.bf16 %v2681, %v2675
        %v2700 = vpack.c.bf16 %v2682, %v2676
        %v2701 = vpack.c.bf16 %v2683, %v2677
        %v2702 = vpack.c.bf16 %v2684, %v2678
        %v2703 = vpack.c.bf16 %v2691, %v2685
        %v2704 = vpack.c.bf16 %v2692, %v2686
        %v2705 = vpack.c.bf16 %v2693, %v2687
        %v2706 = vpack.c.bf16 %v2694, %v2688
        %v2707 = vpack.c.bf16 %v2695, %v2689
        %v2708 = vpack.c.bf16 %v2696, %v2690
        %v2797 = vunpack.c.l.b16 %v414
        %v2798 = vunpack.c.h.b16 %v414
        %v2799 = vunpack.c.l.b16 %v415
        %v2800 = vunpack.c.h.b16 %v415
        %v2801 = vunpack.c.l.b16 %v416
        %v2802 = vunpack.c.h.b16 %v416
        %v2803 = vunpack.c.l.b16 %v417
        %v2804 = vunpack.c.h.b16 %v417
        %v2805 = vunpack.c.l.b16 %v418
        %v2806 = vunpack.c.h.b16 %v418
        %v2807 = vunpack.c.l.b16 %v419
        %v2808 = vunpack.c.h.b16 %v419
        %v2809 = vunpack.c.l.b16 %v420
        %v2810 = vunpack.c.h.b16 %v420
        %v2811 = vunpack.c.l.b16 %v421
        %v2812 = vunpack.c.h.b16 %v421
        %v2813 = vunpack.c.l.b16 %v422
        %v2814 = vunpack.c.h.b16 %v422
        %v2815 = vunpack.c.l.b16 %v423
        %v2816 = vunpack.c.h.b16 %v423
        %v2817 = vunpack.c.l.b16 %v424
        %v2818 = vunpack.c.h.b16 %v424
        %v2819 = vunpack.c.l.b16 %v425
        %v2820 = vunpack.c.h.b16 %v425
        %v2821 = vunpack.c.l.b16 %v426
        %v2822 = vunpack.c.h.b16 %v426
        %v2823 = vunpack.c.l.b16 %v427
        %v2824 = vunpack.c.h.b16 %v427
        %v2825 = vunpack.c.l.b16 %v428
        %v2826 = vunpack.c.h.b16 %v428
        %v2827 = vunpack.c.l.b16 %v429
        %v2828 = vunpack.c.h.b16 %v429
        %v2829 = vunpack.c.l.b16 %v430
        %v2830 = vunpack.c.h.b16 %v430
        %v2831 = vunpack.c.l.b16 %v431
        %v2832 = vunpack.c.h.b16 %v431
        %v2833 = vunpack.c.l.b16 %v432
        %v2834 = vunpack.c.h.b16 %v432
        %v2835 = vunpack.c.l.b16 %v433
        %v2836 = vunpack.c.h.b16 %v433
        %v2837 = vunpack.c.l.b16 %v434
        %v2838 = vunpack.c.h.b16 %v434
        %v2839 = vunpack.c.l.b16 %v435
        %v2840 = vunpack.c.h.b16 %v435
        %v2841 = vunpack.c.l.b16 %v436
        %v2842 = vunpack.c.h.b16 %v436
        %v2843 = vunpack.c.l.b16 %v437
        %v2844 = vunpack.c.h.b16 %v437
        %v2845 = vunpack.c.l.b16 %v438
        %v2846 = vunpack.c.h.b16 %v438
        %v2847 = vunpack.c.l.b16 %v439
        %v2848 = vunpack.c.h.b16 %v439
        %v2849 = vunpack.c.l.b16 %v440
        %v2850 = vunpack.c.h.b16 %v440
        %v2851 = vunpack.c.l.b16 %v441
        %v2852 = vunpack.c.h.b16 %v441
        %v2853 = vunpack.c.l.b16 %v442
        %v2854 = vunpack.c.h.b16 %v442
        %v2855 = vunpack.c.l.b16 %v443
        %v2856 = vunpack.c.h.b16 %v443
        %v2857 = vunpack.c.l.b16 %v444
        %v2858 = vunpack.c.h.b16 %v444
        %v2859 = vunpack.c.l.b16 %v445
        %v2860 = vunpack.c.h.b16 %v445
        %v2861 = vunpack.c.l.b16 %v446
        %v2862 = vunpack.c.h.b16 %v446
        %v2863 = vunpack.c.l.b16 %v447
        %v2864 = vunpack.c.h.b16 %v447
        %v2865 = vunpack.c.l.b16 %v448
        %v2866 = vunpack.c.h.b16 %v448
        %v2867 = vunpack.c.l.b16 %v449
        %v2868 = vunpack.c.h.b16 %v449
        %v2869 = vunpack.c.l.b16 %v450
        %v2870 = vunpack.c.h.b16 %v450
        %v2871 = vunpack.c.l.b16 %v451
        %v2872 = vunpack.c.h.b16 %v451
        %v2873 = vunpack.c.l.b16 %v452
        %v2874 = vunpack.c.h.b16 %v452
        %v2875 = vunpack.c.l.b16 %v453
        %v2876 = vunpack.c.h.b16 %v453
        %v2877 = vunpack.c.l.b16 %v454
        %v2878 = vunpack.c.h.b16 %v454
        %v2879 = vunpack.c.l.b16 %v455
        %v2880 = vunpack.c.h.b16 %v455
        %v2881 = vunpack.c.l.b16 %v456
        %v2882 = vunpack.c.h.b16 %v456
        %v2883 = vunpack.c.l.b16 %v457
        %v2884 = vunpack.c.h.b16 %v457
        %v2885 = vunpack.c.l.b16 %v458
        %v2886 = vunpack.c.h.b16 %v458
        %v2887 = vunpack.c.l.b16 %v459
        %v2888 = vunpack.c.h.b16 %v459
        %v2889 = vunpack.c.l.b16 %v460
        %v2890 = vunpack.c.h.b16 %v460
        %v2891 = vunpack.c.l.b16 %v461
        %v2892 = vunpack.c.h.b16 %v461
        %v2893 = vunpack.c.l.b16 %v462
        %v2894 = vunpack.c.h.b16 %v462
        %v2895 = vunpack.c.l.b16 %v463
        %v2896 = vunpack.c.h.b16 %v463
        %v2897 = vunpack.c.l.b16 %v464
        %v2898 = vunpack.c.h.b16 %v464
        %v2899 = vunpack.c.l.b16 %v465
        %v2900 = vunpack.c.h.b16 %v465
        %v2901 = vunpack.c.l.b16 %v466
        %v2902 = vunpack.c.h.b16 %v466
        %v2903 = vunpack.c.l.b16 %v467
        %v2904 = vunpack.c.h.b16 %v467
        %v2905 = vunpack.c.l.b16 %v468
        %v2906 = vunpack.c.h.b16 %v468
        %v2907 = vunpack.c.l.b16 %v469
        %v2908 = vunpack.c.h.b16 %v469
        %v2909 = vunpack.c.l.b16 %v470
        %v2910 = vunpack.c.h.b16 %v470
        %v2911 = vunpack.c.l.b16 %v471
        %v2912 = vunpack.c.h.b16 %v471
        %v2913 = vunpack.c.l.b16 %v472
        %v2914 = vunpack.c.h.b16 %v472
        %v2915 = vunpack.c.l.b16 %v473
        %v2916 = vunpack.c.h.b16 %v473
        %v2917 = vunpack.c.l.b16 %v474
        %v2918 = vunpack.c.h.b16 %v474
        %v2919 = vunpack.c.l.b16 %v475
        %v2920 = vunpack.c.h.b16 %v475
        %v2921 = vunpack.c.l.b16 %v476
        %v2922 = vunpack.c.h.b16 %v476
        %v2923 = vunpack.c.l.b16 %v477
        %v2924 = vunpack.c.h.b16 %v477
        %v2925 = vunpack.c.l.b16 %v478
        %v2926 = vunpack.c.h.b16 %v478
        %v2927 = vunpack.c.l.b16 %v479
        %v2928 = vunpack.c.h.b16 %v479
        %v2929 = vunpack.c.l.b16 %v480
        %v2930 = vunpack.c.h.b16 %v480
        %v2931 = vunpack.c.l.b16 %v481
        %v2932 = vunpack.c.h.b16 %v481
        %v2933 = vunpack.c.l.b16 %v482
        %v2934 = vunpack.c.h.b16 %v482
        %v2935 = vunpack.c.l.b16 %v483
        %v2936 = vunpack.c.h.b16 %v483
        %v2937 = vunpack.c.l.b16 %v484
        %v2938 = vunpack.c.h.b16 %v484
        %v2939 = vunpack.c.l.b16 %v485
        %v2940 = vunpack.c.h.b16 %v485
        %v2941 = vunpack.c.l.b16 %v486
        %v2942 = vunpack.c.h.b16 %v486
        %v2943 = vunpack.c.l.b16 %v487
        %v2944 = vunpack.c.h.b16 %v487
        %v2945 = vunpack.c.l.b16 %v488
        %v2946 = vunpack.c.h.b16 %v488
        %v2947 = vunpack.c.l.b16 %v489
        %v2948 = vunpack.c.h.b16 %v489
        %v2949 = vunpack.c.l.b16 %v490
        %v2950 = vunpack.c.h.b16 %v490
        %v2951 = vunpack.c.l.b16 %v491
        %v2952 = vunpack.c.h.b16 %v491
        %v2953 = vunpack.c.l.b16 %v492
        %v2954 = vunpack.c.h.b16 %v492
        %v2955 = vunpack.c.l.b16 %v493
        %v2956 = vunpack.c.h.b16 %v493
        %v2957 = vunpack.c.l.b16 %v494
        %v2958 = vunpack.c.h.b16 %v494
        %v2959 = vunpack.c.l.b16 %v495
        %v2960 = vunpack.c.h.b16 %v495
        %v2961 = vunpack.c.l.b16 %v496
        %v2962 = vunpack.c.h.b16 %v496
        %v2963 = vunpack.c.l.b16 %v497
        %v2964 = vunpack.c.h.b16 %v497
        %v2965 = vunpack.c.l.b16 %v498
        %v2966 = vunpack.c.h.b16 %v498
        %v2967 = vunpack.c.l.b16 %v499
        %v2968 = vunpack.c.h.b16 %v499
        %v2969 = vunpack.c.l.b16 %v500
        %v2970 = vunpack.c.h.b16 %v500
        %v2971 = vunpack.c.l.b16 %v501
        %v2972 = vunpack.c.h.b16 %v501
        %v2973 = vpack.c.b16 %v2799, %v2797
        %v2974 = vpack.c.b16 %v2800, %v2798
        %v2975 = vpack.c.b16 %v2803, %v2801
        %v2976 = vpack.c.b16 %v2804, %v2802
        %v2977 = vpack.c.b16 %v2807, %v2805
        %v2978 = vpack.c.b16 %v2808, %v2806
        %v2979 = vpack.c.b16 %v2811, %v2809
        %v2980 = vpack.c.b16 %v2812, %v2810
        %v2981 = vpack.c.b16 %v2815, %v2813
        %v2982 = vpack.c.b16 %v2816, %v2814
        %v2983 = vpack.c.b16 %v2819, %v2817
        %v2984 = vpack.c.b16 %v2820, %v2818
        %v2985 = vpack.c.b16 %v2823, %v2821
        %v2986 = vpack.c.b16 %v2824, %v2822
        %v2987 = vpack.c.b16 %v2827, %v2825
        %v2988 = vpack.c.b16 %v2828, %v2826
        %v2989 = vpack.c.b16 %v2831, %v2829
        %v2990 = vpack.c.b16 %v2832, %v2830
        %v2991 = vpack.c.b16 %v2835, %v2833
        %v2992 = vpack.c.b16 %v2836, %v2834
        %v2993 = vpack.c.b16 %v2839, %v2837
        %v2994 = vpack.c.b16 %v2840, %v2838
        %v2995 = vpack.c.b16 %v2843, %v2841
        %v2996 = vpack.c.b16 %v2844, %v2842
        %v2997 = vpack.c.b16 %v2847, %v2845
        %v2998 = vpack.c.b16 %v2848, %v2846
        %v2999 = vpack.c.b16 %v2851, %v2849
        %v3000 = vpack.c.b16 %v2852, %v2850
        %v3001 = vpack.c.b16 %v2855, %v2853
        %v3002 = vpack.c.b16 %v2856, %v2854
        %v3003 = vpack.c.b16 %v2859, %v2857
        %v3004 = vpack.c.b16 %v2860, %v2858
        %v3005 = vpack.c.b16 %v2863, %v2861
        %v3006 = vpack.c.b16 %v2864, %v2862
        %v3007 = vpack.c.b16 %v2867, %v2865
        %v3008 = vpack.c.b16 %v2868, %v2866
        %v3009 = vpack.c.b16 %v2871, %v2869
        %v3010 = vpack.c.b16 %v2872, %v2870
        %v3011 = vpack.c.b16 %v2875, %v2873
        %v3012 = vpack.c.b16 %v2876, %v2874
        %v3013 = vpack.c.b16 %v2879, %v2877
        %v3014 = vpack.c.b16 %v2880, %v2878
        %v3015 = vpack.c.b16 %v2883, %v2881
        %v3016 = vpack.c.b16 %v2884, %v2882
        %v3017 = vpack.c.b16 %v2887, %v2885
        %v3018 = vpack.c.b16 %v2888, %v2886
        %v3019 = vpack.c.b16 %v2891, %v2889
        %v3020 = vpack.c.b16 %v2892, %v2890
        %v3021 = vpack.c.b16 %v2895, %v2893
        %v3022 = vpack.c.b16 %v2896, %v2894
        %v3023 = vpack.c.b16 %v2899, %v2897
        %v3024 = vpack.c.b16 %v2900, %v2898
        %v3025 = vpack.c.b16 %v2903, %v2901
        %v3026 = vpack.c.b16 %v2904, %v2902
        %v3027 = vpack.c.b16 %v2907, %v2905
        %v3028 = vpack.c.b16 %v2908, %v2906
        %v3029 = vpack.c.b16 %v2911, %v2909
        %v3030 = vpack.c.b16 %v2912, %v2910
        %v3031 = vpack.c.b16 %v2915, %v2913
        %v3032 = vpack.c.b16 %v2916, %v2914
        %v3033 = vpack.c.b16 %v2919, %v2917
        %v3034 = vpack.c.b16 %v2920, %v2918
        %v3035 = vpack.c.b16 %v2923, %v2921
        %v3036 = vpack.c.b16 %v2924, %v2922
        %v3037 = vpack.c.b16 %v2927, %v2925
        %v3038 = vpack.c.b16 %v2928, %v2926
        %v3039 = vpack.c.b16 %v2931, %v2929
        %v3040 = vpack.c.b16 %v2932, %v2930
        %v3041 = vpack.c.b16 %v2935, %v2933
        %v3042 = vpack.c.b16 %v2936, %v2934
        %v3043 = vpack.c.b16 %v2939, %v2937
        %v3044 = vpack.c.b16 %v2940, %v2938
        %v3045 = vpack.c.b16 %v2943, %v2941
        %v3046 = vpack.c.b16 %v2944, %v2942
        %v3047 = vpack.c.b16 %v2947, %v2945
        %v3048 = vpack.c.b16 %v2948, %v2946
        %v3049 = vpack.c.b16 %v2951, %v2949
        %v3050 = vpack.c.b16 %v2952, %v2950
        %v3051 = vpack.c.b16 %v2955, %v2953
        %v3052 = vpack.c.b16 %v2956, %v2954
        %v3053 = vpack.c.b16 %v2959, %v2957
        %v3054 = vpack.c.b16 %v2960, %v2958
        %v3055 = vpack.c.b16 %v2963, %v2961
        %v3056 = vpack.c.b16 %v2964, %v2962
        %v3057 = vpack.c.b16 %v2967, %v2965
        %v3058 = vpack.c.b16 %v2968, %v2966
        %v3059 = vpack.c.b16 %v2971, %v2969
        %v3060 = vpack.c.b16 %v2972, %v2970
        %vm3147 = vcmask 465920
        %v3149 = vsel %vm3147, %v2702, 0
        %v3152 = vsel %vm3147, %v2708, 0
        %vm3154 = vcmask 1043456
        %vm3155 = vcmask 1044480
        %v3156 = vsel %vm3154, 4294967295, 65535
        %v3157 = vsel %vm3155, %v3156, 0
        %v3159 = vand.u32 %v3059, %v3157
        %v3162 = vand.u32 %v3060, %v3157
        %3164 = vmatprep.subr.bf16.mxu0 %v2974
        %3165 = vmatpush1.bf16.msra.mxu0 %v2973
        %3166 = vmatprep.subr.bf16.mxu0 %v2976
        %3167 = vmatpush1.bf16.msra.mxu0 %v2975
        %3168 = vmatprep.subr.bf16.mxu0 %v2978
        %3169 = vmatpush1.bf16.msra.mxu0 %v2977
        %3170 = vmatprep.subr.bf16.mxu0 %v2980
        %3171 = vmatpush1.bf16.msra.mxu0 %v2979
        %3172 = vmatprep.subr.bf16.mxu0 %v2982
        %3173 = vmatpush1.bf16.msra.mxu0 %v2981
        %3174 = vmatprep.subr.bf16.mxu0 %v2984
        %3175 = vmatpush1.bf16.msra.mxu0 %v2983
        %3176 = vmatprep.subr.bf16.mxu0 %v2986
        %3177 = vmatpush1.bf16.msra.mxu0 %v2985
        %3178 = vmatprep.subr.bf16.mxu0 %v2988
        %3179 = vmatpush1.bf16.msra.mxu0 %v2987
        %3180 = vmatprep.subr.bf16.mxu0 %v2990
        %3181 = vmatpush1.bf16.msra.mxu0 %v2989
        %3182 = vmatprep.subr.bf16.mxu0 %v2992
        %3183 = vmatpush1.bf16.msra.mxu0 %v2991
        %3184 = vmatprep.subr.bf16.mxu0 %v2994
        %3185 = vmatpush1.bf16.msra.mxu0 %v2993
        %3186 = vmatprep.subr.bf16.mxu0 %v2996
        %3187 = vmatpush1.bf16.msra.mxu0 %v2995
        %3188 = vmatprep.subr.bf16.mxu0 %v2998
        %3189 = vmatpush1.bf16.msra.mxu0 %v2997
        %3190 = vmatprep.subr.bf16.mxu0 %v3000
        %3191 = vmatpush1.bf16.msra.mxu0 %v2999
        %3192 = vmatprep.subr.bf16.mxu0 %v3002
        %3193 = vmatpush1.bf16.msra.mxu0 %v3001
        %3194 = vmatprep.subr.bf16.mxu0 %v3004
        %3195 = vmatpush1.bf16.msra.mxu0 %v3003
        %3196 = vmatprep.mubr.bf16.mxu0 %v2698
        %3197 = vmatmul.mubr.bf16.gmra.mrb[0].mxu0 %v2697
        %v3198 = vpop.f32.mrb[0].mxu0
        %v3199 = vadd.f32 0.0, %v3198
        %v3200 = vpop.f32.mrb[0].mxu0
        %v3201 = vadd.f32 0.0, %v3200
        %v3202 = vpop.f32.mrb[0].mxu0
        %v3203 = vadd.f32 0.0, %v3202
        %v3204 = vpop.f32.mrb[0].mxu0
        %v3205 = vadd.f32 0.0, %v3204
        %3206 = vmatprep.mubr.bf16.mxu0 %v2704
        %3207 = vmatmul.mubr.bf16.gmra.mrb[0].mxu0 %v2703
        %v3208 = vpop.f32.mrb[0].mxu0
        %v3209 = vadd.f32 0.0, %v3208
        %v3210 = vpop.f32.mrb[0].mxu0
        %v3211 = vadd.f32 0.0, %v3210
        %v3212 = vpop.f32.mrb[0].mxu0
        %v3213 = vadd.f32 0.0, %v3212
        %v3214 = vpop.f32.mrb[0].mxu0
        %v3215 = vadd.f32 0.0, %v3214
        %3216 = vdwg.mxu0
        %3217 = vmatprep.subr.bf16.mxu0 %v3006
        %3218 = vmatpush1.bf16.msra.mxu0 %v3005
        %3219 = vmatprep.subr.bf16.mxu0 %v3008
        %3220 = vmatpush1.bf16.msra.mxu0 %v3007
        %3221 = vmatprep.subr.bf16.mxu0 %v3010
        %3222 = vmatpush1.bf16.msra.mxu0 %v3009
        %3223 = vmatprep.subr.bf16.mxu0 %v3012
        %3224 = vmatpush1.bf16.msra.mxu0 %v3011
        %3225 = vmatprep.subr.bf16.mxu0 %v3014
        %3226 = vmatpush1.bf16.msra.mxu0 %v3013
        %3227 = vmatprep.subr.bf16.mxu0 %v3016
        %3228 = vmatpush1.bf16.msra.mxu0 %v3015
        %3229 = vmatprep.subr.bf16.mxu0 %v3018
        %3230 = vmatpush1.bf16.msra.mxu0 %v3017
        %3231 = vmatprep.subr.bf16.mxu0 %v3020
        %3232 = vmatpush1.bf16.msra.mxu0 %v3019
        %3233 = vmatprep.subr.bf16.mxu0 %v3022
        %3234 = vmatpush1.bf16.msra.mxu0 %v3021
        %3235 = vmatprep.subr.bf16.mxu0 %v3024
        %3236 = vmatpush1.bf16.msra.mxu0 %v3023
        %3237 = vmatprep.subr.bf16.mxu0 %v3026
        %3238 = vmatpush1.bf16.msra.mxu0 %v3025
        %3239 = vmatprep.subr.bf16.mxu0 %v3028
        %3240 = vmatpush1.bf16.msra.mxu0 %v3027
        %3241 = vmatprep.subr.bf16.mxu0 %v3030
        %3242 = vmatpush1.bf16.msra.mxu0 %v3029
        %3243 = vmatprep.subr.bf16.mxu0 %v3032
        %3244 = vmatpush1.bf16.msra.mxu0 %v3031
        %3245 = vmatprep.subr.bf16.mxu0 %v3034
        %3246 = vmatpush1.bf16.msra.mxu0 %v3033
        %3247 = vmatprep.subr.bf16.mxu0 %v3036
        %3248 = vmatpush1.bf16.msra.mxu0 %v3035
        %3249 = vmatprep.mubr.bf16.mxu0 %v2700
        %3250 = vmatmul.mubr.bf16.gmra.mrb[0].mxu0 %v2699
        %v3251 = vpop.f32.mrb[0].mxu0
        %v3252 = vadd.f32 %v3199, %v3251
        %v3253 = vpop.f32.mrb[0].mxu0
        %v3254 = vadd.f32 %v3201, %v3253
        %v3255 = vpop.f32.mrb[0].mxu0
        %v3256 = vadd.f32 %v3203, %v3255
        %v3257 = vpop.f32.mrb[0].mxu0
        %v3258 = vadd.f32 %v3205, %v3257
        %3259 = vmatprep.mubr.bf16.mxu0 %v2706
        %3260 = vmatmul.mubr.bf16.gmra.mrb[0].mxu0 %v2705
        %v3261 = vpop.f32.mrb[0].mxu0
        %v3262 = vadd.f32 %v3209, %v3261
        %v3263 = vpop.f32.mrb[0].mxu0
        %v3264 = vadd.f32 %v3211, %v3263
        %v3265 = vpop.f32.mrb[0].mxu0
        %v3266 = vadd.f32 %v3213, %v3265
        %v3267 = vpop.f32.mrb[0].mxu0
        %v3268 = vadd.f32 %v3215, %v3267
        %3269 = vdwg.mxu0
        %3270 = vmatprep.subr.bf16.mxu0 %v3038
        %3271 = vmatpush1.bf16.msra.mxu0 %v3037
        %3272 = vmatprep.subr.bf16.mxu0 %v3040
        %3273 = vmatpush1.bf16.msra.mxu0 %v3039
        %3274 = vmatprep.subr.bf16.mxu0 %v3042
        %3275 = vmatpush1.bf16.msra.mxu0 %v3041
        %3276 = vmatprep.subr.bf16.mxu0 %v3044
        %3277 = vmatpush1.bf16.msra.mxu0 %v3043
        %3278 = vmatprep.subr.bf16.mxu0 %v3046
        %3279 = vmatpush1.bf16.msra.mxu0 %v3045
        %3280 = vmatprep.subr.bf16.mxu0 %v3048
        %3281 = vmatpush1.bf16.msra.mxu0 %v3047
        %3282 = vmatprep.subr.bf16.mxu0 %v3050
        %3283 = vmatpush1.bf16.msra.mxu0 %v3049
        %3284 = vmatprep.subr.bf16.mxu0 %v3052
        %3285 = vmatpush1.bf16.msra.mxu0 %v3051
        %3286 = vmatprep.subr.bf16.mxu0 %v3054
        %3287 = vmatpush1.bf16.msra.mxu0 %v3053
        %3288 = vmatprep.subr.bf16.mxu0 %v3056
        %3289 = vmatpush1.bf16.msra.mxu0 %v3055
        %3290 = vmatprep.subr.bf16.mxu0 %v3058
        %3291 = vmatpush1.bf16.msra.mxu0 %v3057
        %3292 = vmatprep.subr.bf16.mxu0 %v3162
        %3293 = vmatpush1.bf16.msra.mxu0 %v3159
        %3294 = vmatprep.subr.bf16.mxu0 0
        %3295 = vmatpush1.bf16.msra.mxu0 0
        %3296 = vmatprep.subr.bf16.mxu0 0
        %3297 = vmatpush1.bf16.msra.mxu0 0
        %3298 = vmatprep.subr.bf16.mxu0 0
        %3299 = vmatpush1.bf16.msra.mxu0 0
        %3300 = vmatprep.subr.bf16.mxu0 0
        %3301 = vmatpush1.bf16.msra.mxu0 0
        %3302 = vmatprep.mubr.bf16.mxu0 %v3149
        %3303 = vmatmul.mubr.bf16.gmra.mrb[0].mxu0 %v2701
        %v3304 = vpop.f32.mrb[0].mxu0
        %v3305 = vadd.f32 %v3252, %v3304
        %v3306 = vpop.f32.mrb[0].mxu0
        %v3307 = vadd.f32 %v3254, %v3306
        %v3308 = vpop.f32.mrb[0].mxu0
        %v3309 = vadd.f32 %v3256, %v3308
        %v3310 = vpop.f32.mrb[0].mxu0
        %v3311 = vadd.f32 %v3258, %v3310
        %3312 = vmatprep.mubr.bf16.mxu0 %v3152
        %3313 = vmatmul.mubr.bf16.gmra.mrb[0].mxu0 %v2707
        %v3314 = vpop.f32.mrb[0].mxu0
        %v3315 = vadd.f32 %v3262, %v3314
        %v3316 = vpop.f32.mrb[0].mxu0
        %v3317 = vadd.f32 %v3264, %v3316
        %v3318 = vpop.f32.mrb[0].mxu0
        %v3319 = vadd.f32 %v3266, %v3318
        %v3320 = vpop.f32.mrb[0].mxu0
        %v3321 = vadd.f32 %v3268, %v3320
        %3322 = vdwg.mxu0
        %v3323 = vpack.c.bf16 %v3309, %v3305
        %v3324 = vpack.c.bf16 %v3311, %v3307
        %v3325 = vpack.c.bf16 %v3319, %v3315
        %v3326 = vpack.c.bf16 %v3321, %v3317
        %v3335 = vunpack.c.l.b16 %v390
        %v3336 = vunpack.c.l.b16 %v392
        %v3337 = vunpack.c.l.b16 %v394
        %v3338 = vunpack.c.l.b16 %v396
        %v3339 = vunpack.c.l.b16 %v398
        %v3340 = vunpack.c.l.b16 %v400
        %v3341 = vunpack.c.l.b16 %v402
        %v3342 = vunpack.c.l.b16 %v404
        %v3343 = vpack.c.b16 %v3336, %v3335
        %v3344 = vpack.c.b16 %v3338, %v3337
        %v3345 = vpack.c.b16 %v3340, %v3339
        %v3346 = vpack.c.b16 %v3342, %v3341
        %3347 = vrot.lane.b32.xlu0 %v3343, 96
        %v3348 = vpop.permute.xlu0 %3347
        %3349 = vrot.lane.b32.xlu0 %v3344, 96
        %v3350 = vpop.permute.xlu0 %3349
        %3351 = vrot.lane.b32.xlu0 %v3345, 96
        %v3352 = vpop.permute.xlu0 %3351
        %3353 = vrot.lane.b32.xlu0 %v3346, 96
        %v3354 = vpop.permute.xlu0 %3353
        %3359 = vrot.lane.b32.xlu0 %v3323, 127
        %v3360 = vpop.permute.xlu0 %3359
        %3361 = vrot.lane.b32.xlu0 %v3324, 127
        %v3362 = vpop.permute.xlu0 %3361
        %3363 = vrot.lane.b32.xlu0 %v3325, 127
        %v3364 = vpop.permute.xlu0 %3363
        %3365 = vrot.lane.b32.xlu0 %v3326, 127
        %v3366 = vpop.permute.xlu0 %3365
        %vm3367 = vcmask 1039360
        %v3368 = vsel %vm3367, %v3360, %v3362
        %v3369 = vsel %vm3367, %v3364, %v3366
        %vm3374 = vcmask 261120
        %v3376 = vsel %vm3374, %v3348, 0
        %v3379 = vsel %vm3374, %v3350, 0
        %v3382 = vsel %vm3374, %v3352, 0
        %v3385 = vsel %vm3374, %v3354, 0
        %3387 = vmatprep.subr.bf16.mxu0 %v3362
        %3388 = vmatpush1.bf16.msra.mxu0 %v3368
        %3389 = vmatprep.subr.bf16.mxu0 %v3366
        %3390 = vmatpush1.bf16.msra.mxu0 %v3369
        %3391 = vmatprep.subr.bf16.mxu0 0
        %3392 = vmatpush1.bf16.msra.mxu0 0
        %3393 = vmatprep.subr.bf16.mxu0 0
        %3394 = vmatpush1.bf16.msra.mxu0 0
        %3395 = vmatprep.subr.bf16.mxu0 0
        %3396 = vmatpush1.bf16.msra.mxu0 0
        %3397 = vmatprep.subr.bf16.mxu0 0
        %3398 = vmatpush1.bf16.msra.mxu0 0
        %3399 = vmatprep.subr.bf16.mxu0 0
        %3400 = vmatpush1.bf16.msra.mxu0 0
        %3401 = vmatprep.subr.bf16.mxu0 0
        %3402 = vmatpush1.bf16.msra.mxu0 0
        %3403 = vmatprep.subr.bf16.mxu0 0
        %3404 = vmatpush1.bf16.msra.mxu0 0
        %3405 = vmatprep.subr.bf16.mxu0 0
        %3406 = vmatpush1.bf16.msra.mxu0 0
        %3407 = vmatprep.subr.bf16.mxu0 0
        %3408 = vmatpush1.bf16.msra.mxu0 0
        %3409 = vmatprep.subr.bf16.mxu0 0
        %3410 = vmatpush1.bf16.msra.mxu0 0
        %3411 = vmatprep.subr.bf16.mxu0 0
        %3412 = vmatpush1.bf16.msra.mxu0 0
        %3413 = vmatprep.subr.bf16.mxu0 0
        %3414 = vmatpush1.bf16.msra.mxu0 0
        %3415 = vmatprep.subr.bf16.mxu0 0
        %3416 = vmatpush1.bf16.msra.mxu0 0
        %3417 = vmatprep.subr.bf16.mxu0 0
        %3418 = vmatpush1.bf16.msra.mxu0 0
        %3419 = vmatprep.mubr.bf16.mxu0 0
        %3420 = vmatmul.mubr.bf16.gmra.mrb[0].mxu0 %v3376
        %v3421 = vpop.f32.mrb[0].mxu0
        %v3422 = vadd.f32 0.0, %v3421
        %v3423 = vpop.f32.mrb[0].mxu0
        %v3424 = vadd.f32 0.0, %v3423
        %v3425 = vpop.f32.mrb[0].mxu0
        %v3426 = vadd.f32 0.0, %v3425
        %v3427 = vpop.f32.mrb[0].mxu0
        %v3428 = vadd.f32 0.0, %v3427
        %3429 = vmatprep.mubr.bf16.mxu0 0
        %3430 = vmatmul.mubr.bf16.gmra.mrb[0].mxu0 %v3379
        %v3431 = vpop.f32.mrb[0].mxu0
        %v3432 = vadd.f32 0.0, %v3431
        %v3433 = vpop.f32.mrb[0].mxu0
        %v3434 = vadd.f32 0.0, %v3433
        %v3435 = vpop.f32.mrb[0].mxu0
        %v3436 = vadd.f32 0.0, %v3435
        %v3437 = vpop.f32.mrb[0].mxu0
        %v3438 = vadd.f32 0.0, %v3437
        %3439 = vmatprep.mubr.bf16.mxu0 0
        %3440 = vmatmul.mubr.bf16.gmra.mrb[0].mxu0 %v3382
        %v3441 = vpop.f32.mrb[0].mxu0
        %v3442 = vadd.f32 0.0, %v3441
        %v3443 = vpop.f32.mrb[0].mxu0
        %v3444 = vadd.f32 0.0, %v3443
        %v3445 = vpop.f32.mrb[0].mxu0
        %v3446 = vadd.f32 0.0, %v3445
        %v3447 = vpop.f32.mrb[0].mxu0
        %v3448 = vadd.f32 0.0, %v3447
        %3449 = vmatprep.mubr.bf16.mxu0 0
        %3450 = vmatmul.mubr.bf16.gmra.mrb[0].mxu0 %v3385
        %v3451 = vpop.f32.mrb[0].mxu0
        %v3452 = vadd.f32 0.0, %v3451
        %v3453 = vpop.f32.mrb[0].mxu0
        %v3454 = vadd.f32 0.0, %v3453
        %v3455 = vpop.f32.mrb[0].mxu0
        %v3456 = vadd.f32 0.0, %v3455
        %v3457 = vpop.f32.mrb[0].mxu0
        %v3458 = vadd.f32 0.0, %v3457
        %3459 = vdwg.mxu0
        %v3461 = vsel %vm3374, %v3343, 0
        %v3464 = vsel %vm3374, %v3344, 0
        %v3467 = vsel %vm3374, %v3345, 0
        %v3470 = vsel %vm3374, %v3346, 0
        %3472 = vmatprep.subr.bf16.mxu0 %v3324
        %3473 = vmatpush1.bf16.msra.mxu0 %v3323
        %3474 = vmatprep.subr.bf16.mxu0 %v3326
        %3475 = vmatpush1.bf16.msra.mxu0 %v3325
        %3476 = vmatprep.subr.bf16.mxu0 0
        %3477 = vmatpush1.bf16.msra.mxu0 0
        %3478 = vmatprep.subr.bf16.mxu0 0
        %3479 = vmatpush1.bf16.msra.mxu0 0
        %3480 = vmatprep.subr.bf16.mxu0 0
        %3481 = vmatpush1.bf16.msra.mxu0 0
        %3482 = vmatprep.subr.bf16.mxu0 0
        %3483 = vmatpush1.bf16.msra.mxu0 0
        %3484 = vmatprep.subr.bf16.mxu0 0
        %3485 = vmatpush1.bf16.msra.mxu0 0
        %3486 = vmatprep.subr.bf16.mxu0 0
        %3487 = vmatpush1.bf16.msra.mxu0 0
        %3488 = vmatprep.subr.bf16.mxu0 0
        %3489 = vmatpush1.bf16.msra.mxu0 0
        %3490 = vmatprep.subr.bf16.mxu0 0
        %3491 = vmatpush1.bf16.msra.mxu0 0
        %3492 = vmatprep.subr.bf16.mxu0 0
        %3493 = vmatpush1.bf16.msra.mxu0 0
        %3494 = vmatprep.subr.bf16.mxu0 0
        %3495 = vmatpush1.bf16.msra.mxu0 0
        %3496 = vmatprep.subr.bf16.mxu0 0
        %3497 = vmatpush1.bf16.msra.mxu0 0
        %3498 = vmatprep.subr.bf16.mxu0 0
        %3499 = vmatpush1.bf16.msra.mxu0 0
        %3500 = vmatprep.subr.bf16.mxu0 0
        %3501 = vmatpush1.bf16.msra.mxu0 0
        %3502 = vmatprep.subr.bf16.mxu0 0
        %3503 = vmatpush1.bf16.msra.mxu0 0
        %3504 = vmatprep.mubr.bf16.mxu0 0
        %3505 = vmatmul.mubr.bf16.gmra.mrb[0].mxu0 %v3461
        %v3506 = vpop.f32.mrb[0].mxu0
        %v3507 = vadd.f32 %v3422, %v3506
        %v3508 = vpop.f32.mrb[0].mxu0
        %v3509 = vadd.f32 %v3424, %v3508
        %v3510 = vpop.f32.mrb[0].mxu0
        %v3511 = vadd.f32 %v3426, %v3510
        %v3512 = vpop.f32.mrb[0].mxu0
        %v3513 = vadd.f32 %v3428, %v3512
        %3514 = vmatprep.mubr.bf16.mxu0 0
        %3515 = vmatmul.mubr.bf16.gmra.mrb[0].mxu0 %v3464
        %v3516 = vpop.f32.mrb[0].mxu0
        %v3517 = vadd.f32 %v3432, %v3516
        %v3518 = vpop.f32.mrb[0].mxu0
        %v3519 = vadd.f32 %v3434, %v3518
        %v3520 = vpop.f32.mrb[0].mxu0
        %v3521 = vadd.f32 %v3436, %v3520
        %v3522 = vpop.f32.mrb[0].mxu0
        %v3523 = vadd.f32 %v3438, %v3522
        %3524 = vmatprep.mubr.bf16.mxu0 0
        %3525 = vmatmul.mubr.bf16.gmra.mrb[0].mxu0 %v3467
        %v3526 = vpop.f32.mrb[0].mxu0
        %v3527 = vadd.f32 %v3442, %v3526
        %v3528 = vpop.f32.mrb[0].mxu0
        %v3529 = vadd.f32 %v3444, %v3528
        %v3530 = vpop.f32.mrb[0].mxu0
        %v3531 = vadd.f32 %v3446, %v3530
        %v3532 = vpop.f32.mrb[0].mxu0
        %v3533 = vadd.f32 %v3448, %v3532
        %3534 = vmatprep.mubr.bf16.mxu0 0
        %3535 = vmatmul.mubr.bf16.gmra.mrb[0].mxu0 %v3470
        %v3536 = vpop.f32.mrb[0].mxu0
        %v3537 = vadd.f32 %v3452, %v3536
        %v3538 = vpop.f32.mrb[0].mxu0
        %v3539 = vadd.f32 %v3454, %v3538
        %v3540 = vpop.f32.mrb[0].mxu0
        %v3541 = vadd.f32 %v3456, %v3540
        %v3542 = vpop.f32.mrb[0].mxu0
        %v3543 = vadd.f32 %v3458, %v3542
        %3544 = vdwg.mxu0
        %3545 = vrot.lane.b32.xlu0 %v3343, 64
        %v3546 = vpop.permute.xlu0 %3545
        %3547 = vrot.lane.b32.xlu0 %v3344, 64
        %v3548 = vpop.permute.xlu0 %3547
        %3549 = vrot.lane.b32.xlu0 %v3345, 64
        %v3550 = vpop.permute.xlu0 %3549
        %3551 = vrot.lane.b32.xlu0 %v3346, 64
        %v3552 = vpop.permute.xlu0 %3551
        %3553 = vrot.lane.b32.xlu0 %v3323, 126
        %v3554 = vpop.permute.xlu0 %3553
        %3555 = vrot.lane.b32.xlu0 %v3324, 126
        %v3556 = vpop.permute.xlu0 %3555
        %3557 = vrot.lane.b32.xlu0 %v3325, 126
        %v3558 = vpop.permute.xlu0 %3557
        %3559 = vrot.lane.b32.xlu0 %v3326, 126
        %v3560 = vpop.permute.xlu0 %3559
        %vm3561 = vcmask 1031168
        %v3562 = vsel %vm3561, %v3554, %v3556
        %v3563 = vsel %vm3561, %v3558, %v3560
        %v3569 = vsel %vm3374, %v3546, 0
        %v3572 = vsel %vm3374, %v3548, 0
        %v3575 = vsel %vm3374, %v3550, 0
        %v3578 = vsel %vm3374, %v3552, 0
        %3580 = vmatprep.subr.bf16.mxu0 %v3556
        %3581 = vmatpush1.bf16.msra.mxu0 %v3562
        %3582 = vmatprep.subr.bf16.mxu0 %v3560
        %3583 = vmatpush1.bf16.msra.mxu0 %v3563
        %3584 = vmatprep.subr.bf16.mxu0 0
        %3585 = vmatpush1.bf16.msra.mxu0 0
        %3586 = vmatprep.subr.bf16.mxu0 0
        %3587 = vmatpush1.bf16.msra.mxu0 0
        %3588 = vmatprep.subr.bf16.mxu0 0
        %3589 = vmatpush1.bf16.msra.mxu0 0
        %3590 = vmatprep.subr.bf16.mxu0 0
        %3591 = vmatpush1.bf16.msra.mxu0 0
        %3592 = vmatprep.subr.bf16.mxu0 0
        %3593 = vmatpush1.bf16.msra.mxu0 0
        %3594 = vmatprep.subr.bf16.mxu0 0
        %3595 = vmatpush1.bf16.msra.mxu0 0
        %3596 = vmatprep.subr.bf16.mxu0 0
        %3597 = vmatpush1.bf16.msra.mxu0 0
        %3598 = vmatprep.subr.bf16.mxu0 0
        %3599 = vmatpush1.bf16.msra.mxu0 0
        %3600 = vmatprep.subr.bf16.mxu0 0
        %3601 = vmatpush1.bf16.msra.mxu0 0
        %3602 = vmatprep.subr.bf16.mxu0 0
        %3603 = vmatpush1.bf16.msra.mxu0 0
        %3604 = vmatprep.subr.bf16.mxu0 0
        %3605 = vmatpush1.bf16.msra.mxu0 0
        %3606 = vmatprep.subr.bf16.mxu0 0
        %3607 = vmatpush1.bf16.msra.mxu0 0
        %3608 = vmatprep.subr.bf16.mxu0 0
        %3609 = vmatpush1.bf16.msra.mxu0 0
        %3610 = vmatprep.subr.bf16.mxu0 0
        %3611 = vmatpush1.bf16.msra.mxu0 0
        %3612 = vmatprep.mubr.bf16.mxu0 0
        %3613 = vmatmul.mubr.bf16.gmra.mrb[0].mxu0 %v3569
        %v3614 = vpop.f32.mrb[0].mxu0
        %v3615 = vadd.f32 0.0, %v3614
        %v3616 = vpop.f32.mrb[0].mxu0
        %v3617 = vadd.f32 0.0, %v3616
        %v3618 = vpop.f32.mrb[0].mxu0
        %v3619 = vadd.f32 0.0, %v3618
        %v3620 = vpop.f32.mrb[0].mxu0
        %v3621 = vadd.f32 0.0, %v3620
        %3622 = vmatprep.mubr.bf16.mxu0 0
        %3623 = vmatmul.mubr.bf16.gmra.mrb[0].mxu0 %v3572
        %v3624 = vpop.f32.mrb[0].mxu0
        %v3625 = vadd.f32 0.0, %v3624
        %v3626 = vpop.f32.mrb[0].mxu0
        %v3627 = vadd.f32 0.0, %v3626
        %v3628 = vpop.f32.mrb[0].mxu0
        %v3629 = vadd.f32 0.0, %v3628
        %v3630 = vpop.f32.mrb[0].mxu0
        %v3631 = vadd.f32 0.0, %v3630
        %3632 = vmatprep.mubr.bf16.mxu0 0
        %3633 = vmatmul.mubr.bf16.gmra.mrb[0].mxu0 %v3575
        %v3634 = vpop.f32.mrb[0].mxu0
        %v3635 = vadd.f32 0.0, %v3634
        %v3636 = vpop.f32.mrb[0].mxu0
        %v3637 = vadd.f32 0.0, %v3636
        %v3638 = vpop.f32.mrb[0].mxu0
        %v3639 = vadd.f32 0.0, %v3638
        %v3640 = vpop.f32.mrb[0].mxu0
        %v3641 = vadd.f32 0.0, %v3640
        %3642 = vmatprep.mubr.bf16.mxu0 0
        %3643 = vmatmul.mubr.bf16.gmra.mrb[0].mxu0 %v3578
        %v3644 = vpop.f32.mrb[0].mxu0
        %v3645 = vadd.f32 0.0, %v3644
        %v3646 = vpop.f32.mrb[0].mxu0
        %v3647 = vadd.f32 0.0, %v3646
        %v3648 = vpop.f32.mrb[0].mxu0
        %v3649 = vadd.f32 0.0, %v3648
        %v3650 = vpop.f32.mrb[0].mxu0
        %v3651 = vadd.f32 0.0, %v3650
        %3652 = vdwg.mxu0
        %v3653 = vadd.f32 %v3507, %v3615
        %v3654 = vadd.f32 %v3509, %v3617
        %v3655 = vadd.f32 %v3511, %v3619
        %v3656 = vadd.f32 %v3513, %v3621
        %v3657 = vadd.f32 %v3517, %v3625
        %v3658 = vadd.f32 %v3519, %v3627
        %v3659 = vadd.f32 %v3521, %v3629
        %v3660 = vadd.f32 %v3523, %v3631
        %v3661 = vadd.f32 %v3527, %v3635
        %v3662 = vadd.f32 %v3529, %v3637
        %v3663 = vadd.f32 %v3531, %v3639
        %v3664 = vadd.f32 %v3533, %v3641
        %v3665 = vadd.f32 %v3537, %v3645
        %v3666 = vadd.f32 %v3539, %v3647
        %v3667 = vadd.f32 %v3541, %v3649
        %v3668 = vadd.f32 %v3543, %v3651
        %3669 = vrot.lane.b32.xlu0 %v3343, 32
        %v3670 = vpop.permute.xlu0 %3669
        %3671 = vrot.lane.b32.xlu0 %v3344, 32
        %v3672 = vpop.permute.xlu0 %3671
        %3673 = vrot.lane.b32.xlu0 %v3345, 32
        %v3674 = vpop.permute.xlu0 %3673
        %3675 = vrot.lane.b32.xlu0 %v3346, 32
        %v3676 = vpop.permute.xlu0 %3675
        %3677 = vrot.lane.b32.xlu0 %v3323, 115
        %v3678 = vpop.permute.xlu0 %3677
        %3679 = vrot.lane.b32.xlu0 %v3324, 115
        %v3680 = vpop.permute.xlu0 %3679
        %3681 = vrot.lane.b32.xlu0 %v3325, 115
        %v3682 = vpop.permute.xlu0 %3681
        %3683 = vrot.lane.b32.xlu0 %v3326, 115
        %v3684 = vpop.permute.xlu0 %3683
        %vm3685 = vcmask 941056
        %v3686 = vsel %vm3685, %v3678, %v3680
        %v3687 = vsel %vm3685, %v3682, %v3684
        %v3693 = vsel %vm3374, %v3670, 0
        %v3696 = vsel %vm3374, %v3672, 0
        %v3699 = vsel %vm3374, %v3674, 0
        %v3702 = vsel %vm3374, %v3676, 0
        %3704 = vmatprep.subr.bf16.mxu0 %v3680
        %3705 = vmatpush1.bf16.msra.mxu0 %v3686
        %3706 = vmatprep.subr.bf16.mxu0 %v3684
        %3707 = vmatpush1.bf16.msra.mxu0 %v3687
        %3708 = vmatprep.subr.bf16.mxu0 0
        %3709 = vmatpush1.bf16.msra.mxu0 0
        %3710 = vmatprep.subr.bf16.mxu0 0
        %3711 = vmatpush1.bf16.msra.mxu0 0
        %3712 = vmatprep.subr.bf16.mxu0 0
        %3713 = vmatpush1.bf16.msra.mxu0 0
        %3714 = vmatprep.subr.bf16.mxu0 0
        %3715 = vmatpush1.bf16.msra.mxu0 0
        %3716 = vmatprep.subr.bf16.mxu0 0
        %3717 = vmatpush1.bf16.msra.mxu0 0
        %3718 = vmatprep.subr.bf16.mxu0 0
        %3719 = vmatpush1.bf16.msra.mxu0 0
        %3720 = vmatprep.subr.bf16.mxu0 0
        %3721 = vmatpush1.bf16.msra.mxu0 0
        %3722 = vmatprep.subr.bf16.mxu0 0
        %3723 = vmatpush1.bf16.msra.mxu0 0
        %3724 = vmatprep.subr.bf16.mxu0 0
        %3725 = vmatpush1.bf16.msra.mxu0 0
        %3726 = vmatprep.subr.bf16.mxu0 0
        %3727 = vmatpush1.bf16.msra.mxu0 0
        %3728 = vmatprep.subr.bf16.mxu0 0
        %3729 = vmatpush1.bf16.msra.mxu0 0
        %3730 = vmatprep.subr.bf16.mxu0 0
        %3731 = vmatpush1.bf16.msra.mxu0 0
        %3732 = vmatprep.subr.bf16.mxu0 0
        %3733 = vmatpush1.bf16.msra.mxu0 0
        %3734 = vmatprep.subr.bf16.mxu0 0
        %3735 = vmatpush1.bf16.msra.mxu0 0
        %3736 = vmatprep.mubr.bf16.mxu0 0
        %3737 = vmatmul.mubr.bf16.gmra.mrb[0].mxu0 %v3693
        %v3738 = vpop.f32.mrb[0].mxu0
        %v3739 = vadd.f32 0.0, %v3738
        %v3740 = vpop.f32.mrb[0].mxu0
        %v3741 = vadd.f32 0.0, %v3740
        %v3742 = vpop.f32.mrb[0].mxu0
        %v3743 = vadd.f32 0.0, %v3742
        %v3744 = vpop.f32.mrb[0].mxu0
        %v3745 = vadd.f32 0.0, %v3744
        %3746 = vmatprep.mubr.bf16.mxu0 0
        %3747 = vmatmul.mubr.bf16.gmra.mrb[0].mxu0 %v3696
        %v3748 = vpop.f32.mrb[0].mxu0
        %v3749 = vadd.f32 0.0, %v3748
        %v3750 = vpop.f32.mrb[0].mxu0
        %v3751 = vadd.f32 0.0, %v3750
        %v3752 = vpop.f32.mrb[0].mxu0
        %v3753 = vadd.f32 0.0, %v3752
        %v3754 = vpop.f32.mrb[0].mxu0
        %v3755 = vadd.f32 0.0, %v3754
        %3756 = vmatprep.mubr.bf16.mxu0 0
        %3757 = vmatmul.mubr.bf16.gmra.mrb[0].mxu0 %v3699
        %v3758 = vpop.f32.mrb[0].mxu0
        %v3759 = vadd.f32 0.0, %v3758
        %v3760 = vpop.f32.mrb[0].mxu0
        %v3761 = vadd.f32 0.0, %v3760
        %v3762 = vpop.f32.mrb[0].mxu0
        %v3763 = vadd.f32 0.0, %v3762
        %v3764 = vpop.f32.mrb[0].mxu0
        %v3765 = vadd.f32 0.0, %v3764
        %3766 = vmatprep.mubr.bf16.mxu0 0
        %3767 = vmatmul.mubr.bf16.gmra.mrb[0].mxu0 %v3702
        %v3768 = vpop.f32.mrb[0].mxu0
        %v3769 = vadd.f32 0.0, %v3768
        %v3770 = vpop.f32.mrb[0].mxu0
        %v3771 = vadd.f32 0.0, %v3770
        %v3772 = vpop.f32.mrb[0].mxu0
        %v3773 = vadd.f32 0.0, %v3772
        %v3774 = vpop.f32.mrb[0].mxu0
        %v3775 = vadd.f32 0.0, %v3774
        %3776 = vdwg.mxu0
        %v3777 = vadd.f32 %v3653, %v3739
        %v3778 = vadd.f32 %v3654, %v3741
        %v3779 = vadd.f32 %v3655, %v3743
        %v3780 = vadd.f32 %v3656, %v3745
        %v3781 = vadd.f32 %v3657, %v3749
        %v3782 = vadd.f32 %v3658, %v3751
        %v3783 = vadd.f32 %v3659, %v3753
        %v3784 = vadd.f32 %v3660, %v3755
        %v3785 = vadd.f32 %v3661, %v3759
        %v3786 = vadd.f32 %v3662, %v3761
        %v3787 = vadd.f32 %v3663, %v3763
        %v3788 = vadd.f32 %v3664, %v3765
        %v3789 = vadd.f32 %v3665, %v3769
        %v3790 = vadd.f32 %v3666, %v3771
        %v3791 = vadd.f32 %v3667, %v3773
        %v3792 = vadd.f32 %v3668, %v3775
        %v3793 = vunpack.c.h.b16 %v390
        %v3794 = vunpack.c.h.b16 %v392
        %v3795 = vunpack.c.h.b16 %v394
        %v3796 = vunpack.c.h.b16 %v396
        %v3797 = vunpack.c.h.b16 %v398
        %v3798 = vunpack.c.h.b16 %v400
        %v3799 = vunpack.c.h.b16 %v402
        %v3800 = vunpack.c.h.b16 %v404
        %v3801 = vpack.c.b16 %v3794, %v3793
        %v3802 = vpack.c.b16 %v3796, %v3795
        %v3803 = vpack.c.b16 %v3798, %v3797
        %v3804 = vpack.c.b16 %v3800, %v3799
        %3805 = vrot.lane.b32.xlu0 %v3323, 114
        %v3806 = vpop.permute.xlu0 %3805
        %3807 = vrot.lane.b32.xlu0 %v3324, 114
        %v3808 = vpop.permute.xlu0 %3807
        %3809 = vrot.lane.b32.xlu0 %v3325, 114
        %v3810 = vpop.permute.xlu0 %3809
        %3811 = vrot.lane.b32.xlu0 %v3326, 114
        %v3812 = vpop.permute.xlu0 %3811
        %vm3813 = vcmask 932864
        %v3814 = vsel %vm3813, %v3806, %v3808
        %v3815 = vsel %vm3813, %v3810, %v3812
        %v3821 = vsel %vm3374, %v3801, 0
        %v3824 = vsel %vm3374, %v3802, 0
        %v3827 = vsel %vm3374, %v3803, 0
        %v3830 = vsel %vm3374, %v3804, 0
        %3832 = vmatprep.subr.bf16.mxu0 %v3808
        %3833 = vmatpush1.bf16.msra.mxu0 %v3814
        %3834 = vmatprep.subr.bf16.mxu0 %v3812
        %3835 = vmatpush1.bf16.msra.mxu0 %v3815
        %3836 = vmatprep.subr.bf16.mxu0 0
        %3837 = vmatpush1.bf16.msra.mxu0 0
        %3838 = vmatprep.subr.bf16.mxu0 0
        %3839 = vmatpush1.bf16.msra.mxu0 0
        %3840 = vmatprep.subr.bf16.mxu0 0
        %3841 = vmatpush1.bf16.msra.mxu0 0
        %3842 = vmatprep.subr.bf16.mxu0 0
        %3843 = vmatpush1.bf16.msra.mxu0 0
        %3844 = vmatprep.subr.bf16.mxu0 0
        %3845 = vmatpush1.bf16.msra.mxu0 0
        %3846 = vmatprep.subr.bf16.mxu0 0
        %3847 = vmatpush1.bf16.msra.mxu0 0
        %3848 = vmatprep.subr.bf16.mxu0 0
        %3849 = vmatpush1.bf16.msra.mxu0 0
        %3850 = vmatprep.subr.bf16.mxu0 0
        %3851 = vmatpush1.bf16.msra.mxu0 0
        %3852 = vmatprep.subr.bf16.mxu0 0
        %3853 = vmatpush1.bf16.msra.mxu0 0
        %3854 = vmatprep.subr.bf16.mxu0 0
        %3855 = vmatpush1.bf16.msra.mxu0 0
        %3856 = vmatprep.subr.bf16.mxu0 0
        %3857 = vmatpush1.bf16.msra.mxu0 0
        %3858 = vmatprep.subr.bf16.mxu0 0
        %3859 = vmatpush1.bf16.msra.mxu0 0
        %3860 = vmatprep.subr.bf16.mxu0 0
        %3861 = vmatpush1.bf16.msra.mxu0 0
        %3862 = vmatprep.subr.bf16.mxu0 0
        %3863 = vmatpush1.bf16.msra.mxu0 0
        %3864 = vmatprep.mubr.bf16.mxu0 0
        %3865 = vmatmul.mubr.bf16.gmra.mrb[0].mxu0 %v3821
        %v3866 = vpop.f32.mrb[0].mxu0
        %v3867 = vadd.f32 0.0, %v3866
        %v3868 = vpop.f32.mrb[0].mxu0
        %v3869 = vadd.f32 0.0, %v3868
        %v3870 = vpop.f32.mrb[0].mxu0
        %v3871 = vadd.f32 0.0, %v3870
        %v3872 = vpop.f32.mrb[0].mxu0
        %v3873 = vadd.f32 0.0, %v3872
        %3874 = vmatprep.mubr.bf16.mxu0 0
        %3875 = vmatmul.mubr.bf16.gmra.mrb[0].mxu0 %v3824
        %v3876 = vpop.f32.mrb[0].mxu0
        %v3877 = vadd.f32 0.0, %v3876
        %v3878 = vpop.f32.mrb[0].mxu0
        %v3879 = vadd.f32 0.0, %v3878
        %v3880 = vpop.f32.mrb[0].mxu0
        %v3881 = vadd.f32 0.0, %v3880
        %v3882 = vpop.f32.mrb[0].mxu0
        %v3883 = vadd.f32 0.0, %v3882
        %3884 = vmatprep.mubr.bf16.mxu0 0
        %3885 = vmatmul.mubr.bf16.gmra.mrb[0].mxu0 %v3827
        %v3886 = vpop.f32.mrb[0].mxu0
        %v3887 = vadd.f32 0.0, %v3886
        %v3888 = vpop.f32.mrb[0].mxu0
        %v3889 = vadd.f32 0.0, %v3888
        %v3890 = vpop.f32.mrb[0].mxu0
        %v3891 = vadd.f32 0.0, %v3890
        %v3892 = vpop.f32.mrb[0].mxu0
        %v3893 = vadd.f32 0.0, %v3892
        %3894 = vmatprep.mubr.bf16.mxu0 0
        %3895 = vmatmul.mubr.bf16.gmra.mrb[0].mxu0 %v3830
        %v3896 = vpop.f32.mrb[0].mxu0
        %v3897 = vadd.f32 0.0, %v3896
        %v3898 = vpop.f32.mrb[0].mxu0
        %v3899 = vadd.f32 0.0, %v3898
        %v3900 = vpop.f32.mrb[0].mxu0
        %v3901 = vadd.f32 0.0, %v3900
        %v3902 = vpop.f32.mrb[0].mxu0
        %v3903 = vadd.f32 0.0, %v3902
        %3904 = vdwg.mxu0
        %v3905 = vadd.f32 %v3777, %v3867
        %v3906 = vadd.f32 %v3778, %v3869
        %v3907 = vadd.f32 %v3779, %v3871
        %v3908 = vadd.f32 %v3780, %v3873
        %v3909 = vadd.f32 %v3781, %v3877
        %v3910 = vadd.f32 %v3782, %v3879
        %v3911 = vadd.f32 %v3783, %v3881
        %v3912 = vadd.f32 %v3784, %v3883
        %v3913 = vadd.f32 %v3785, %v3887
        %v3914 = vadd.f32 %v3786, %v3889
        %v3915 = vadd.f32 %v3787, %v3891
        %v3916 = vadd.f32 %v3788, %v3893
        %v3917 = vadd.f32 %v3789, %v3897
        %v3918 = vadd.f32 %v3790, %v3899
        %v3919 = vadd.f32 %v3791, %v3901
        %v3920 = vadd.f32 %v3792, %v3903
        %3921 = vrot.lane.b32.xlu0 %v3801, 96
        %v3922 = vpop.permute.xlu0 %3921
        %3923 = vrot.lane.b32.xlu0 %v3802, 96
        %v3924 = vpop.permute.xlu0 %3923
        %3925 = vrot.lane.b32.xlu0 %v3803, 96
        %v3926 = vpop.permute.xlu0 %3925
        %3927 = vrot.lane.b32.xlu0 %v3804, 96
        %v3928 = vpop.permute.xlu0 %3927
        %3929 = vrot.lane.b32.xlu0 %v3323, 113
        %v3930 = vpop.permute.xlu0 %3929
        %3931 = vrot.lane.b32.xlu0 %v3324, 113
        %v3932 = vpop.permute.xlu0 %3931
        %3933 = vrot.lane.b32.xlu0 %v3325, 113
        %v3934 = vpop.permute.xlu0 %3933
        %3935 = vrot.lane.b32.xlu0 %v3326, 113
        %v3936 = vpop.permute.xlu0 %3935
        %vm3937 = vcmask 924672
        %v3938 = vsel %vm3937, %v3930, %v3932
        %v3939 = vsel %vm3937, %v3934, %v3936
        %v3945 = vsel %vm3374, %v3922, 0
        %v3948 = vsel %vm3374, %v3924, 0
        %v3951 = vsel %vm3374, %v3926, 0
        %v3954 = vsel %vm3374, %v3928, 0
        %3956 = vmatprep.subr.bf16.mxu0 %v3932
        %3957 = vmatpush1.bf16.msra.mxu0 %v3938
        %3958 = vmatprep.subr.bf16.mxu0 %v3936
        %3959 = vmatpush1.bf16.msra.mxu0 %v3939
        %3960 = vmatprep.subr.bf16.mxu0 0
        %3961 = vmatpush1.bf16.msra.mxu0 0
        %3962 = vmatprep.subr.bf16.mxu0 0
        %3963 = vmatpush1.bf16.msra.mxu0 0
        %3964 = vmatprep.subr.bf16.mxu0 0
        %3965 = vmatpush1.bf16.msra.mxu0 0
        %3966 = vmatprep.subr.bf16.mxu0 0
        %3967 = vmatpush1.bf16.msra.mxu0 0
        %3968 = vmatprep.subr.bf16.mxu0 0
        %3969 = vmatpush1.bf16.msra.mxu0 0
        %3970 = vmatprep.subr.bf16.mxu0 0
        %3971 = vmatpush1.bf16.msra.mxu0 0
        %3972 = vmatprep.subr.bf16.mxu0 0
        %3973 = vmatpush1.bf16.msra.mxu0 0
        %3974 = vmatprep.subr.bf16.mxu0 0
        %3975 = vmatpush1.bf16.msra.mxu0 0
        %3976 = vmatprep.subr.bf16.mxu0 0
        %3977 = vmatpush1.bf16.msra.mxu0 0
        %3978 = vmatprep.subr.bf16.mxu0 0
        %3979 = vmatpush1.bf16.msra.mxu0 0
        %3980 = vmatprep.subr.bf16.mxu0 0
        %3981 = vmatpush1.bf16.msra.mxu0 0
        %3982 = vmatprep.subr.bf16.mxu0 0
        %3983 = vmatpush1.bf16.msra.mxu0 0
        %3984 = vmatprep.subr.bf16.mxu0 0
        %3985 = vmatpush1.bf16.msra.mxu0 0
        %3986 = vmatprep.subr.bf16.mxu0 0
        %3987 = vmatpush1.bf16.msra.mxu0 0
        %3988 = vmatprep.mubr.bf16.mxu0 0
        %3989 = vmatmul.mubr.bf16.gmra.mrb[0].mxu0 %v3945
        %v3990 = vpop.f32.mrb[0].mxu0
        %v3991 = vadd.f32 0.0, %v3990
        %v3992 = vpop.f32.mrb[0].mxu0
        %v3993 = vadd.f32 0.0, %v3992
        %v3994 = vpop.f32.mrb[0].mxu0
        %v3995 = vadd.f32 0.0, %v3994
        %v3996 = vpop.f32.mrb[0].mxu0
        %v3997 = vadd.f32 0.0, %v3996
        %3998 = vmatprep.mubr.bf16.mxu0 0
        %3999 = vmatmul.mubr.bf16.gmra.mrb[0].mxu0 %v3948
        %v4000 = vpop.f32.mrb[0].mxu0
        %v4001 = vadd.f32 0.0, %v4000
        %v4002 = vpop.f32.mrb[0].mxu0
        %v4003 = vadd.f32 0.0, %v4002
        %v4004 = vpop.f32.mrb[0].mxu0
        %v4005 = vadd.f32 0.0, %v4004
        %v4006 = vpop.f32.mrb[0].mxu0
        %v4007 = vadd.f32 0.0, %v4006
        %4008 = vmatprep.mubr.bf16.mxu0 0
        %4009 = vmatmul.mubr.bf16.gmra.mrb[0].mxu0 %v3951
        %v4010 = vpop.f32.mrb[0].mxu0
        %v4011 = vadd.f32 0.0, %v4010
        %v4012 = vpop.f32.mrb[0].mxu0
        %v4013 = vadd.f32 0.0, %v4012
        %v4014 = vpop.f32.mrb[0].mxu0
        %v4015 = vadd.f32 0.0, %v4014
        %v4016 = vpop.f32.mrb[0].mxu0
        %v4017 = vadd.f32 0.0, %v4016
        %4018 = vmatprep.mubr.bf16.mxu0 0
        %4019 = vmatmul.mubr.bf16.gmra.mrb[0].mxu0 %v3954
        %v4020 = vpop.f32.mrb[0].mxu0
        %v4021 = vadd.f32 0.0, %v4020
        %v4022 = vpop.f32.mrb[0].mxu0
        %v4023 = vadd.f32 0.0, %v4022
        %v4024 = vpop.f32.mrb[0].mxu0
        %v4025 = vadd.f32 0.0, %v4024
        %v4026 = vpop.f32.mrb[0].mxu0
        %v4027 = vadd.f32 0.0, %v4026
        %4028 = vdwg.mxu0
        %v4029 = vadd.f32 %v3905, %v3991
        %v4030 = vadd.f32 %v3906, %v3993
        %v4031 = vadd.f32 %v3907, %v3995
        %v4032 = vadd.f32 %v3908, %v3997
        %v4033 = vadd.f32 %v3909, %v4001
        %v4034 = vadd.f32 %v3910, %v4003
        %v4035 = vadd.f32 %v3911, %v4005
        %v4036 = vadd.f32 %v3912, %v4007
        %v4037 = vadd.f32 %v3913, %v4011
        %v4038 = vadd.f32 %v3914, %v4013
        %v4039 = vadd.f32 %v3915, %v4015
        %v4040 = vadd.f32 %v3916, %v4017
        %v4041 = vadd.f32 %v3917, %v4021
        %v4042 = vadd.f32 %v3918, %v4023
        %v4043 = vadd.f32 %v3919, %v4025
        %v4044 = vadd.f32 %v3920, %v4027
        %4045 = vrot.lane.b32.xlu0 %v3801, 64
        %v4046 = vpop.permute.xlu0 %4045
        %4047 = vrot.lane.b32.xlu0 %v3802, 64
        %v4048 = vpop.permute.xlu0 %4047
        %4049 = vrot.lane.b32.xlu0 %v3803, 64
        %v4050 = vpop.permute.xlu0 %4049
        %4051 = vrot.lane.b32.xlu0 %v3804, 64
        %v4052 = vpop.permute.xlu0 %4051
        %4053 = vrot.lane.b32.xlu0 %v3323, 102
        %v4054 = vpop.permute.xlu0 %4053
        %4055 = vrot.lane.b32.xlu0 %v3324, 102
        %v4056 = vpop.permute.xlu0 %4055
        %4057 = vrot.lane.b32.xlu0 %v3325, 102
        %v4058 = vpop.permute.xlu0 %4057
        %4059 = vrot.lane.b32.xlu0 %v3326, 102
        %v4060 = vpop.permute.xlu0 %4059
        %vm4061 = vcmask 834560
        %v4062 = vsel %vm4061, %v4054, %v4056
        %v4063 = vsel %vm4061, %v4058, %v4060
        %v4069 = vsel %vm3374, %v4046, 0
        %v4072 = vsel %vm3374, %v4048, 0
        %v4075 = vsel %vm3374, %v4050, 0
        %v4078 = vsel %vm3374, %v4052, 0
        %4080 = vmatprep.subr.bf16.mxu0 %v4056
        %4081 = vmatpush1.bf16.msra.mxu0 %v4062
        %4082 = vmatprep.subr.bf16.mxu0 %v4060
        %4083 = vmatpush1.bf16.msra.mxu0 %v4063
        %4084 = vmatprep.subr.bf16.mxu0 0
        %4085 = vmatpush1.bf16.msra.mxu0 0
        %4086 = vmatprep.subr.bf16.mxu0 0
        %4087 = vmatpush1.bf16.msra.mxu0 0
        %4088 = vmatprep.subr.bf16.mxu0 0
        %4089 = vmatpush1.bf16.msra.mxu0 0
        %4090 = vmatprep.subr.bf16.mxu0 0
        %4091 = vmatpush1.bf16.msra.mxu0 0
        %4092 = vmatprep.subr.bf16.mxu0 0
        %4093 = vmatpush1.bf16.msra.mxu0 0
        %4094 = vmatprep.subr.bf16.mxu0 0
        %4095 = vmatpush1.bf16.msra.mxu0 0
        %4096 = vmatprep.subr.bf16.mxu0 0
        %4097 = vmatpush1.bf16.msra.mxu0 0
        %4098 = vmatprep.subr.bf16.mxu0 0
        %4099 = vmatpush1.bf16.msra.mxu0 0
        %4100 = vmatprep.subr.bf16.mxu0 0
        %4101 = vmatpush1.bf16.msra.mxu0 0
        %4102 = vmatprep.subr.bf16.mxu0 0
        %4103 = vmatpush1.bf16.msra.mxu0 0
        %4104 = vmatprep.subr.bf16.mxu0 0
        %4105 = vmatpush1.bf16.msra.mxu0 0
        %4106 = vmatprep.subr.bf16.mxu0 0
        %4107 = vmatpush1.bf16.msra.mxu0 0
        %4108 = vmatprep.subr.bf16.mxu0 0
        %4109 = vmatpush1.bf16.msra.mxu0 0
        %4110 = vmatprep.subr.bf16.mxu0 0
        %4111 = vmatpush1.bf16.msra.mxu0 0
        %4112 = vmatprep.mubr.bf16.mxu0 0
        %4113 = vmatmul.mubr.bf16.gmra.mrb[0].mxu0 %v4069
        %v4114 = vpop.f32.mrb[0].mxu0
        %v4115 = vadd.f32 0.0, %v4114
        %v4116 = vpop.f32.mrb[0].mxu0
        %v4117 = vadd.f32 0.0, %v4116
        %v4118 = vpop.f32.mrb[0].mxu0
        %v4119 = vadd.f32 0.0, %v4118
        %v4120 = vpop.f32.mrb[0].mxu0
        %v4121 = vadd.f32 0.0, %v4120
        %4122 = vmatprep.mubr.bf16.mxu0 0
        %4123 = vmatmul.mubr.bf16.gmra.mrb[0].mxu0 %v4072
        %v4124 = vpop.f32.mrb[0].mxu0
        %v4125 = vadd.f32 0.0, %v4124
        %v4126 = vpop.f32.mrb[0].mxu0
        %v4127 = vadd.f32 0.0, %v4126
        %v4128 = vpop.f32.mrb[0].mxu0
        %v4129 = vadd.f32 0.0, %v4128
        %v4130 = vpop.f32.mrb[0].mxu0
        %v4131 = vadd.f32 0.0, %v4130
        %4132 = vmatprep.mubr.bf16.mxu0 0
        %4133 = vmatmul.mubr.bf16.gmra.mrb[0].mxu0 %v4075
        %v4134 = vpop.f32.mrb[0].mxu0
        %v4135 = vadd.f32 0.0, %v4134
        %v4136 = vpop.f32.mrb[0].mxu0
        %v4137 = vadd.f32 0.0, %v4136
        %v4138 = vpop.f32.mrb[0].mxu0
        %v4139 = vadd.f32 0.0, %v4138
        %v4140 = vpop.f32.mrb[0].mxu0
        %v4141 = vadd.f32 0.0, %v4140
        %4142 = vmatprep.mubr.bf16.mxu0 0
        %4143 = vmatmul.mubr.bf16.gmra.mrb[0].mxu0 %v4078
        %v4144 = vpop.f32.mrb[0].mxu0
        %v4145 = vadd.f32 0.0, %v4144
        %v4146 = vpop.f32.mrb[0].mxu0
        %v4147 = vadd.f32 0.0, %v4146
        %v4148 = vpop.f32.mrb[0].mxu0
        %v4149 = vadd.f32 0.0, %v4148
        %v4150 = vpop.f32.mrb[0].mxu0
        %v4151 = vadd.f32 0.0, %v4150
        %4152 = vdwg.mxu0
        %v4153 = vadd.f32 %v4029, %v4115
        %v4154 = vadd.f32 %v4030, %v4117
        %v4155 = vadd.f32 %v4031, %v4119
        %v4156 = vadd.f32 %v4032, %v4121
        %v4157 = vadd.f32 %v4033, %v4125
        %v4158 = vadd.f32 %v4034, %v4127
        %v4159 = vadd.f32 %v4035, %v4129
        %v4160 = vadd.f32 %v4036, %v4131
        %v4161 = vadd.f32 %v4037, %v4135
        %v4162 = vadd.f32 %v4038, %v4137
        %v4163 = vadd.f32 %v4039, %v4139
        %v4164 = vadd.f32 %v4040, %v4141
        %v4165 = vadd.f32 %v4041, %v4145
        %v4166 = vadd.f32 %v4042, %v4147
        %v4167 = vadd.f32 %v4043, %v4149
        %v4168 = vadd.f32 %v4044, %v4151
        %4169 = vrot.lane.b32.xlu0 %v3801, 32
        %v4170 = vpop.permute.xlu0 %4169
        %4171 = vrot.lane.b32.xlu0 %v3802, 32
        %v4172 = vpop.permute.xlu0 %4171
        %4173 = vrot.lane.b32.xlu0 %v3803, 32
        %v4174 = vpop.permute.xlu0 %4173
        %4175 = vrot.lane.b32.xlu0 %v3804, 32
        %v4176 = vpop.permute.xlu0 %4175
        %4177 = vrot.lane.b32.xlu0 %v3323, 101
        %v4178 = vpop.permute.xlu0 %4177
        %4179 = vrot.lane.b32.xlu0 %v3324, 101
        %v4180 = vpop.permute.xlu0 %4179
        %4181 = vrot.lane.b32.xlu0 %v3325, 101
        %v4182 = vpop.permute.xlu0 %4181
        %4183 = vrot.lane.b32.xlu0 %v3326, 101
        %v4184 = vpop.permute.xlu0 %4183
        %vm4185 = vcmask 826368
        %v4186 = vsel %vm4185, %v4178, %v4180
        %v4187 = vsel %vm4185, %v4182, %v4184
        %v4193 = vsel %vm3374, %v4170, 0
        %v4196 = vsel %vm3374, %v4172, 0
        %v4199 = vsel %vm3374, %v4174, 0
        %v4202 = vsel %vm3374, %v4176, 0
        %4204 = vmatprep.subr.bf16.mxu0 %v4180
        %4205 = vmatpush1.bf16.msra.mxu0 %v4186
        %4206 = vmatprep.subr.bf16.mxu0 %v4184
        %4207 = vmatpush1.bf16.msra.mxu0 %v4187
        %4208 = vmatprep.subr.bf16.mxu0 0
        %4209 = vmatpush1.bf16.msra.mxu0 0
        %4210 = vmatprep.subr.bf16.mxu0 0
        %4211 = vmatpush1.bf16.msra.mxu0 0
        %4212 = vmatprep.subr.bf16.mxu0 0
        %4213 = vmatpush1.bf16.msra.mxu0 0
        %4214 = vmatprep.subr.bf16.mxu0 0
        %4215 = vmatpush1.bf16.msra.mxu0 0
        %4216 = vmatprep.subr.bf16.mxu0 0
        %4217 = vmatpush1.bf16.msra.mxu0 0
        %4218 = vmatprep.subr.bf16.mxu0 0
        %4219 = vmatpush1.bf16.msra.mxu0 0
        %4220 = vmatprep.subr.bf16.mxu0 0
        %4221 = vmatpush1.bf16.msra.mxu0 0
        %4222 = vmatprep.subr.bf16.mxu0 0
        %4223 = vmatpush1.bf16.msra.mxu0 0
        %4224 = vmatprep.subr.bf16.mxu0 0
        %4225 = vmatpush1.bf16.msra.mxu0 0
        %4226 = vmatprep.subr.bf16.mxu0 0
        %4227 = vmatpush1.bf16.msra.mxu0 0
        %4228 = vmatprep.subr.bf16.mxu0 0
        %4229 = vmatpush1.bf16.msra.mxu0 0
        %4230 = vmatprep.subr.bf16.mxu0 0
        %4231 = vmatpush1.bf16.msra.mxu0 0
        %4232 = vmatprep.subr.bf16.mxu0 0
        %4233 = vmatpush1.bf16.msra.mxu0 0
        %4234 = vmatprep.subr.bf16.mxu0 0
        %4235 = vmatpush1.bf16.msra.mxu0 0
        %4236 = vmatprep.mubr.bf16.mxu0 0
        %4237 = vmatmul.mubr.bf16.gmra.mrb[0].mxu0 %v4193
        %v4238 = vpop.f32.mrb[0].mxu0
        %v4239 = vadd.f32 0.0, %v4238
        %v4240 = vpop.f32.mrb[0].mxu0
        %v4241 = vadd.f32 0.0, %v4240
        %v4242 = vpop.f32.mrb[0].mxu0
        %v4243 = vadd.f32 0.0, %v4242
        %v4244 = vpop.f32.mrb[0].mxu0
        %v4245 = vadd.f32 0.0, %v4244
        %4246 = vmatprep.mubr.bf16.mxu0 0
        %4247 = vmatmul.mubr.bf16.gmra.mrb[0].mxu0 %v4196
        %v4248 = vpop.f32.mrb[0].mxu0
        %v4249 = vadd.f32 0.0, %v4248
        %v4250 = vpop.f32.mrb[0].mxu0
        %v4251 = vadd.f32 0.0, %v4250
        %v4252 = vpop.f32.mrb[0].mxu0
        %v4253 = vadd.f32 0.0, %v4252
        %v4254 = vpop.f32.mrb[0].mxu0
        %v4255 = vadd.f32 0.0, %v4254
        %4256 = vmatprep.mubr.bf16.mxu0 0
        %4257 = vmatmul.mubr.bf16.gmra.mrb[0].mxu0 %v4199
        %v4258 = vpop.f32.mrb[0].mxu0
        %v4259 = vadd.f32 0.0, %v4258
        %v4260 = vpop.f32.mrb[0].mxu0
        %v4261 = vadd.f32 0.0, %v4260
        %v4262 = vpop.f32.mrb[0].mxu0
        %v4263 = vadd.f32 0.0, %v4262
        %v4264 = vpop.f32.mrb[0].mxu0
        %v4265 = vadd.f32 0.0, %v4264
        %4266 = vmatprep.mubr.bf16.mxu0 0
        %4267 = vmatmul.mubr.bf16.gmra.mrb[0].mxu0 %v4202
        %v4268 = vpop.f32.mrb[0].mxu0
        %v4269 = vadd.f32 0.0, %v4268
        %v4270 = vpop.f32.mrb[0].mxu0
        %v4271 = vadd.f32 0.0, %v4270
        %v4272 = vpop.f32.mrb[0].mxu0
        %v4273 = vadd.f32 0.0, %v4272
        %v4274 = vpop.f32.mrb[0].mxu0
        %v4275 = vadd.f32 0.0, %v4274
        %4276 = vdwg.mxu0
        %v4277 = vadd.f32 %v4153, %v4239
        %v4278 = vadd.f32 %v4154, %v4241
        %v4279 = vadd.f32 %v4155, %v4243
        %v4280 = vadd.f32 %v4156, %v4245
        %v4281 = vadd.f32 %v4157, %v4249
        %v4282 = vadd.f32 %v4158, %v4251
        %v4283 = vadd.f32 %v4159, %v4253
        %v4284 = vadd.f32 %v4160, %v4255
        %v4285 = vadd.f32 %v4161, %v4259
        %v4286 = vadd.f32 %v4162, %v4261
        %v4287 = vadd.f32 %v4163, %v4263
        %v4288 = vadd.f32 %v4164, %v4265
        %v4289 = vadd.f32 %v4165, %v4269
        %v4290 = vadd.f32 %v4166, %v4271
        %v4291 = vadd.f32 %v4167, %v4273
        %v4292 = vadd.f32 %v4168, %v4275
        %v4301 = vunpack.c.l.b16 %v391
        %v4302 = vunpack.c.l.b16 %v393
        %v4303 = vunpack.c.l.b16 %v395
        %v4304 = vunpack.c.l.b16 %v397
        %v4305 = vunpack.c.l.b16 %v399
        %v4306 = vunpack.c.l.b16 %v401
        %v4307 = vunpack.c.l.b16 %v403
        %v4308 = vunpack.c.l.b16 %v405
        %v4309 = vpack.c.b16 %v4302, %v4301
        %v4310 = vpack.c.b16 %v4304, %v4303
        %v4311 = vpack.c.b16 %v4306, %v4305
        %v4312 = vpack.c.b16 %v4308, %v4307
        %4313 = vrot.lane.b32.xlu0 %v3323, 100
        %v4314 = vpop.permute.xlu0 %4313
        %4315 = vrot.lane.b32.xlu0 %v3324, 100
        %v4316 = vpop.permute.xlu0 %4315
        %4317 = vrot.lane.b32.xlu0 %v3325, 100
        %v4318 = vpop.permute.xlu0 %4317
        %4319 = vrot.lane.b32.xlu0 %v3326, 100
        %v4320 = vpop.permute.xlu0 %4319
        %vm4321 = vcmask 818176
        %v4322 = vsel %vm4321, %v4314, %v4316
        %v4323 = vsel %vm4321, %v4318, %v4320
        %v4329 = vsel %vm3374, %v4309, 0
        %v4332 = vsel %vm3374, %v4310, 0
        %v4335 = vsel %vm3374, %v4311, 0
        %v4338 = vsel %vm3374, %v4312, 0
        %4340 = vmatprep.subr.bf16.mxu0 %v4316
        %4341 = vmatpush1.bf16.msra.mxu0 %v4322
        %4342 = vmatprep.subr.bf16.mxu0 %v4320
        %4343 = vmatpush1.bf16.msra.mxu0 %v4323
        %4344 = vmatprep.subr.bf16.mxu0 0
        %4345 = vmatpush1.bf16.msra.mxu0 0
        %4346 = vmatprep.subr.bf16.mxu0 0
        %4347 = vmatpush1.bf16.msra.mxu0 0
        %4348 = vmatprep.subr.bf16.mxu0 0
        %4349 = vmatpush1.bf16.msra.mxu0 0
        %4350 = vmatprep.subr.bf16.mxu0 0
        %4351 = vmatpush1.bf16.msra.mxu0 0
        %4352 = vmatprep.subr.bf16.mxu0 0
        %4353 = vmatpush1.bf16.msra.mxu0 0
        %4354 = vmatprep.subr.bf16.mxu0 0
        %4355 = vmatpush1.bf16.msra.mxu0 0
        %4356 = vmatprep.subr.bf16.mxu0 0
        %4357 = vmatpush1.bf16.msra.mxu0 0
        %4358 = vmatprep.subr.bf16.mxu0 0
        %4359 = vmatpush1.bf16.msra.mxu0 0
        %4360 = vmatprep.subr.bf16.mxu0 0
        %4361 = vmatpush1.bf16.msra.mxu0 0
        %4362 = vmatprep.subr.bf16.mxu0 0
        %4363 = vmatpush1.bf16.msra.mxu0 0
        %4364 = vmatprep.subr.bf16.mxu0 0
        %4365 = vmatpush1.bf16.msra.mxu0 0
        %4366 = vmatprep.subr.bf16.mxu0 0
        %4367 = vmatpush1.bf16.msra.mxu0 0
        %4368 = vmatprep.subr.bf16.mxu0 0
        %4369 = vmatpush1.bf16.msra.mxu0 0
        %4370 = vmatprep.subr.bf16.mxu0 0
        %4371 = vmatpush1.bf16.msra.mxu0 0
        %4372 = vmatprep.mubr.bf16.mxu0 0
        %4373 = vmatmul.mubr.bf16.gmra.mrb[0].mxu0 %v4329
        %v4374 = vpop.f32.mrb[0].mxu0
        %v4375 = vadd.f32 0.0, %v4374
        %v4376 = vpop.f32.mrb[0].mxu0
        %v4377 = vadd.f32 0.0, %v4376
        %v4378 = vpop.f32.mrb[0].mxu0
        %v4379 = vadd.f32 0.0, %v4378
        %v4380 = vpop.f32.mrb[0].mxu0
        %v4381 = vadd.f32 0.0, %v4380
        %4382 = vmatprep.mubr.bf16.mxu0 0
        %4383 = vmatmul.mubr.bf16.gmra.mrb[0].mxu0 %v4332
        %v4384 = vpop.f32.mrb[0].mxu0
        %v4385 = vadd.f32 0.0, %v4384
        %v4386 = vpop.f32.mrb[0].mxu0
        %v4387 = vadd.f32 0.0, %v4386
        %v4388 = vpop.f32.mrb[0].mxu0
        %v4389 = vadd.f32 0.0, %v4388
        %v4390 = vpop.f32.mrb[0].mxu0
        %v4391 = vadd.f32 0.0, %v4390
        %4392 = vmatprep.mubr.bf16.mxu0 0
        %4393 = vmatmul.mubr.bf16.gmra.mrb[0].mxu0 %v4335
        %v4394 = vpop.f32.mrb[0].mxu0
        %v4395 = vadd.f32 0.0, %v4394
        %v4396 = vpop.f32.mrb[0].mxu0
        %v4397 = vadd.f32 0.0, %v4396
        %v4398 = vpop.f32.mrb[0].mxu0
        %v4399 = vadd.f32 0.0, %v4398
        %v4400 = vpop.f32.mrb[0].mxu0
        %v4401 = vadd.f32 0.0, %v4400
        %4402 = vmatprep.mubr.bf16.mxu0 0
        %4403 = vmatmul.mubr.bf16.gmra.mrb[0].mxu0 %v4338
        %v4404 = vpop.f32.mrb[0].mxu0
        %v4405 = vadd.f32 0.0, %v4404
        %v4406 = vpop.f32.mrb[0].mxu0
        %v4407 = vadd.f32 0.0, %v4406
        %v4408 = vpop.f32.mrb[0].mxu0
        %v4409 = vadd.f32 0.0, %v4408
        %v4410 = vpop.f32.mrb[0].mxu0
        %v4411 = vadd.f32 0.0, %v4410
        %4412 = vdwg.mxu0
        %v4413 = vadd.f32 %v4277, %v4375
        %v4414 = vadd.f32 %v4278, %v4377
        %v4415 = vadd.f32 %v4279, %v4379
        %v4416 = vadd.f32 %v4280, %v4381
        %v4417 = vadd.f32 %v4281, %v4385
        %v4418 = vadd.f32 %v4282, %v4387
        %v4419 = vadd.f32 %v4283, %v4389
        %v4420 = vadd.f32 %v4284, %v4391
        %v4421 = vadd.f32 %v4285, %v4395
        %v4422 = vadd.f32 %v4286, %v4397
        %v4423 = vadd.f32 %v4287, %v4399
        %v4424 = vadd.f32 %v4288, %v4401
        %v4425 = vadd.f32 %v4289, %v4405
        %v4426 = vadd.f32 %v4290, %v4407
        %v4427 = vadd.f32 %v4291, %v4409
        %v4428 = vadd.f32 %v4292, %v4411
        %4430 = vset.pattern.permute.xlu0 0
        %4431 = vperm.xlu0 %4430, %v406
        %v4432 = vpop.permute.xlu0 %4431
        %4435 = vset.pattern.permute.xlu0 0
        %4436 = vperm.xlu0 %4435, %v407
        %v4437 = vpop.permute.xlu0 %4436
        %4440 = vset.pattern.permute.xlu0 0
        %4441 = vperm.xlu0 %4440, %v408
        %v4442 = vpop.permute.xlu0 %4441
        %4445 = vset.pattern.permute.xlu0 0
        %4446 = vperm.xlu0 %4445, %v409
        %v4447 = vpop.permute.xlu0 %4446
        %4450 = vset.pattern.permute.xlu0 0
        %4451 = vperm.xlu0 %4450, %v410
        %v4452 = vpop.permute.xlu0 %4451
        %4455 = vset.pattern.permute.xlu0 0
        %4456 = vperm.xlu0 %4455, %v411
        %v4457 = vpop.permute.xlu0 %4456
        %4460 = vset.pattern.permute.xlu0 0
        %4461 = vperm.xlu0 %4460, %v412
        %v4462 = vpop.permute.xlu0 %4461
        %4465 = vset.pattern.permute.xlu0 0
        %4466 = vperm.xlu0 %4465, %v413
        %v4467 = vpop.permute.xlu0 %4466
        %v4469 = vadd.f32 %v4413, %v4432
        %v4470 = vadd.f32 %v4414, %v4432
        %v4471 = vadd.f32 %v4415, %v4437
        %v4472 = vadd.f32 %v4416, %v4437
        %v4473 = vadd.f32 %v4417, %v4442
        %v4474 = vadd.f32 %v4418, %v4442
        %v4475 = vadd.f32 %v4419, %v4447
        %v4476 = vadd.f32 %v4420, %v4447
        %v4477 = vadd.f32 %v4421, %v4452
        %v4478 = vadd.f32 %v4422, %v4452
        %v4479 = vadd.f32 %v4423, %v4457
        %v4480 = vadd.f32 %v4424, %v4457
        %v4481 = vadd.f32 %v4425, %v4462
        %v4482 = vadd.f32 %v4426, %v4462
        %v4483 = vadd.f32 %v4427, %v4467
        %v4484 = vadd.f32 %v4428, %v4467
        %v4485 = vmax.f32 %v4469, 0.0
        %v4486 = vmax.f32 %v4470, 0.0
        %v4487 = vmax.f32 %v4471, 0.0
        %v4488 = vmax.f32 %v4472, 0.0
        %v4489 = vmax.f32 %v4473, 0.0
        %v4490 = vmax.f32 %v4474, 0.0
        %v4491 = vmax.f32 %v4475, 0.0
        %v4492 = vmax.f32 %v4476, 0.0
        %v4493 = vmax.f32 %v4477, 0.0
        %v4494 = vmax.f32 %v4478, 0.0
        %v4495 = vmax.f32 %v4479, 0.0
        %v4496 = vmax.f32 %v4480, 0.0
        %v4497 = vmax.f32 %v4481, 0.0
        %v4498 = vmax.f32 %v4482, 0.0
        %v4499 = vmax.f32 %v4483, 0.0
        %v4500 = vmax.f32 %v4484, 0.0
        %4517 = vrot.lane.b32.xlu0 %v4485, 115
        %v4518 = vpop.permute.xlu0 %4517
        %4519 = vrot.lane.b32.xlu0 %v4486, 115
        %v4520 = vpop.permute.xlu0 %4519
        %4521 = vrot.lane.b32.xlu0 %v4487, 115
        %v4522 = vpop.permute.xlu0 %4521
        %4523 = vrot.lane.b32.xlu0 %v4488, 115
        %v4524 = vpop.permute.xlu0 %4523
        %4525 = vrot.lane.b32.xlu0 %v4489, 115
        %v4526 = vpop.permute.xlu0 %4525
        %4527 = vrot.lane.b32.xlu0 %v4490, 115
        %v4528 = vpop.permute.xlu0 %4527
        %4529 = vrot.lane.b32.xlu0 %v4491, 115
        %v4530 = vpop.permute.xlu0 %4529
        %4531 = vrot.lane.b32.xlu0 %v4492, 115
        %v4532 = vpop.permute.xlu0 %4531
        %4533 = vrot.lane.b32.xlu0 %v4493, 115
        %v4534 = vpop.permute.xlu0 %4533
        %4535 = vrot.lane.b32.xlu0 %v4494, 115
        %v4536 = vpop.permute.xlu0 %4535
        %4537 = vrot.lane.b32.xlu0 %v4495, 115
        %v4538 = vpop.permute.xlu0 %4537
        %4539 = vrot.lane.b32.xlu0 %v4496, 115
        %v4540 = vpop.permute.xlu0 %4539
        %4541 = vrot.lane.b32.xlu0 %v4497, 115
        %v4542 = vpop.permute.xlu0 %4541
        %4543 = vrot.lane.b32.xlu0 %v4498, 115
        %v4544 = vpop.permute.xlu0 %4543
        %4545 = vrot.lane.b32.xlu0 %v4499, 115
        %v4546 = vpop.permute.xlu0 %4545
        %4547 = vrot.lane.b32.xlu0 %v4500, 115
        %v4548 = vpop.permute.xlu0 %4547
        %vm4549 = vcmask 941056
        %v4550 = vsel %vm4549, %v4518, %v4520
        %v4551 = vsel %vm4549, %v4522, %v4524
        %v4552 = vsel %vm4549, %v4526, %v4528
        %v4553 = vsel %vm4549, %v4530, %v4532
        %v4554 = vsel %vm4549, %v4534, %v4536
        %v4555 = vsel %vm4549, %v4538, %v4540
        %v4556 = vsel %vm4549, %v4542, %v4544
        %v4557 = vsel %vm4549, %v4546, %v4548
        %v4566 = vmax.f32 %v4485, %v4550
        %v4567 = vmax.f32 %v4487, %v4551
        %v4568 = vmax.f32 %v4489, %v4552
        %v4569 = vmax.f32 %v4491, %v4553
        %v4570 = vmax.f32 %v4493, %v4554
        %v4571 = vmax.f32 %v4495, %v4555
        %v4572 = vmax.f32 %v4497, %v4556
        %v4573 = vmax.f32 %v4499, %v4557
        %4582 = vrot.lane.b32.xlu0 %v4566, 127
        %v4583 = vpop.permute.xlu0 %4582
        %4584 = vrot.lane.b32.xlu0 %v4567, 127
        %v4585 = vpop.permute.xlu0 %4584
        %4586 = vrot.lane.b32.xlu0 %v4568, 127
        %v4587 = vpop.permute.xlu0 %4586
        %4588 = vrot.lane.b32.xlu0 %v4569, 127
        %v4589 = vpop.permute.xlu0 %4588
        %4590 = vrot.lane.b32.xlu0 %v4570, 127
        %v4591 = vpop.permute.xlu0 %4590
        %4592 = vrot.lane.b32.xlu0 %v4571, 127
        %v4593 = vpop.permute.xlu0 %4592
        %4594 = vrot.lane.b32.xlu0 %v4572, 127
        %v4595 = vpop.permute.xlu0 %4594
        %4596 = vrot.lane.b32.xlu0 %v4573, 127
        %v4597 = vpop.permute.xlu0 %4596
        %v4606 = vmax.f32 %v4566, %v4583
        %v4607 = vmax.f32 %v4567, %v4585
        %v4608 = vmax.f32 %v4568, %v4587
        %v4609 = vmax.f32 %v4569, %v4589
        %v4610 = vmax.f32 %v4570, %v4591
        %v4611 = vmax.f32 %v4571, %v4593
        %v4612 = vmax.f32 %v4572, %v4595
        %v4613 = vmax.f32 %v4573, %v4597
        %v4614 = vpack.c.bf16 %v4607, %v4606
        %v4615 = vpack.c.bf16 %v4609, %v4608
        %v4616 = vpack.c.bf16 %v4611, %v4610
        %v4617 = vpack.c.bf16 %v4613, %v4612
        %v4634 = vunpack.c.l.b16 %v502
        %v4635 = vunpack.c.l.b16 %v503
        %v4636 = vunpack.c.l.b16 %v504
        %v4637 = vunpack.c.l.b16 %v505
        %v4638 = vunpack.c.l.b16 %v506
        %v4639 = vunpack.c.l.b16 %v507
        %v4640 = vunpack.c.l.b16 %v508
        %v4641 = vunpack.c.l.b16 %v509
        %v4642 = vunpack.c.l.b16 %v510
        %v4643 = vunpack.c.l.b16 %v511
        %v4644 = vunpack.c.l.b16 %v512
        %v4645 = vunpack.c.l.b16 %v513
        %v4646 = vunpack.c.l.b16 %v514
        %v4647 = vunpack.c.l.b16 %v515
        %v4648 = vunpack.c.l.b16 %v516
        %v4649 = vunpack.c.l.b16 %v517
        %v4650 = vpack.c.b16 %v4635, %v4634
        %v4651 = vpack.c.b16 %v4637, %v4636
        %v4652 = vpack.c.b16 %v4639, %v4638
        %v4653 = vpack.c.b16 %v4641, %v4640
        %v4654 = vpack.c.b16 %v4643, %v4642
        %v4655 = vpack.c.b16 %v4645, %v4644
        %v4656 = vpack.c.b16 %v4647, %v4646
        %v4657 = vpack.c.b16 %v4649, %v4648
        %v4666 = vsel %vm948, %v4614, 0
        %v4669 = vsel %vm948, %v4615, 0
        %v4672 = vsel %vm948, %v4616, 0
        %v4675 = vsel %vm948, %v4617, 0
        %vm4677 = vcmask 1046528
        %vm4678 = vcmask 1047552
        %v4679 = vsel %vm4677, 4294967295, 65535
        %v4680 = vsel %vm4678, %v4679, 0
        %v4682 = vand.u32 %v4657, %v4680
        %4684 = vmatprep.subr.bf16.mxu0 0
        %4685 = vmatpush1.bf16.msra.mxu0 %v4650
        %4686 = vmatprep.subr.bf16.mxu0 0
        %4687 = vmatpush1.bf16.msra.mxu0 %v4651
        %4688 = vmatprep.subr.bf16.mxu0 0
        %4689 = vmatpush1.bf16.msra.mxu0 %v4652
        %4690 = vmatprep.subr.bf16.mxu0 0
        %4691 = vmatpush1.bf16.msra.mxu0 %v4653
        %4692 = vmatprep.subr.bf16.mxu0 0
        %4693 = vmatpush1.bf16.msra.mxu0 %v4654
        %4694 = vmatprep.subr.bf16.mxu0 0
        %4695 = vmatpush1.bf16.msra.mxu0 %v4655
        %4696 = vmatprep.subr.bf16.mxu0 0
        %4697 = vmatpush1.bf16.msra.mxu0 %v4656
        %4698 = vmatprep.subr.bf16.mxu0 0
        %4699 = vmatpush1.bf16.msra.mxu0 %v4682
        %4700 = vmatprep.subr.bf16.mxu0 0
        %4701 = vmatpush1.bf16.msra.mxu0 0
        %4702 = vmatprep.subr.bf16.mxu0 0
        %4703 = vmatpush1.bf16.msra.mxu0 0
        %4704 = vmatprep.subr.bf16.mxu0 0
        %4705 = vmatpush1.bf16.msra.mxu0 0
        %4706 = vmatprep.subr.bf16.mxu0 0
        %4707 = vmatpush1.bf16.msra.mxu0 0
        %4708 = vmatprep.subr.bf16.mxu0 0
        %4709 = vmatpush1.bf16.msra.mxu0 0
        %4710 = vmatprep.subr.bf16.mxu0 0
        %4711 = vmatpush1.bf16.msra.mxu0 0
        %4712 = vmatprep.subr.bf16.mxu0 0
        %4713 = vmatpush1.bf16.msra.mxu0 0
        %4714 = vmatprep.subr.bf16.mxu0 0
        %4715 = vmatpush1.bf16.msra.mxu0 0
        %4716 = vmatprep.mubr.bf16.mxu0 0
        %4717 = vmatmul.mubr.bf16.gmra.mrb[0].mxu0 %v4666
        %v4718 = vpop.f32.mrb[0].mxu0
        %v4719 = vadd.f32 0.0, %v4718
        %v4720 = vpop.f32.mrb[0].mxu0
        %v4721 = vpop.f32.mrb[0].mxu0
        %v4722 = vadd.f32 0.0, %v4721
        %v4723 = vpop.f32.mrb[0].mxu0
        %4724 = vmatprep.mubr.bf16.mxu0 0
        %4725 = vmatmul.mubr.bf16.gmra.mrb[0].mxu0 %v4669
        %v4726 = vpop.f32.mrb[0].mxu0
        %v4727 = vadd.f32 0.0, %v4726
        %v4728 = vpop.f32.mrb[0].mxu0
        %v4729 = vpop.f32.mrb[0].mxu0
        %v4730 = vadd.f32 0.0, %v4729
        %v4731 = vpop.f32.mrb[0].mxu0
        %4732 = vmatprep.mubr.bf16.mxu0 0
        %4733 = vmatmul.mubr.bf16.gmra.mrb[0].mxu0 %v4672
        %v4734 = vpop.f32.mrb[0].mxu0
        %v4735 = vadd.f32 0.0, %v4734
        %v4736 = vpop.f32.mrb[0].mxu0
        %v4737 = vpop.f32.mrb[0].mxu0
        %v4738 = vadd.f32 0.0, %v4737
        %v4739 = vpop.f32.mrb[0].mxu0
        %4740 = vmatprep.mubr.bf16.mxu0 0
        %4741 = vmatmul.mubr.bf16.gmra.mrb[0].mxu0 %v4675
        %v4742 = vpop.f32.mrb[0].mxu0
        %v4743 = vadd.f32 0.0, %v4742
        %v4744 = vpop.f32.mrb[0].mxu0
        %v4745 = vpop.f32.mrb[0].mxu0
        %v4746 = vadd.f32 0.0, %v4745
        %v4747 = vpop.f32.mrb[0].mxu0
        %4748 = vdwg.mxu0
        %v4749 = vpack.c.bf16 %v4722, %v4719
        %v4750 = vpack.c.bf16 %v4730, %v4727
        %v4751 = vpack.c.bf16 %v4738, %v4735
        %v4752 = vpack.c.bf16 %v4746, %v4743
        %v4754 = vshrl.u32 %v4749, 16
        %4756 = vrot.lane.b32.xlu0 %v4754, 25
        %v4757 = vpop.permute.xlu0 %4756
        %v4759 = vrot.slane %v4749, 1
        %4760 = vrot.lane.b32.xlu0 %v4759, 50
        %v4761 = vpop.permute.xlu0 %4760
        %v4762 = vrot.slane %v4754, 1
        %4763 = vrot.lane.b32.xlu0 %v4762, 75
        %v4764 = vpop.permute.xlu0 %4763
        %v4765 = vrot.slane %v4749, 2
        %4766 = vrot.lane.b32.xlu0 %v4765, 100
        %v4767 = vpop.permute.xlu0 %4766
        %v4768 = vrot.slane %v4754, 2
        %4769 = vrot.lane.b32.xlu0 %v4768, 125
        %v4770 = vpop.permute.xlu0 %4769
        %v4771 = vrot.slane %v4749, 3
        %4772 = vrot.lane.b32.xlu0 %v4771, 22
        %v4773 = vpop.permute.xlu0 %4772
        %v4774 = vrot.slane %v4754, 3
        %4775 = vrot.lane.b32.xlu0 %v4774, 47
        %v4776 = vpop.permute.xlu0 %4775
        %v4777 = vrot.slane %v4749, 4
        %4778 = vrot.lane.b32.xlu0 %v4777, 72
        %v4779 = vpop.permute.xlu0 %4778
        %v4780 = vrot.slane %v4754, 4
        %4781 = vrot.lane.b32.xlu0 %v4780, 97
        %v4782 = vpop.permute.xlu0 %4781
        %v4783 = vrot.slane %v4749, 5
        %4784 = vrot.lane.b32.xlu0 %v4783, 122
        %v4785 = vpop.permute.xlu0 %4784
        %v4786 = vrot.slane %v4754, 5
        %4787 = vrot.lane.b32.xlu0 %v4786, 19
        %v4788 = vpop.permute.xlu0 %4787
        %v4789 = vrot.slane %v4749, 6
        %4790 = vrot.lane.b32.xlu0 %v4789, 44
        %v4791 = vpop.permute.xlu0 %4790
        %v4792 = vrot.slane %v4754, 6
        %4793 = vrot.lane.b32.xlu0 %v4792, 69
        %v4794 = vpop.permute.xlu0 %4793
        %v4795 = vrot.slane %v4749, 7
        %4796 = vrot.lane.b32.xlu0 %v4795, 94
        %v4797 = vpop.permute.xlu0 %4796
        %v4798 = vrot.slane %v4754, 7
        %4799 = vrot.lane.b32.xlu0 %v4798, 119
        %v4800 = vpop.permute.xlu0 %4799
        %vm4801 = vcmask 203776
        %v4803 = vsel %vm4801, %v4749, %v4757
        %vm4804 = vcmask 408576
        %v4806 = vsel %vm4804, %v4803, %v4761
        %vm4807 = vcmask 613376
        %v4809 = vsel %vm4807, %v4806, %v4764
        %v4811 = vsel %vm1310, %v4809, %v4767
        %vm4812 = vcmask 1022976
        %v4814 = vsel %vm4812, %v4811, %v4770
        %vm4816 = vcmask 179200
        %v4818 = vsel %vm4816, %v4770, %v4773
        %vm4819 = vcmask 384000
        %v4821 = vsel %vm4819, %v4818, %v4776
        %v4823 = vsel %vm1874, %v4821, %v4779
        %vm4824 = vcmask 793600
        %v4826 = vsel %vm4824, %v4823, %v4782
        %vm4827 = vcmask 998400
        %v4829 = vsel %vm4827, %v4826, %v4785
        %vm4831 = vcmask 154624
        %v4833 = vsel %vm4831, %v4785, %v4788
        %vm4834 = vcmask 359424
        %v4836 = vsel %vm4834, %v4833, %v4791
        %vm4837 = vcmask 564224
        %v4839 = vsel %vm4837, %v4836, %v4794
        %vm4840 = vcmask 769024
        %v4842 = vsel %vm4840, %v4839, %v4797
        %vm4843 = vcmask 973824
        %v4845 = vsel %vm4843, %v4842, %v4800
        %v4848 = vshrl.u32 %v4750, 16
        %4850 = vrot.lane.b32.xlu0 %v4848, 25
        %v4851 = vpop.permute.xlu0 %4850
        %v4853 = vrot.slane %v4750, 1
        %4854 = vrot.lane.b32.xlu0 %v4853, 50
        %v4855 = vpop.permute.xlu0 %4854
        %v4856 = vrot.slane %v4848, 1
        %4857 = vrot.lane.b32.xlu0 %v4856, 75
        %v4858 = vpop.permute.xlu0 %4857
        %v4859 = vrot.slane %v4750, 2
        %4860 = vrot.lane.b32.xlu0 %v4859, 100
        %v4861 = vpop.permute.xlu0 %4860
        %v4862 = vrot.slane %v4848, 2
        %4863 = vrot.lane.b32.xlu0 %v4862, 125
        %v4864 = vpop.permute.xlu0 %4863
        %v4865 = vrot.slane %v4750, 3
        %4866 = vrot.lane.b32.xlu0 %v4865, 22
        %v4867 = vpop.permute.xlu0 %4866
        %v4868 = vrot.slane %v4848, 3
        %4869 = vrot.lane.b32.xlu0 %v4868, 47
        %v4870 = vpop.permute.xlu0 %4869
        %v4871 = vrot.slane %v4750, 4
        %4872 = vrot.lane.b32.xlu0 %v4871, 72
        %v4873 = vpop.permute.xlu0 %4872
        %v4874 = vrot.slane %v4848, 4
        %4875 = vrot.lane.b32.xlu0 %v4874, 97
        %v4876 = vpop.permute.xlu0 %4875
        %v4877 = vrot.slane %v4750, 5
        %4878 = vrot.lane.b32.xlu0 %v4877, 122
        %v4879 = vpop.permute.xlu0 %4878
        %v4880 = vrot.slane %v4848, 5
        %4881 = vrot.lane.b32.xlu0 %v4880, 19
        %v4882 = vpop.permute.xlu0 %4881
        %v4883 = vrot.slane %v4750, 6
        %4884 = vrot.lane.b32.xlu0 %v4883, 44
        %v4885 = vpop.permute.xlu0 %4884
        %v4886 = vrot.slane %v4848, 6
        %4887 = vrot.lane.b32.xlu0 %v4886, 69
        %v4888 = vpop.permute.xlu0 %4887
        %v4889 = vrot.slane %v4750, 7
        %4890 = vrot.lane.b32.xlu0 %v4889, 94
        %v4891 = vpop.permute.xlu0 %4890
        %v4892 = vrot.slane %v4848, 7
        %4893 = vrot.lane.b32.xlu0 %v4892, 119
        %v4894 = vpop.permute.xlu0 %4893
        %v4896 = vsel %vm4801, %v4750, %v4851
        %v4898 = vsel %vm4804, %v4896, %v4855
        %v4900 = vsel %vm4807, %v4898, %v4858
        %v4902 = vsel %vm1310, %v4900, %v4861
        %v4904 = vsel %vm4812, %v4902, %v4864
        %v4906 = vsel %vm4816, %v4864, %v4867
        %v4908 = vsel %vm4819, %v4906, %v4870
        %v4910 = vsel %vm1874, %v4908, %v4873
        %v4912 = vsel %vm4824, %v4910, %v4876
        %v4914 = vsel %vm4827, %v4912, %v4879
        %v4916 = vsel %vm4831, %v4879, %v4882
        %v4918 = vsel %vm4834, %v4916, %v4885
        %v4920 = vsel %vm4837, %v4918, %v4888
        %v4922 = vsel %vm4840, %v4920, %v4891
        %v4924 = vsel %vm4843, %v4922, %v4894
        %v4926 = vshrl.u32 %v4751, 16
        %4928 = vrot.lane.b32.xlu0 %v4926, 25
        %v4929 = vpop.permute.xlu0 %4928
        %v4931 = vrot.slane %v4751, 1
        %4932 = vrot.lane.b32.xlu0 %v4931, 50
        %v4933 = vpop.permute.xlu0 %4932
        %v4934 = vrot.slane %v4926, 1
        %4935 = vrot.lane.b32.xlu0 %v4934, 75
        %v4936 = vpop.permute.xlu0 %4935
        %v4937 = vrot.slane %v4751, 2
        %4938 = vrot.lane.b32.xlu0 %v4937, 100
        %v4939 = vpop.permute.xlu0 %4938
        %v4940 = vrot.slane %v4926, 2
        %4941 = vrot.lane.b32.xlu0 %v4940, 125
        %v4942 = vpop.permute.xlu0 %4941
        %v4943 = vrot.slane %v4751, 3
        %4944 = vrot.lane.b32.xlu0 %v4943, 22
        %v4945 = vpop.permute.xlu0 %4944
        %v4946 = vrot.slane %v4926, 3
        %4947 = vrot.lane.b32.xlu0 %v4946, 47
        %v4948 = vpop.permute.xlu0 %4947
        %v4949 = vrot.slane %v4751, 4
        %4950 = vrot.lane.b32.xlu0 %v4949, 72
        %v4951 = vpop.permute.xlu0 %4950
        %v4952 = vrot.slane %v4926, 4
        %4953 = vrot.lane.b32.xlu0 %v4952, 97
        %v4954 = vpop.permute.xlu0 %4953
        %v4955 = vrot.slane %v4751, 5
        %4956 = vrot.lane.b32.xlu0 %v4955, 122
        %v4957 = vpop.permute.xlu0 %4956
        %v4958 = vrot.slane %v4926, 5
        %4959 = vrot.lane.b32.xlu0 %v4958, 19
        %v4960 = vpop.permute.xlu0 %4959
        %v4961 = vrot.slane %v4751, 6
        %4962 = vrot.lane.b32.xlu0 %v4961, 44
        %v4963 = vpop.permute.xlu0 %4962
        %v4964 = vrot.slane %v4926, 6
        %4965 = vrot.lane.b32.xlu0 %v4964, 69
        %v4966 = vpop.permute.xlu0 %4965
        %v4967 = vrot.slane %v4751, 7
        %4968 = vrot.lane.b32.xlu0 %v4967, 94
        %v4969 = vpop.permute.xlu0 %4968
        %v4970 = vrot.slane %v4926, 7
        %4971 = vrot.lane.b32.xlu0 %v4970, 119
        %v4972 = vpop.permute.xlu0 %4971
        %v4974 = vsel %vm4801, %v4751, %v4929
        %v4976 = vsel %vm4804, %v4974, %v4933
        %v4978 = vsel %vm4807, %v4976, %v4936
        %v4980 = vsel %vm1310, %v4978, %v4939
        %v4982 = vsel %vm4812, %v4980, %v4942
        %v4984 = vsel %vm4816, %v4942, %v4945
        %v4986 = vsel %vm4819, %v4984, %v4948
        %v4988 = vsel %vm1874, %v4986, %v4951
        %v4990 = vsel %vm4824, %v4988, %v4954
        %v4992 = vsel %vm4827, %v4990, %v4957
        %v4994 = vsel %vm4831, %v4957, %v4960
        %v4996 = vsel %vm4834, %v4994, %v4963
        %v4998 = vsel %vm4837, %v4996, %v4966
        %v5000 = vsel %vm4840, %v4998, %v4969
        %v5002 = vsel %vm4843, %v5000, %v4972
        %v5004 = vshrl.u32 %v4752, 16
        %5006 = vrot.lane.b32.xlu0 %v5004, 25
        %v5007 = vpop.permute.xlu0 %5006
        %v5009 = vrot.slane %v4752, 1
        %5010 = vrot.lane.b32.xlu0 %v5009, 50
        %v5011 = vpop.permute.xlu0 %5010
        %v5012 = vrot.slane %v5004, 1
        %5013 = vrot.lane.b32.xlu0 %v5012, 75
        %v5014 = vpop.permute.xlu0 %5013
        %v5015 = vrot.slane %v4752, 2
        %5016 = vrot.lane.b32.xlu0 %v5015, 100
        %v5017 = vpop.permute.xlu0 %5016
        %v5018 = vrot.slane %v5004, 2
        %5019 = vrot.lane.b32.xlu0 %v5018, 125
        %v5020 = vpop.permute.xlu0 %5019
        %v5021 = vrot.slane %v4752, 3
        %5022 = vrot.lane.b32.xlu0 %v5021, 22
        %v5023 = vpop.permute.xlu0 %5022
        %v5024 = vrot.slane %v5004, 3
        %5025 = vrot.lane.b32.xlu0 %v5024, 47
        %v5026 = vpop.permute.xlu0 %5025
        %v5027 = vrot.slane %v4752, 4
        %5028 = vrot.lane.b32.xlu0 %v5027, 72
        %v5029 = vpop.permute.xlu0 %5028
        %v5030 = vrot.slane %v5004, 4
        %5031 = vrot.lane.b32.xlu0 %v5030, 97
        %v5032 = vpop.permute.xlu0 %5031
        %v5033 = vrot.slane %v4752, 5
        %5034 = vrot.lane.b32.xlu0 %v5033, 122
        %v5035 = vpop.permute.xlu0 %5034
        %v5036 = vrot.slane %v5004, 5
        %5037 = vrot.lane.b32.xlu0 %v5036, 19
        %v5038 = vpop.permute.xlu0 %5037
        %v5039 = vrot.slane %v4752, 6
        %5040 = vrot.lane.b32.xlu0 %v5039, 44
        %v5041 = vpop.permute.xlu0 %5040
        %v5042 = vrot.slane %v5004, 6
        %5043 = vrot.lane.b32.xlu0 %v5042, 69
        %v5044 = vpop.permute.xlu0 %5043
        %v5045 = vrot.slane %v4752, 7
        %5046 = vrot.lane.b32.xlu0 %v5045, 94
        %v5047 = vpop.permute.xlu0 %5046
        %v5048 = vrot.slane %v5004, 7
        %5049 = vrot.lane.b32.xlu0 %v5048, 119
        %v5050 = vpop.permute.xlu0 %5049
        %v5052 = vsel %vm4801, %v4752, %v5007
        %v5054 = vsel %vm4804, %v5052, %v5011
        %v5056 = vsel %vm4807, %v5054, %v5014
        %v5058 = vsel %vm1310, %v5056, %v5017
        %v5060 = vsel %vm4812, %v5058, %v5020
        %v5062 = vsel %vm4816, %v5020, %v5023
        %v5064 = vsel %vm4819, %v5062, %v5026
        %v5066 = vsel %vm1874, %v5064, %v5029
        %v5068 = vsel %vm4824, %v5066, %v5032
        %v5070 = vsel %vm4827, %v5068, %v5035
        %v5072 = vsel %vm4831, %v5035, %v5038
        %v5074 = vsel %vm4834, %v5072, %v5041
        %v5076 = vsel %vm4837, %v5074, %v5044
        %v5078 = vsel %vm4840, %v5076, %v5047
        %v5080 = vsel %vm4843, %v5078, %v5050
        %5084 = vrot.lane.b32.xlu0 %v4904, 16
        %v5085 = vpop.permute.xlu0 %5084
        %5086 = vrot.lane.b32.xlu0 %v4914, 16
        %v5087 = vpop.permute.xlu0 %5086
        %5088 = vrot.lane.b32.xlu0 %v4924, 16
        %v5089 = vpop.permute.xlu0 %5088
        %5090 = vrot.lane.b32.xlu0 %v4894, 16
        %v5091 = vpop.permute.xlu0 %5090
        %vm5092 = vcmask 130048
        %v5093 = vsel %vm5092, %v5085, %v5087
        %v5094 = vsel %vm5092, %v5087, %v5089
        %v5095 = vsel %vm5092, %v5089, %v5091
        %5101 = vrot.lane.b32.xlu0 %v4982, 32
        %v5102 = vpop.permute.xlu0 %5101
        %5103 = vrot.lane.b32.xlu0 %v4992, 32
        %v5104 = vpop.permute.xlu0 %5103
        %5105 = vrot.lane.b32.xlu0 %v5002, 32
        %v5106 = vpop.permute.xlu0 %5105
        %5107 = vrot.lane.b32.xlu0 %v4972, 32
        %v5108 = vpop.permute.xlu0 %5107
        %vm5109 = vcmask 261120
        %v5110 = vsel %vm5109, %v5102, %v5104
        %v5111 = vsel %vm5109, %v5104, %v5106
        %v5112 = vsel %vm5109, %v5106, %v5108
        %5118 = vrot.lane.b32.xlu0 %v5060, 48
        %v5119 = vpop.permute.xlu0 %5118
        %5120 = vrot.lane.b32.xlu0 %v5070, 48
        %v5121 = vpop.permute.xlu0 %5120
        %5122 = vrot.lane.b32.xlu0 %v5080, 48
        %v5123 = vpop.permute.xlu0 %5122
        %5124 = vrot.lane.b32.xlu0 %v5050, 48
        %v5125 = vpop.permute.xlu0 %5124
        %vm5126 = vcmask 392192
        %v5127 = vsel %vm5126, %v5119, %v5121
        %v5128 = vsel %vm5126, %v5121, %v5123
        %v5129 = vsel %vm5126, %v5123, %v5125
        %vm5132 = vcmask 130048
        %v5134 = vsel %vm5132, %v4800, %v5085
        %v5138 = vsel %vm3374, %v5095, %v5102
        %vm5140 = vcmask 392192
        %v5143 = vsel %vm5140, %v5112, %v5119
        %v5345 = vunpack.c.l.b16 %v518
        %v5346 = vunpack.c.l.b16 %v519
        %v5347 = vunpack.c.l.b16 %v520
        %v5348 = vunpack.c.l.b16 %v521
        %v5349 = vunpack.c.l.b16 %v522
        %v5350 = vunpack.c.l.b16 %v523
        %v5351 = vunpack.c.l.b16 %v524
        %v5352 = vunpack.c.l.b16 %v525
        %v5353 = vunpack.c.l.b16 %v526
        %v5354 = vunpack.c.l.b16 %v527
        %v5355 = vunpack.c.l.b16 %v528
        %v5356 = vunpack.c.l.b16 %v529
        %v5357 = vunpack.c.l.b16 %v530
        %v5358 = vunpack.c.l.b16 %v531
        %v5359 = vunpack.c.l.b16 %v532
        %v5360 = vunpack.c.l.b16 %v533
        %v5361 = vunpack.c.l.b16 %v534
        %v5362 = vunpack.c.l.b16 %v535
        %v5363 = vunpack.c.l.b16 %v536
        %v5364 = vunpack.c.l.b16 %v537
        %v5365 = vunpack.c.l.b16 %v538
        %v5366 = vunpack.c.l.b16 %v539
        %v5367 = vunpack.c.l.b16 %v540
        %v5368 = vunpack.c.l.b16 %v541
        %v5369 = vunpack.c.l.b16 %v542
        %v5370 = vunpack.c.l.b16 %v543
        %v5371 = vunpack.c.l.b16 %v544
        %v5372 = vunpack.c.l.b16 %v545
        %v5373 = vunpack.c.l.b16 %v546
        %v5374 = vunpack.c.l.b16 %v547
        %v5375 = vunpack.c.l.b16 %v548
        %v5376 = vunpack.c.l.b16 %v549
        %v5377 = vunpack.c.l.b16 %v550
        %v5378 = vunpack.c.l.b16 %v551
        %v5379 = vunpack.c.l.b16 %v552
        %v5380 = vunpack.c.l.b16 %v553
        %v5381 = vunpack.c.l.b16 %v554
        %v5382 = vunpack.c.l.b16 %v555
        %v5383 = vunpack.c.l.b16 %v556
        %v5384 = vunpack.c.l.b16 %v557
        %v5385 = vunpack.c.l.b16 %v558
        %v5386 = vunpack.c.l.b16 %v559
        %v5387 = vunpack.c.l.b16 %v560
        %v5388 = vunpack.c.l.b16 %v561
        %v5389 = vunpack.c.l.b16 %v562
        %v5390 = vunpack.c.l.b16 %v563
        %v5391 = vunpack.c.l.b16 %v564
        %v5392 = vunpack.c.l.b16 %v565
        %v5393 = vunpack.c.l.b16 %v566
        %v5394 = vunpack.c.l.b16 %v567
        %v5395 = vunpack.c.l.b16 %v568
        %v5396 = vunpack.c.l.b16 %v569
        %v5397 = vunpack.c.l.b16 %v570
        %v5398 = vunpack.c.l.b16 %v571
        %v5399 = vunpack.c.l.b16 %v572
        %v5400 = vunpack.c.l.b16 %v573
        %v5401 = vunpack.c.l.b16 %v574
        %v5402 = vunpack.c.l.b16 %v575
        %v5403 = vunpack.c.l.b16 %v576
        %v5404 = vunpack.c.l.b16 %v577
        %v5405 = vunpack.c.l.b16 %v578
        %v5406 = vunpack.c.l.b16 %v579
        %v5407 = vunpack.c.l.b16 %v580
        %v5408 = vunpack.c.l.b16 %v581
        %v5409 = vunpack.c.l.b16 %v582
        %v5410 = vunpack.c.l.b16 %v583
        %v5411 = vunpack.c.l.b16 %v584
        %v5412 = vunpack.c.l.b16 %v585
        %v5413 = vunpack.c.l.b16 %v586
        %v5414 = vunpack.c.l.b16 %v587
        %v5415 = vunpack.c.l.b16 %v588
        %v5416 = vunpack.c.l.b16 %v589
        %v5417 = vunpack.c.l.b16 %v590
        %v5418 = vunpack.c.l.b16 %v591
        %v5419 = vunpack.c.l.b16 %v592
        %v5420 = vunpack.c.l.b16 %v593
        %v5421 = vunpack.c.l.b16 %v594
        %v5422 = vunpack.c.l.b16 %v595
        %v5423 = vunpack.c.l.b16 %v596
        %v5424 = vunpack.c.l.b16 %v597
        %v5425 = vunpack.c.l.b16 %v598
        %v5426 = vunpack.c.l.b16 %v599
        %v5427 = vunpack.c.l.b16 %v600
        %v5428 = vunpack.c.l.b16 %v601
        %v5429 = vunpack.c.l.b16 %v602
        %v5430 = vunpack.c.l.b16 %v603
        %v5431 = vunpack.c.l.b16 %v604
        %v5432 = vunpack.c.l.b16 %v605
        %v5433 = vunpack.c.l.b16 %v606
        %v5434 = vunpack.c.l.b16 %v607
        %v5435 = vunpack.c.l.b16 %v608
        %v5436 = vunpack.c.l.b16 %v609
        %v5437 = vunpack.c.l.b16 %v610
        %v5438 = vunpack.c.l.b16 %v611
        %v5439 = vunpack.c.l.b16 %v612
        %v5440 = vunpack.c.l.b16 %v613
        %v5441 = vunpack.c.l.b16 %v614
        %v5442 = vunpack.c.l.b16 %v615
        %v5443 = vunpack.c.l.b16 %v616
        %v5444 = vunpack.c.l.b16 %v617
        %v5445 = vunpack.c.l.b16 %v618
        %v5446 = vunpack.c.l.b16 %v619
        %v5447 = vunpack.c.l.b16 %v620
        %v5448 = vunpack.c.l.b16 %v621
        %v5449 = vunpack.c.l.b16 %v622
        %v5450 = vunpack.c.l.b16 %v623
        %v5451 = vunpack.c.l.b16 %v624
        %v5452 = vunpack.c.l.b16 %v625
        %v5453 = vunpack.c.l.b16 %v626
        %v5454 = vunpack.c.l.b16 %v627
        %v5455 = vunpack.c.l.b16 %v628
        %v5456 = vunpack.c.l.b16 %v629
        %v5457 = vunpack.c.l.b16 %v630
        %v5458 = vunpack.c.l.b16 %v631
        %v5459 = vunpack.c.l.b16 %v632
        %v5460 = vunpack.c.l.b16 %v633
        %v5461 = vunpack.c.l.b16 %v634
        %v5462 = vunpack.c.l.b16 %v635
        %v5463 = vunpack.c.l.b16 %v636
        %v5464 = vunpack.c.l.b16 %v637
        %v5465 = vunpack.c.l.b16 %v638
        %v5466 = vunpack.c.l.b16 %v639
        %v5467 = vunpack.c.l.b16 %v640
        %v5468 = vunpack.c.l.b16 %v641
        %v5469 = vunpack.c.l.b16 %v642
        %v5470 = vunpack.c.l.b16 %v643
        %v5471 = vunpack.c.l.b16 %v644
        %v5472 = vunpack.c.l.b16 %v645
        %v5473 = vunpack.c.l.b16 %v646
        %v5474 = vunpack.c.l.b16 %v647
        %v5475 = vunpack.c.l.b16 %v648
        %v5476 = vunpack.c.l.b16 %v649
        %v5477 = vunpack.c.l.b16 %v650
        %v5478 = vunpack.c.l.b16 %v651
        %v5479 = vunpack.c.l.b16 %v652
        %v5480 = vunpack.c.l.b16 %v653
        %v5481 = vunpack.c.l.b16 %v654
        %v5482 = vunpack.c.l.b16 %v655
        %v5483 = vunpack.c.l.b16 %v656
        %v5484 = vunpack.c.l.b16 %v657
        %v5485 = vunpack.c.l.b16 %v658
        %v5486 = vunpack.c.l.b16 %v659
        %v5487 = vunpack.c.l.b16 %v660
        %v5488 = vunpack.c.l.b16 %v661
        %v5489 = vunpack.c.l.b16 %v662
        %v5490 = vunpack.c.l.b16 %v663
        %v5491 = vunpack.c.l.b16 %v664
        %v5492 = vunpack.c.l.b16 %v665
        %v5493 = vunpack.c.l.b16 %v666
        %v5494 = vunpack.c.l.b16 %v667
        %v5495 = vunpack.c.l.b16 %v668
        %v5496 = vunpack.c.l.b16 %v669
        %v5497 = vunpack.c.l.b16 %v670
        %v5498 = vunpack.c.l.b16 %v671
        %v5499 = vunpack.c.l.b16 %v672
        %v5500 = vunpack.c.l.b16 %v673
        %v5501 = vunpack.c.l.b16 %v674
        %v5502 = vunpack.c.l.b16 %v675
        %v5503 = vunpack.c.l.b16 %v676
        %v5504 = vunpack.c.l.b16 %v677
        %v5505 = vunpack.c.l.b16 %v678
        %v5506 = vunpack.c.l.b16 %v679
        %v5507 = vunpack.c.l.b16 %v680
        %v5508 = vunpack.c.l.b16 %v681
        %v5509 = vunpack.c.l.b16 %v682
        %v5510 = vunpack.c.l.b16 %v683
        %v5511 = vunpack.c.l.b16 %v684
        %v5512 = vunpack.c.l.b16 %v685
        %v5513 = vunpack.c.l.b16 %v686
        %v5514 = vunpack.c.l.b16 %v687
        %v5515 = vunpack.c.l.b16 %v688
        %v5516 = vunpack.c.l.b16 %v689
        %v5517 = vunpack.c.l.b16 %v690
        %v5518 = vunpack.c.l.b16 %v691
        %v5519 = vunpack.c.l.b16 %v692
        %v5520 = vunpack.c.l.b16 %v693
        %v5521 = vunpack.c.l.b16 %v694
        %v5522 = vunpack.c.l.b16 %v695
        %v5523 = vunpack.c.l.b16 %v696
        %v5524 = vunpack.c.l.b16 %v697
        %v5525 = vunpack.c.l.b16 %v698
        %v5526 = vunpack.c.l.b16 %v699
        %v5527 = vunpack.c.l.b16 %v700
        %v5528 = vunpack.c.l.b16 %v701
        %v5529 = vunpack.c.l.b16 %v702
        %v5530 = vunpack.c.l.b16 %v703
        %v5531 = vunpack.c.l.b16 %v704
        %v5532 = vunpack.c.l.b16 %v705
        %v5533 = vunpack.c.l.b16 %v706
        %v5534 = vunpack.c.l.b16 %v707
        %v5535 = vunpack.c.l.b16 %v708
        %v5536 = vunpack.c.l.b16 %v709
        %v5537 = vunpack.c.l.b16 %v710
        %v5538 = vunpack.c.l.b16 %v711
        %v5539 = vunpack.c.l.b16 %v712
        %v5540 = vunpack.c.l.b16 %v713
        %v5541 = vunpack.c.l.b16 %v714
        %v5542 = vunpack.c.l.b16 %v715
        %v5543 = vunpack.c.l.b16 %v716
        %v5544 = vunpack.c.l.b16 %v717
        %v5545 = vpack.c.b16 %v5346, %v5345
        %v5546 = vpack.c.b16 %v5348, %v5347
        %v5547 = vpack.c.b16 %v5350, %v5349
        %v5548 = vpack.c.b16 %v5352, %v5351
        %v5549 = vpack.c.b16 %v5354, %v5353
        %v5550 = vpack.c.b16 %v5356, %v5355
        %v5551 = vpack.c.b16 %v5358, %v5357
        %v5552 = vpack.c.b16 %v5360, %v5359
        %v5553 = vpack.c.b16 %v5362, %v5361
        %v5554 = vpack.c.b16 %v5364, %v5363
        %v5555 = vpack.c.b16 %v5366, %v5365
        %v5556 = vpack.c.b16 %v5368, %v5367
        %v5557 = vpack.c.b16 %v5370, %v5369
        %v5558 = vpack.c.b16 %v5372, %v5371
        %v5559 = vpack.c.b16 %v5374, %v5373
        %v5560 = vpack.c.b16 %v5376, %v5375
        %v5561 = vpack.c.b16 %v5378, %v5377
        %v5562 = vpack.c.b16 %v5380, %v5379
        %v5563 = vpack.c.b16 %v5382, %v5381
        %v5564 = vpack.c.b16 %v5384, %v5383
        %v5565 = vpack.c.b16 %v5386, %v5385
        %v5566 = vpack.c.b16 %v5388, %v5387
        %v5567 = vpack.c.b16 %v5390, %v5389
        %v5568 = vpack.c.b16 %v5392, %v5391
        %v5569 = vpack.c.b16 %v5394, %v5393
        %v5570 = vpack.c.b16 %v5396, %v5395
        %v5571 = vpack.c.b16 %v5398, %v5397
        %v5572 = vpack.c.b16 %v5400, %v5399
        %v5573 = vpack.c.b16 %v5402, %v5401
        %v5574 = vpack.c.b16 %v5404, %v5403
        %v5575 = vpack.c.b16 %v5406, %v5405
        %v5576 = vpack.c.b16 %v5408, %v5407
        %v5577 = vpack.c.b16 %v5410, %v5409
        %v5578 = vpack.c.b16 %v5412, %v5411
        %v5579 = vpack.c.b16 %v5414, %v5413
        %v5580 = vpack.c.b16 %v5416, %v5415
        %v5581 = vpack.c.b16 %v5418, %v5417
        %v5582 = vpack.c.b16 %v5420, %v5419
        %v5583 = vpack.c.b16 %v5422, %v5421
        %v5584 = vpack.c.b16 %v5424, %v5423
        %v5585 = vpack.c.b16 %v5426, %v5425
        %v5586 = vpack.c.b16 %v5428, %v5427
        %v5587 = vpack.c.b16 %v5430, %v5429
        %v5588 = vpack.c.b16 %v5432, %v5431
        %v5589 = vpack.c.b16 %v5434, %v5433
        %v5590 = vpack.c.b16 %v5436, %v5435
        %v5591 = vpack.c.b16 %v5438, %v5437
        %v5592 = vpack.c.b16 %v5440, %v5439
        %v5593 = vpack.c.b16 %v5442, %v5441
        %v5594 = vpack.c.b16 %v5444, %v5443
        %v5595 = vpack.c.b16 %v5446, %v5445
        %v5596 = vpack.c.b16 %v5448, %v5447
        %v5597 = vpack.c.b16 %v5450, %v5449
        %v5598 = vpack.c.b16 %v5452, %v5451
        %v5599 = vpack.c.b16 %v5454, %v5453
        %v5600 = vpack.c.b16 %v5456, %v5455
        %v5601 = vpack.c.b16 %v5458, %v5457
        %v5602 = vpack.c.b16 %v5460, %v5459
        %v5603 = vpack.c.b16 %v5462, %v5461
        %v5604 = vpack.c.b16 %v5464, %v5463
        %v5605 = vpack.c.b16 %v5466, %v5465
        %v5606 = vpack.c.b16 %v5468, %v5467
        %v5607 = vpack.c.b16 %v5470, %v5469
        %v5608 = vpack.c.b16 %v5472, %v5471
        %v5609 = vpack.c.b16 %v5474, %v5473
        %v5610 = vpack.c.b16 %v5476, %v5475
        %v5611 = vpack.c.b16 %v5478, %v5477
        %v5612 = vpack.c.b16 %v5480, %v5479
        %v5613 = vpack.c.b16 %v5482, %v5481
        %v5614 = vpack.c.b16 %v5484, %v5483
        %v5615 = vpack.c.b16 %v5486, %v5485
        %v5616 = vpack.c.b16 %v5488, %v5487
        %v5617 = vpack.c.b16 %v5490, %v5489
        %v5618 = vpack.c.b16 %v5492, %v5491
        %v5619 = vpack.c.b16 %v5494, %v5493
        %v5620 = vpack.c.b16 %v5496, %v5495
        %v5621 = vpack.c.b16 %v5498, %v5497
        %v5622 = vpack.c.b16 %v5500, %v5499
        %v5623 = vpack.c.b16 %v5502, %v5501
        %v5624 = vpack.c.b16 %v5504, %v5503
        %v5625 = vpack.c.b16 %v5506, %v5505
        %v5626 = vpack.c.b16 %v5508, %v5507
        %v5627 = vpack.c.b16 %v5510, %v5509
        %v5628 = vpack.c.b16 %v5512, %v5511
        %v5629 = vpack.c.b16 %v5514, %v5513
        %v5630 = vpack.c.b16 %v5516, %v5515
        %v5631 = vpack.c.b16 %v5518, %v5517
        %v5632 = vpack.c.b16 %v5520, %v5519
        %v5633 = vpack.c.b16 %v5522, %v5521
        %v5634 = vpack.c.b16 %v5524, %v5523
        %v5635 = vpack.c.b16 %v5526, %v5525
        %v5636 = vpack.c.b16 %v5528, %v5527
        %v5637 = vpack.c.b16 %v5530, %v5529
        %v5638 = vpack.c.b16 %v5532, %v5531
        %v5639 = vpack.c.b16 %v5534, %v5533
        %v5640 = vpack.c.b16 %v5536, %v5535
        %v5641 = vpack.c.b16 %v5538, %v5537
        %v5642 = vpack.c.b16 %v5540, %v5539
        %v5643 = vpack.c.b16 %v5542, %v5541
        %v5644 = vpack.c.b16 %v5544, %v5543
        %vm5745 = vcmask 523264
        %v5747 = vsel %vm5745, %v5129, 0
        %5749 = vmatprep.subr.bf16.mxu0 0
        %5750 = vmatpush1.bf16.msra.mxu0 %v5545
        %5751 = vmatprep.subr.bf16.mxu0 0
        %5752 = vmatpush1.bf16.msra.mxu0 %v5546
        %5753 = vmatprep.subr.bf16.mxu0 0
        %5754 = vmatpush1.bf16.msra.mxu0 %v5547
        %5755 = vmatprep.subr.bf16.mxu0 0
        %5756 = vmatpush1.bf16.msra.mxu0 %v5548
        %5757 = vmatprep.subr.bf16.mxu0 0
        %5758 = vmatpush1.bf16.msra.mxu0 %v5549
        %5759 = vmatprep.subr.bf16.mxu0 0
        %5760 = vmatpush1.bf16.msra.mxu0 %v5550
        %5761 = vmatprep.subr.bf16.mxu0 0
        %5762 = vmatpush1.bf16.msra.mxu0 %v5551
        %5763 = vmatprep.subr.bf16.mxu0 0
        %5764 = vmatpush1.bf16.msra.mxu0 %v5552
        %5765 = vmatprep.subr.bf16.mxu0 0
        %5766 = vmatpush1.bf16.msra.mxu0 %v5553
        %5767 = vmatprep.subr.bf16.mxu0 0
        %5768 = vmatpush1.bf16.msra.mxu0 %v5554
        %5769 = vmatprep.subr.bf16.mxu0 0
        %5770 = vmatpush1.bf16.msra.mxu0 %v5555
        %5771 = vmatprep.subr.bf16.mxu0 0
        %5772 = vmatpush1.bf16.msra.mxu0 %v5556
        %5773 = vmatprep.subr.bf16.mxu0 0
        %5774 = vmatpush1.bf16.msra.mxu0 %v5557
        %5775 = vmatprep.subr.bf16.mxu0 0
        %5776 = vmatpush1.bf16.msra.mxu0 %v5558
        %5777 = vmatprep.subr.bf16.mxu0 0
        %5778 = vmatpush1.bf16.msra.mxu0 %v5559
        %5779 = vmatprep.subr.bf16.mxu0 0
        %5780 = vmatpush1.bf16.msra.mxu0 %v5560
        %5781 = vmatprep.mubr.bf16.mxu0 %v4829
        %5782 = vmatmul.mubr.bf16.gmra.mrb[0].mxu0 %v4814
        %v5783 = vpop.f32.mrb[0].mxu0
        %v5784 = vadd.f32 %v718, %v5783
        %v5785 = vpop.f32.mrb[0].mxu0
        %v5786 = vpop.f32.mrb[0].mxu0
        %v5787 = vpop.f32.mrb[0].mxu0
        %5788 = vdwg.mxu0
        %5789 = vmatprep.subr.bf16.mxu0 0
        %5790 = vmatpush1.bf16.msra.mxu0 %v5561
        %5791 = vmatprep.subr.bf16.mxu0 0
        %5792 = vmatpush1.bf16.msra.mxu0 %v5562
        %5793 = vmatprep.subr.bf16.mxu0 0
        %5794 = vmatpush1.bf16.msra.mxu0 %v5563
        %5795 = vmatprep.subr.bf16.mxu0 0
        %5796 = vmatpush1.bf16.msra.mxu0 %v5564
        %5797 = vmatprep.subr.bf16.mxu0 0
        %5798 = vmatpush1.bf16.msra.mxu0 %v5565
        %5799 = vmatprep.subr.bf16.mxu0 0
        %5800 = vmatpush1.bf16.msra.mxu0 %v5566
        %5801 = vmatprep.subr.bf16.mxu0 0
        %5802 = vmatpush1.bf16.msra.mxu0 %v5567
        %5803 = vmatprep.subr.bf16.mxu0 0
        %5804 = vmatpush1.bf16.msra.mxu0 %v5568
        %5805 = vmatprep.subr.bf16.mxu0 0
        %5806 = vmatpush1.bf16.msra.mxu0 %v5569
        %5807 = vmatprep.subr.bf16.mxu0 0
        %5808 = vmatpush1.bf16.msra.mxu0 %v5570
        %5809 = vmatprep.subr.bf16.mxu0 0
        %5810 = vmatpush1.bf16.msra.mxu0 %v5571
        %5811 = vmatprep.subr.bf16.mxu0 0
        %5812 = vmatpush1.bf16.msra.mxu0 %v5572
        %5813 = vmatprep.subr.bf16.mxu0 0
        %5814 = vmatpush1.bf16.msra.mxu0 %v5573
        %5815 = vmatprep.subr.bf16.mxu0 0
        %5816 = vmatpush1.bf16.msra.mxu0 %v5574
        %5817 = vmatprep.subr.bf16.mxu0 0
        %5818 = vmatpush1.bf16.msra.mxu0 %v5575
        %5819 = vmatprep.subr.bf16.mxu0 0
        %5820 = vmatpush1.bf16.msra.mxu0 %v5576
        %5821 = vmatprep.mubr.bf16.mxu0 %v5134
        %5822 = vmatmul.mubr.bf16.gmra.mrb[0].mxu0 %v4845
        %v5823 = vpop.f32.mrb[0].mxu0
        %v5824 = vadd.f32 %v5784, %v5823
        %v5825 = vpop.f32.mrb[0].mxu0
        %v5826 = vpop.f32.mrb[0].mxu0
        %v5827 = vpop.f32.mrb[0].mxu0
        %5828 = vdwg.mxu0
        %5829 = vmatprep.subr.bf16.mxu0 0
        %5830 = vmatpush1.bf16.msra.mxu0 %v5577
        %5831 = vmatprep.subr.bf16.mxu0 0
        %5832 = vmatpush1.bf16.msra.mxu0 %v5578
        %5833 = vmatprep.subr.bf16.mxu0 0
        %5834 = vmatpush1.bf16.msra.mxu0 %v5579
        %5835 = vmatprep.subr.bf16.mxu0 0
        %5836 = vmatpush1.bf16.msra.mxu0 %v5580
        %5837 = vmatprep.subr.bf16.mxu0 0
        %5838 = vmatpush1.bf16.msra.mxu0 %v5581
        %5839 = vmatprep.subr.bf16.mxu0 0
        %5840 = vmatpush1.bf16.msra.mxu0 %v5582
        %5841 = vmatprep.subr.bf16.mxu0 0
        %5842 = vmatpush1.bf16.msra.mxu0 %v5583
        %5843 = vmatprep.subr.bf16.mxu0 0
        %5844 = vmatpush1.bf16.msra.mxu0 %v5584
        %5845 = vmatprep.subr.bf16.mxu0 0
        %5846 = vmatpush1.bf16.msra.mxu0 %v5585
        %5847 = vmatprep.subr.bf16.mxu0 0
        %5848 = vmatpush1.bf16.msra.mxu0 %v5586
        %5849 = vmatprep.subr.bf16.mxu0 0
        %5850 = vmatpush1.bf16.msra.mxu0 %v5587
        %5851 = vmatprep.subr.bf16.mxu0 0
        %5852 = vmatpush1.bf16.msra.mxu0 %v5588
        %5853 = vmatprep.subr.bf16.mxu0 0
        %5854 = vmatpush1.bf16.msra.mxu0 %v5589
        %5855 = vmatprep.subr.bf16.mxu0 0
        %5856 = vmatpush1.bf16.msra.mxu0 %v5590
        %5857 = vmatprep.subr.bf16.mxu0 0
        %5858 = vmatpush1.bf16.msra.mxu0 %v5591
        %5859 = vmatprep.subr.bf16.mxu0 0
        %5860 = vmatpush1.bf16.msra.mxu0 %v5592
        %5861 = vmatprep.mubr.bf16.mxu0 %v5094
        %5862 = vmatmul.mubr.bf16.gmra.mrb[0].mxu0 %v5093
        %v5863 = vpop.f32.mrb[0].mxu0
        %v5864 = vadd.f32 %v5824, %v5863
        %v5865 = vpop.f32.mrb[0].mxu0
        %v5866 = vpop.f32.mrb[0].mxu0
        %v5867 = vpop.f32.mrb[0].mxu0
        %5868 = vdwg.mxu0
        %5869 = vmatprep.subr.bf16.mxu0 0
        %5870 = vmatpush1.bf16.msra.mxu0 %v5593
        %5871 = vmatprep.subr.bf16.mxu0 0
        %5872 = vmatpush1.bf16.msra.mxu0 %v5594
        %5873 = vmatprep.subr.bf16.mxu0 0
        %5874 = vmatpush1.bf16.msra.mxu0 %v5595
        %5875 = vmatprep.subr.bf16.mxu0 0
        %5876 = vmatpush1.bf16.msra.mxu0 %v5596
        %5877 = vmatprep.subr.bf16.mxu0 0
        %5878 = vmatpush1.bf16.msra.mxu0 %v5597
        %5879 = vmatprep.subr.bf16.mxu0 0
        %5880 = vmatpush1.bf16.msra.mxu0 %v5598
        %5881 = vmatprep.subr.bf16.mxu0 0
        %5882 = vmatpush1.bf16.msra.mxu0 %v5599
        %5883 = vmatprep.subr.bf16.mxu0 0
        %5884 = vmatpush1.bf16.msra.mxu0 %v5600
        %5885 = vmatprep.subr.bf16.mxu0 0
        %5886 = vmatpush1.bf16.msra.mxu0 %v5601
        %5887 = vmatprep.subr.bf16.mxu0 0
        %5888 = vmatpush1.bf16.msra.mxu0 %v5602
        %5889 = vmatprep.subr.bf16.mxu0 0
        %5890 = vmatpush1.bf16.msra.mxu0 %v5603
        %5891 = vmatprep.subr.bf16.mxu0 0
        %5892 = vmatpush1.bf16.msra.mxu0 %v5604
        %5893 = vmatprep.subr.bf16.mxu0 0
        %5894 = vmatpush1.bf16.msra.mxu0 %v5605
        %5895 = vmatprep.subr.bf16.mxu0 0
        %5896 = vmatpush1.bf16.msra.mxu0 %v5606
        %5897 = vmatprep.subr.bf16.mxu0 0
        %5898 = vmatpush1.bf16.msra.mxu0 %v5607
        %5899 = vmatprep.subr.bf16.mxu0 0
        %5900 = vmatpush1.bf16.msra.mxu0 %v5608
        %5901 = vmatprep.mubr.bf16.mxu0 %v5110
        %5902 = vmatmul.mubr.bf16.gmra.mrb[0].mxu0 %v5138
        %v5903 = vpop.f32.mrb[0].mxu0
        %v5904 = vadd.f32 %v5864, %v5903
        %v5905 = vpop.f32.mrb[0].mxu0
        %v5906 = vpop.f32.mrb[0].mxu0
        %v5907 = vpop.f32.mrb[0].mxu0
        %5908 = vdwg.mxu0
        %5909 = vmatprep.subr.bf16.mxu0 0
        %5910 = vmatpush1.bf16.msra.mxu0 %v5609
        %5911 = vmatprep.subr.bf16.mxu0 0
        %5912 = vmatpush1.bf16.msra.mxu0 %v5610
        %5913 = vmatprep.subr.bf16.mxu0 0
        %5914 = vmatpush1.bf16.msra.mxu0 %v5611
        %5915 = vmatprep.subr.bf16.mxu0 0
        %5916 = vmatpush1.bf16.msra.mxu0 %v5612
        %5917 = vmatprep.subr.bf16.mxu0 0
        %5918 = vmatpush1.bf16.msra.mxu0 %v5613
        %5919 = vmatprep.subr.bf16.mxu0 0
        %5920 = vmatpush1.bf16.msra.mxu0 %v5614
        %5921 = vmatprep.subr.bf16.mxu0 0
        %5922 = vmatpush1.bf16.msra.mxu0 %v5615
        %5923 = vmatprep.subr.bf16.mxu0 0
        %5924 = vmatpush1.bf16.msra.mxu0 %v5616
        %5925 = vmatprep.subr.bf16.mxu0 0
        %5926 = vmatpush1.bf16.msra.mxu0 %v5617
        %5927 = vmatprep.subr.bf16.mxu0 0
        %5928 = vmatpush1.bf16.msra.mxu0 %v5618
        %5929 = vmatprep.subr.bf16.mxu0 0
        %5930 = vmatpush1.bf16.msra.mxu0 %v5619
        %5931 = vmatprep.subr.bf16.mxu0 0
        %5932 = vmatpush1.bf16.msra.mxu0 %v5620
        %5933 = vmatprep.subr.bf16.mxu0 0
        %5934 = vmatpush1.bf16.msra.mxu0 %v5621
        %5935 = vmatprep.subr.bf16.mxu0 0
        %5936 = vmatpush1.bf16.msra.mxu0 %v5622
        %5937 = vmatprep.subr.bf16.mxu0 0
        %5938 = vmatpush1.bf16.msra.mxu0 %v5623
        %5939 = vmatprep.subr.bf16.mxu0 0
        %5940 = vmatpush1.bf16.msra.mxu0 %v5624
        %5941 = vmatprep.mubr.bf16.mxu0 %v5143
        %5942 = vmatmul.mubr.bf16.gmra.mrb[0].mxu0 %v5111
        %v5943 = vpop.f32.mrb[0].mxu0
        %v5944 = vadd.f32 %v5904, %v5943
        %v5945 = vpop.f32.mrb[0].mxu0
        %v5946 = vpop.f32.mrb[0].mxu0
        %v5947 = vpop.f32.mrb[0].mxu0
        %5948 = vdwg.mxu0
        %5949 = vmatprep.subr.bf16.mxu0 0
        %5950 = vmatpush1.bf16.msra.mxu0 %v5625
        %5951 = vmatprep.subr.bf16.mxu0 0
        %5952 = vmatpush1.bf16.msra.mxu0 %v5626
        %5953 = vmatprep.subr.bf16.mxu0 0
        %5954 = vmatpush1.bf16.msra.mxu0 %v5627
        %5955 = vmatprep.subr.bf16.mxu0 0
        %5956 = vmatpush1.bf16.msra.mxu0 %v5628
        %5957 = vmatprep.subr.bf16.mxu0 0
        %5958 = vmatpush1.bf16.msra.mxu0 %v5629
        %5959 = vmatprep.subr.bf16.mxu0 0
        %5960 = vmatpush1.bf16.msra.mxu0 %v5630
        %5961 = vmatprep.subr.bf16.mxu0 0
        %5962 = vmatpush1.bf16.msra.mxu0 %v5631
        %5963 = vmatprep.subr.bf16.mxu0 0
        %5964 = vmatpush1.bf16.msra.mxu0 %v5632
        %5965 = vmatprep.subr.bf16.mxu0 0
        %5966 = vmatpush1.bf16.msra.mxu0 %v5633
        %5967 = vmatprep.subr.bf16.mxu0 0
        %5968 = vmatpush1.bf16.msra.mxu0 %v5634
        %5969 = vmatprep.subr.bf16.mxu0 0
        %5970 = vmatpush1.bf16.msra.mxu0 %v5635
        %5971 = vmatprep.subr.bf16.mxu0 0
        %5972 = vmatpush1.bf16.msra.mxu0 %v5636
        %5973 = vmatprep.subr.bf16.mxu0 0
        %5974 = vmatpush1.bf16.msra.mxu0 %v5637
        %5975 = vmatprep.subr.bf16.mxu0 0
        %5976 = vmatpush1.bf16.msra.mxu0 %v5638
        %5977 = vmatprep.subr.bf16.mxu0 0
        %5978 = vmatpush1.bf16.msra.mxu0 %v5639
        %5979 = vmatprep.subr.bf16.mxu0 0
        %5980 = vmatpush1.bf16.msra.mxu0 %v5640
        %5981 = vmatprep.mubr.bf16.mxu0 %v5128
        %5982 = vmatmul.mubr.bf16.gmra.mrb[0].mxu0 %v5127
        %v5983 = vpop.f32.mrb[0].mxu0
        %v5984 = vadd.f32 %v5944, %v5983
        %v5985 = vpop.f32.mrb[0].mxu0
        %v5986 = vpop.f32.mrb[0].mxu0
        %v5987 = vpop.f32.mrb[0].mxu0
        %5988 = vdwg.mxu0
        %5989 = vmatprep.subr.bf16.mxu0 0
        %5990 = vmatpush1.bf16.msra.mxu0 %v5641
        %5991 = vmatprep.subr.bf16.mxu0 0
        %5992 = vmatpush1.bf16.msra.mxu0 %v5642
        %5993 = vmatprep.subr.bf16.mxu0 0
        %5994 = vmatpush1.bf16.msra.mxu0 %v5643
        %5995 = vmatprep.subr.bf16.mxu0 0
        %5996 = vmatpush1.bf16.msra.mxu0 %v5644
        %5997 = vmatprep.subr.bf16.mxu0 0
        %5998 = vmatpush1.bf16.msra.mxu0 0
        %5999 = vmatprep.subr.bf16.mxu0 0
        %6000 = vmatpush1.bf16.msra.mxu0 0
        %6001 = vmatprep.subr.bf16.mxu0 0
        %6002 = vmatpush1.bf16.msra.mxu0 0
        %6003 = vmatprep.subr.bf16.mxu0 0
        %6004 = vmatpush1.bf16.msra.mxu0 0
        %6005 = vmatprep.subr.bf16.mxu0 0
        %6006 = vmatpush1.bf16.msra.mxu0 0
        %6007 = vmatprep.subr.bf16.mxu0 0
        %6008 = vmatpush1.bf16.msra.mxu0 0
        %6009 = vmatprep.subr.bf16.mxu0 0
        %6010 = vmatpush1.bf16.msra.mxu0 0
        %6011 = vmatprep.subr.bf16.mxu0 0
        %6012 = vmatpush1.bf16.msra.mxu0 0
        %6013 = vmatprep.subr.bf16.mxu0 0
        %6014 = vmatpush1.bf16.msra.mxu0 0
        %6015 = vmatprep.subr.bf16.mxu0 0
        %6016 = vmatpush1.bf16.msra.mxu0 0
        %6017 = vmatprep.subr.bf16.mxu0 0
        %6018 = vmatpush1.bf16.msra.mxu0 0
        %6019 = vmatprep.subr.bf16.mxu0 0
        %6020 = vmatpush1.bf16.msra.mxu0 0
        %6021 = vmatprep.mubr.bf16.mxu0 0
        %6022 = vmatmul.mubr.bf16.gmra.mrb[0].mxu0 %v5747
        %v6023 = vpop.f32.mrb[0].mxu0
        %v6024 = vadd.f32 %v5984, %v6023
        %v6025 = vpop.f32.mrb[0].mxu0
        %v6026 = vpop.f32.mrb[0].mxu0
        %v6027 = vpop.f32.mrb[0].mxu0
        %6028 = vdwg.mxu0
        %v6029 = vmax.f32 %v6024, 0.0
        %v6030 = vpack.c.bf16 %v6029, %v6029
        %v6047 = vunpack.c.l.b16 %v719
        %v6048 = vunpack.c.l.b16 %v720
        %v6049 = vunpack.c.l.b16 %v721
        %v6050 = vunpack.c.l.b16 %v722
        %v6051 = vunpack.c.l.b16 %v723
        %v6052 = vunpack.c.l.b16 %v724
        %v6053 = vunpack.c.l.b16 %v725
        %v6054 = vunpack.c.l.b16 %v726
        %v6055 = vunpack.c.l.b16 %v727
        %v6056 = vunpack.c.l.b16 %v728
        %v6057 = vunpack.c.l.b16 %v729
        %v6058 = vunpack.c.l.b16 %v730
        %v6059 = vunpack.c.l.b16 %v731
        %v6060 = vunpack.c.l.b16 %v732
        %v6061 = vunpack.c.l.b16 %v733
        %v6062 = vunpack.c.l.b16 %v734
        %v6063 = vpack.c.b16 %v6048, %v6047
        %v6064 = vpack.c.b16 %v6050, %v6049
        %v6065 = vpack.c.b16 %v6052, %v6051
        %v6066 = vpack.c.b16 %v6054, %v6053
        %v6067 = vpack.c.b16 %v6056, %v6055
        %v6068 = vpack.c.b16 %v6058, %v6057
        %v6069 = vpack.c.b16 %v6060, %v6059
        %v6070 = vpack.c.b16 %v6062, %v6061
        %6079 = vmatprep.subr.bf16.mxu0 0
        %6080 = vmatpush1.bf16.msra.mxu0 %v6063
        %6081 = vmatprep.subr.bf16.mxu0 0
        %6082 = vmatpush1.bf16.msra.mxu0 %v6064
        %6083 = vmatprep.subr.bf16.mxu0 0
        %6084 = vmatpush1.bf16.msra.mxu0 %v6065
        %6085 = vmatprep.subr.bf16.mxu0 0
        %6086 = vmatpush1.bf16.msra.mxu0 %v6066
        %6087 = vmatprep.subr.bf16.mxu0 0
        %6088 = vmatpush1.bf16.msra.mxu0 %v6067
        %6089 = vmatprep.subr.bf16.mxu0 0
        %6090 = vmatpush1.bf16.msra.mxu0 %v6068
        %6091 = vmatprep.subr.bf16.mxu0 0
        %6092 = vmatpush1.bf16.msra.mxu0 %v6069
        %6093 = vmatprep.subr.bf16.mxu0 0
        %6094 = vmatpush1.bf16.msra.mxu0 %v6070
        %6095 = vmatprep.subr.bf16.mxu0 0
        %6096 = vmatpush1.bf16.msra.mxu0 0
        %6097 = vmatprep.subr.bf16.mxu0 0
        %6098 = vmatpush1.bf16.msra.mxu0 0
        %6099 = vmatprep.subr.bf16.mxu0 0
        %6100 = vmatpush1.bf16.msra.mxu0 0
        %6101 = vmatprep.subr.bf16.mxu0 0
        %6102 = vmatpush1.bf16.msra.mxu0 0
        %6103 = vmatprep.subr.bf16.mxu0 0
        %6104 = vmatpush1.bf16.msra.mxu0 0
        %6105 = vmatprep.subr.bf16.mxu0 0
        %6106 = vmatpush1.bf16.msra.mxu0 0
        %6107 = vmatprep.subr.bf16.mxu0 0
        %6108 = vmatpush1.bf16.msra.mxu0 0
        %6109 = vmatprep.subr.bf16.mxu0 0
        %6110 = vmatpush1.bf16.msra.mxu0 0
        %6111 = vmatprep.mubr.bf16.mxu0 0
        %6112 = vmatmul.mubr.bf16.gmra.mrb[0].mxu0 %v6030
        %v6113 = vpop.f32.mrb[0].mxu0
        %v6114 = vadd.f32 %v735, %v6113
        %v6115 = vpop.f32.mrb[0].mxu0
        %v6116 = vpop.f32.mrb[0].mxu0
        %v6117 = vpop.f32.mrb[0].mxu0
        %6118 = vdwg.mxu0
        %vm6119 = vcmask 73728
        %6120 = vst.msk [vmem:[%s376] sm:$0x1] %vm6119, %v6114
        %s6121 = sand.u32 %s269, 1
        %s6122 = scalar_lea.sflag [#allocation3], %s6121
        %s6123 = sand.u32 %s269, 1
        %s6124 = scalar_lea.vmem [#allocation2], %s6123
        // Predicated region
        $region65: #{simple_cnn_forward.1} parent=63 // pred_check
          %p6125 = pneg %p279
        $region66: #{simple_cnn_forward.1} parent=63 // pred_check_branch
          %6127 = sbr.rel (%p6125) target = $region68
        $region67: #{simple_cnn_forward.1} parent=63 // pred_region
          %s6129 = ssub.s32 16, 16
          %6130 = vsyncadd %s6122, %s6129
          %s6131 = smul.addr %s25, 16
          %s6132 = scalar_lea.hbm %s11, %s6131
          %s6134 = sshll.u32 %s6124, 4
          %s6135 = int_to_ptr.vmem [resolvable:$true] %s6134
          %6137 = dma.vmem_to_hbm [thread:$0]  %s6135, 16, %s6132, %s6122
        $region68: #{simple_cnn_forward.1} parent=63 // pred_fallthru
          _
      $region64: #{simple_cnn_forward.1} parent=5 // pred_fallthru
        _
      %p6138 = scmp.le.s32.totalorder 2, %s20
      // Predicated region
      $region69: #{simple_cnn_forward.1} parent=5 // pred_check
        %p6139 = pneg %p6138
      $region70: #{simple_cnn_forward.1} parent=5 // pred_check_branch
        %6141 = sbr.rel (%p6139) target = $region72
      $region71: #{simple_cnn_forward.1} parent=5 // pred_region
        %s6142 = ssub.s32 %s20, 2
        // Predicated region
        $region73: #{simple_cnn_forward.1} parent=71 // pred_check
          %p6143 = pneg %p285
        $region74: #{simple_cnn_forward.1} parent=71 // pred_check_branch
          %6145 = sbr.rel (%p6143) target = $region76
        $region75: #{simple_cnn_forward.1} parent=71 // pred_region
          %s6146 = sand.u32 %s270, 1
          %s6147 = scalar_lea.sflag [#allocation3], %s6146
          %s6148 = sand.u32 %s270, 1
          %s6149 = scalar_lea.vmem [#allocation2], %s6148
          %6150 = dma.done %s6147, 16
        $region76: #{simple_cnn_forward.1} parent=71 // pred_fallthru
          _
      $region72: #{simple_cnn_forward.1} parent=5 // pred_fallthru
        _
    $region6: #{simple_cnn_forward.1} parent=1 // loop_footer
      %s24 = sadd.s32 1, %s20
    $region7: #{simple_cnn_forward.1} parent=1 // loop_footer_branch
      %19 = sbr.rel target = $region3
    $region8: #{simple_cnn_forward.1} parent=1 // loop_exit
      _
    %6151 = vsyncpa [#allocation3], 1
    %s6152 = scalar_lea.sflag [#allocation3], 1
    %6153 = vsyncpa %s6152, 1

</llo_original>
